<compile_context>
chip_gen: v6e
topology: v6e:2x2x1
jax: 0.10.0
libtpu: 0.0.40
codegen_flags: <defaults>
</compile_context>

<pallas_src>
import functools

import jax
import jax.numpy as jnp
from jax.experimental import pallas as pl
from jax.experimental.pallas import tpu as pltpu


# --------------------------- in-kernel helpers ------------------------------

def _ln(v, g, b, eps):
    mean = jnp.mean(v, axis=-1, keepdims=True)
    var = jnp.mean(jnp.square(v - mean), axis=-1, keepdims=True)
    return (v - mean) * jax.lax.rsqrt(var + eps) * g + b


def _softmax_rows(s):
    s = s - jnp.max(s, axis=-1, keepdims=True)
    p = jnp.exp(s)
    return p * pl.reciprocal(jnp.sum(p, axis=-1, keepdims=True), approx=True)


# ----------------------------- Pallas kernels -------------------------------

def _linear_kernel(x_ref, w_ref, b_ref, o_ref, *, activation):
    acc = jnp.dot(x_ref[...], w_ref[...], preferred_element_type=jnp.float32)
    acc = acc + b_ref[...]
    if activation == "relu":
        acc = jnp.maximum(acc, 0.0)
    o_ref[...] = acc.astype(o_ref.dtype)


def linear(x, w, b, activation=None):
    """x: (M, K) f32, w: (K, N) f32, b: (1, N) f32 -> (M, N) f32."""
    M, K = x.shape
    N = w.shape[1]
    return pl.pallas_call(
        functools.partial(_linear_kernel, activation=activation),
        out_shape=jax.ShapeDtypeStruct((M, N), jnp.float32),
        grid=(1,),
        in_specs=[pl.BlockSpec((M, K), lambda i: (0, 0)),
                  pl.BlockSpec((K, N), lambda i: (0, 0)),
                  pl.BlockSpec((1, N), lambda i: (0, 0))],
        out_specs=pl.BlockSpec((M, N), lambda i: (0, 0)),
    )(x, w, b)


def _encoder_layer_kernel(x_ref, wqkv_ref, bqkv_ref, wo_ref, bo_ref,
                          ln1g_ref, ln1b_ref, w1_ref, b1_ref, w2_ref, b2_ref,
                          ln2g_ref, ln2b_ref, o_ref, *, num_heads, eps):
    """One full post-norm TransformerEncoderLayer for one batch element."""
    x = x_ref[0]                                   # (L, C) f32
    L, C = x.shape
    Dh = C // num_heads
    scale = 1.0 / (Dh ** 0.5)

    # Fused QKV projection -> (L, 3C) lane-dense matmul.
    qkv = jnp.dot(x, wqkv_ref[...], preferred_element_type=jnp.float32)
    qkv = qkv + bqkv_ref[...]
    wo = wo_ref[...]                               # (C, C)

    # Per-head attention, unrolled statically; the out-projection is applied
    # per head and accumulated, so no concat / transpose is ever needed.
    attn = jnp.zeros((L, C), jnp.float32)
    for h in range(num_heads):
        qh = qkv[:, h * Dh:(h + 1) * Dh]
        kh = qkv[:, C + h * Dh:C + (h + 1) * Dh]
        vh = qkv[:, 2 * C + h * Dh:2 * C + (h + 1) * Dh]
        s = jax.lax.dot_general(qh, kh, (((1,), (1,)), ((), ())),
                                preferred_element_type=jnp.float32) * scale
        p = _softmax_rows(s)
        ctx = jnp.dot(p, vh, preferred_element_type=jnp.float32)       # (L, Dh)
        attn = attn + jnp.dot(ctx, wo[h * Dh:(h + 1) * Dh, :],
                              preferred_element_type=jnp.float32)
    attn = attn + bo_ref[...]

    # Residual + LayerNorm 1 (fused).
    y = _ln(x + attn, ln1g_ref[...], ln1b_ref[...], eps)

    # Feed-forward (ReLU) + residual + LayerNorm 2 (fused).
    h1 = jnp.dot(y, w1_ref[...], preferred_element_type=jnp.float32) + b1_ref[...]
    h1 = jnp.maximum(h1, 0.0)
    ffn = jnp.dot(h1, w2_ref[...], preferred_element_type=jnp.float32) + b2_ref[...]
    z = _ln(y + ffn, ln2g_ref[...], ln2b_ref[...], eps)

    o_ref[0] = z.astype(o_ref.dtype)


def transformer_encoder_layer(x, p, num_heads, eps=1e-5):
    """x: (B, L, C) -> (B, L, C); one pallas_call per layer, grid over batch."""
    B, L, C = x.shape
    wspec = lambda shape: pl.BlockSpec(shape, lambda b: (0, 0))
    return pl.pallas_call(
        functools.partial(_encoder_layer_kernel, num_heads=num_heads, eps=eps),
        out_shape=jax.ShapeDtypeStruct((B, L, C), jnp.float32),
        grid=(B,),
        in_specs=[pl.BlockSpec((1, L, C), lambda b: (b, 0, 0)),
                  wspec((C, 3 * C)), wspec((1, 3 * C)),
                  wspec((C, C)), wspec((1, C)),
                  wspec((1, C)), wspec((1, C)),
                  wspec((C, 2 * C)), wspec((1, 2 * C)),
                  wspec((2 * C, C)), wspec((1, C)),
                  wspec((1, C)), wspec((1, C))],
        out_specs=pl.BlockSpec((1, L, C), lambda b: (b, 0, 0)),
        compiler_params=pltpu.CompilerParams(dimension_semantics=("parallel",)),
    )(x, p["wqkv"], p["bqkv"], p["wo"], p["bo"],
      p["ln1_g"], p["ln1_b"], p["w1"], p["b1"], p["w2"], p["b2"],
      p["ln2_g"], p["ln2_b"])


def _cross_attn_kernel(xq_ref, kv_ref, wq_ref, bq_ref, wkv_ref, bkv_ref,
                       wo_ref, bo_ref, o_ref, *, scale):
    """Single-head cross attention + residual for one batch element."""
    xq = xq_ref[0]                                  # (Lq, C)
    xkv = kv_ref[0]                                 # (Lk, C)
    C = xq.shape[-1]

    q = jnp.dot(xq, wq_ref[...], preferred_element_type=jnp.float32) + bq_ref[...]
    kv = jnp.dot(xkv, wkv_ref[...], preferred_element_type=jnp.float32) + bkv_ref[...]
    k = kv[:, :C]
    v = kv[:, C:]

    s = jax.lax.dot_general(q, k, (((1,), (1,)), ((), ())),
                            preferred_element_type=jnp.float32) * scale
    p = _softmax_rows(s)
    ctx = jnp.dot(p, v, preferred_element_type=jnp.float32)
    attn = jnp.dot(ctx, wo_ref[...], preferred_element_type=jnp.float32) + bo_ref[...]
    o_ref[0] = (xq + attn).astype(o_ref.dtype)


def cross_attention_residual(xq, kv, p):
    """xq: (B, Lq, C) query, kv: (B, Lk, C) keys/values -> xq + attn(xq, kv, kv)."""
    B, Lq, C = xq.shape
    Lk = kv.shape[1]
    scale = 1.0 / (C ** 0.5)          # num_heads = 1 -> head_dim = C
    wspec = lambda shape: pl.BlockSpec(shape, lambda b: (0, 0))
    return pl.pallas_call(
        functools.partial(_cross_attn_kernel, scale=scale),
        out_shape=jax.ShapeDtypeStruct((B, Lq, C), jnp.float32),
        grid=(B,),
        in_specs=[pl.BlockSpec((1, Lq, C), lambda b: (b, 0, 0)),
                  pl.BlockSpec((1, Lk, C), lambda b: (b, 0, 0)),
                  wspec((C, C)), wspec((1, C)),
                  wspec((C, 2 * C)), wspec((1, 2 * C)),
                  wspec((C, C)), wspec((1, C))],
        out_specs=pl.BlockSpec((1, Lq, C), lambda b: (b, 0, 0)),
        compiler_params=pltpu.CompilerParams(dimension_semantics=("parallel",)),
    )(xq, kv, p["wq"], p["bq"], p["wkv"], p["bkv"], p["wo"], p["bo"])


def _heads_kernel(x_ref, w1_ref, b1_ref,
                  w2f_ref, b2f_ref, w3f_ref, b3f_ref,
                  w2m_ref, b2m_ref, w3m_ref, b3m_ref,
                  w2l_ref, b2l_ref, w3l_ref, b3l_ref,
                  fh_ref, mp_ref, lb_ref, *, C):
    """All three MLP heads; stage-1 weights fused along the output axis (3C)."""
    x = x_ref[...]                                                     # (B, N*C)
    h1 = jnp.dot(x, w1_ref[...], preferred_element_type=jnp.float32) + b1_ref[...]
    h1 = jnp.maximum(h1, 0.0)                                          # (B, 3C)
    # Dropout(0.5) -> identity at inference.

    def head(h, w2, b2, w3, b3):
        h2 = jnp.maximum(jnp.dot(h, w2, preferred_element_type=jnp.float32) + b2, 0.0)
        return jnp.dot(h2, w3, preferred_element_type=jnp.float32) + b3

    fh_ref[...] = head(h1[:, :C], w2f_ref[...], b2f_ref[...],
                       w3f_ref[...], b3f_ref[...]).astype(fh_ref.dtype)
    mp_ref[...] = head(h1[:, C:2 * C], w2m_ref[...], b2m_ref[...],
                       w3m_ref[...], b3m_ref[...]).astype(mp_ref.dtype)
    lb_ref[...] = head(h1[:, 2 * C:], w2l_ref[...], b2l_ref[...],
                       w3l_ref[...], b3l_ref[...]).astype(lb_ref.dtype)


def fused_heads(flat, p, C):
    """flat: (B, N*C) -> FH (B,2), MP (B,3), LB (B,3) in one pallas_call."""
    B, NC = flat.shape
    Ch = C // 2
    full2d = lambda shape: pl.BlockSpec(shape, lambda i: (0, 0))
    return pl.pallas_call(
        functools.partial(_heads_kernel, C=C),
        out_shape=(jax.ShapeDtypeStruct((B, 2), jnp.float32),
                   jax.ShapeDtypeStruct((B, 3), jnp.float32),
                   jax.ShapeDtypeStruct((B, 3), jnp.float32)),
        grid=(1,),
        in_specs=[full2d((B, NC)), full2d((NC, 3 * C)), full2d((1, 3 * C)),
                  full2d((C, Ch)), full2d((1, Ch)), full2d((Ch, 2)), full2d((1, 2)),
                  full2d((C, Ch)), full2d((1, Ch)), full2d((Ch, 3)), full2d((1, 3)),
                  full2d((C, Ch)), full2d((1, Ch)), full2d((Ch, 3)), full2d((1, 3))],
        out_specs=[full2d((B, 2)), full2d((B, 3)), full2d((B, 3))],
    )(flat, p["w1_all"], p["b1_all"],
      p["w2_FH"], p["b2_FH"], p["w3_FH"], p["b3_FH"],
      p["w2_MP"], p["b2_MP"], p["w3_MP"], p["b3_MP"],
      p["w2_LB"], p["b2_LB"], p["w3_LB"], p["b3_LB"])


# ------------------------------ forward pass --------------------------------

def vatep_forward(params, x, table_cat, table_con, C):
    B, N, T, H, W = x.shape

    # --- VideoEncoder ---
    # TODO(synk): VideoEncoder's definition is not provided in the source
    # module; substituting a per-frame Linear(H*W, C) token encoder.  Only
    # frame index 1 is consumed downstream (x[:, 1, :]), so only that frame
    # is encoded.
    frame1 = x[:, :, 1, :, :].reshape(B * N, H * W).astype(jnp.float32)
    xf = linear(frame1, params["enc_w"], params["enc_b"]).reshape(B, N, C)

    # --- table embeddings (gathers / broadcast are glue) ---
    cat1 = jnp.take(params["emb1"], table_cat[:, 0] - 1, axis=0)    # (B, C)
    cat2 = jnp.take(params["emb2"], table_cat[:, 1], axis=0)
    cat3 = jnp.take(params["emb3"], table_cat[:, 2], axis=0)
    con = (table_con[..., None].astype(jnp.float32)
           * params["con_w"][0][None, None, :] + params["con_b"][None])
    table = jnp.concatenate(
        [cat1[:, None, :], cat2[:, None, :], cat3[:, None, :], con], axis=1)

    # --- table transformer (4 fused layers, nhead=4, dim_ff=2C) ---
    for lp in params["layers"]:
        table = transformer_encoder_layer(table, lp, num_heads=4)

    # --- fused cross attention (nhead=1) + residual ---
    xf = cross_attention_residual(xf, table, params["cross"])

    # --- fused MLP heads ---
    flat = xf.reshape(B, N * C)
    FH, MP, LB = fused_heads(flat, params["heads"], C)
    return FH, MP, LB


# ------------------------- deterministic parameters -------------------------

def _init_linear(key, in_dim, out_dim, scale=0.02):
    kw, kb = jax.random.split(key)
    w = scale * jax.random.normal(kw, (in_dim, out_dim), jnp.float32)
    b = scale * jax.random.normal(kb, (1, out_dim), jnp.float32)
    return w, b


def init_params(key, C, N, HW):
    # NOTE: weights use (in, out) layout (x @ W); PyTorch checkpoints store
    # (out, in) and nn.MultiheadAttention fuses q/k/v -- transpose/split when
    # porting real weights.
    keys = iter(jax.random.split(key, 64))
    p = {}
    p["enc_w"], p["enc_b"] = _init_linear(next(keys), HW, C)
    p["emb1"] = 0.02 * jax.random.normal(next(keys), (2, C), jnp.float32)
    p["emb2"] = 0.02 * jax.random.normal(next(keys), (2, C), jnp.float32)
    p["emb3"] = 0.02 * jax.random.normal(next(keys), (2, C), jnp.float32)
    p["con_w"], p["con_b"] = _init_linear(next(keys), 1, C)

    layers = []
    for _ in range(4):
        lp = {}
        lp["wqkv"], lp["bqkv"] = _init_linear(next(keys), C, 3 * C)   # fused QKV
        lp["wo"], lp["bo"] = _init_linear(next(keys), C, C)
        lp["w1"], lp["b1"] = _init_linear(next(keys), C, 2 * C)
        lp["w2"], lp["b2"] = _init_linear(next(keys), 2 * C, C)
        lp["ln1_g"] = jnp.ones((1, C), jnp.float32)
        lp["ln1_b"] = jnp.zeros((1, C), jnp.float32)
        lp["ln2_g"] = jnp.ones((1, C), jnp.float32)
        lp["ln2_b"] = jnp.zeros((1, C), jnp.float32)
        layers.append(lp)
    p["layers"] = layers

    cr = {}
    cr["wq"], cr["bq"] = _init_linear(next(keys), C, C)
    cr["wkv"], cr["bkv"] = _init_linear(next(keys), C, 2 * C)          # fused KV
    cr["wo"], cr["bo"] = _init_linear(next(keys), C, C)
    p["cross"] = cr

    h = {}
    w1s, b1s = [], []
    for _ in range(3):
        w, b = _init_linear(next(keys), C * N, C)
        w1s.append(w)
        b1s.append(b)
    h["w1_all"] = jnp.concatenate(w1s, axis=1)                         # (N*C, 3C)
    h["b1_all"] = jnp.concatenate(b1s, axis=1)                         # (1, 3C)
    for name, out_dim in (("FH", 2), ("MP", 3), ("LB", 3)):
        h[f"w2_{name}"], h[f"b2_{name}"] = _init_linear(next(keys), C, C // 2)
        h[f"w3_{name}"], h[f"b3_{name}"] = _init_linear(next(keys), C // 2, out_dim)
    p["heads"] = h
    return p


# ----------------------------------- main ------------------------------------

if __name__ == "__main__":
    C, N = 32, 12            # model width / number of video clips
    B, T, H, W = 2, 4, 8, 8  # batch, frames per clip, spatial
    M_CON = 5                # number of continuous table features

    key = jax.random.PRNGKey(0)
    k_x, k_cat1, k_cat2, k_con, k_p = jax.random.split(key, 5)

    x = jax.random.normal(k_x, (B, N, T, H, W), jnp.float32)
    cat0 = jax.random.randint(k_cat1, (B, 1), 1, 3)   # values in {1, 2}
    cat12 = jax.random.randint(k_cat2, (B, 2), 0, 2)  # values in {0, 1}
    table_cat = jnp.concatenate([cat0, cat12], axis=1).astype(jnp.int32)
    table_con = jax.random.normal(k_con, (B, M_CON), jnp.float32)

    params = init_params(k_p, C, N, H * W)

    fwd = jax.jit(functools.partial(vatep_forward, C=C))
    FH, MP, LB = fwd(params, x, table_cat, table_con)
    jax.block_until_ready((FH, MP, LB))

    assert FH.shape == (B, 2) and MP.shape == (B, 3) and LB.shape == (B, 3)
    assert bool(jnp.all(jnp.isfinite(FH))) and bool(jnp.all(jnp.isfinite(MP)))
    assert bool(jnp.all(jnp.isfinite(LB)))
    print("KERNEL_OK")
</pallas_src>

<mosaic_0001>
module attributes {stable_mosaic.version = 11 : i64} {
  func.func @_linear_kernel(%arg0: i32, %arg1: memref<24x64xf32, #tpu.memory_space<vmem>>, %arg2: memref<64x32xf32, #tpu.memory_space<vmem>>, %arg3: memref<1x32xf32, #tpu.memory_space<vmem>>, %arg4: memref<24x32xf32, #tpu.memory_space<vmem>>) attributes {dimension_semantics = [#tpu.dimension_semantics<arbitrary>], iteration_bounds = array<i64: 1>, scalar_prefetch = 0 : i64, scratch_operands = 0 : i64, tpu.core_type = #tpu.core_type<tc>, window_params = [{pipeline_mode = #tpu.pipeline_mode<synchronous>, transform_indices = @transform_0, window_bounds = array<i64: 24, 64>}, {pipeline_mode = #tpu.pipeline_mode<synchronous>, transform_indices = @transform_1, window_bounds = array<i64: 64, 32>}, {pipeline_mode = #tpu.pipeline_mode<synchronous>, transform_indices = @transform_2, window_bounds = array<i64: 1, 32>}, {pipeline_mode = #tpu.pipeline_mode<synchronous>, transform_indices = @transform_3, window_bounds = array<i64: 24, 32>}]} {
    %c0 = arith.constant 0 : index
    %c0_0 = arith.constant 0 : index
    %0 = vector.load %arg1[%c0, %c0_0] : memref<24x64xf32, #tpu.memory_space<vmem>>, vector<24x64xf32>
    %c0_1 = arith.constant 0 : index
    %c0_2 = arith.constant 0 : index
    %1 = vector.load %arg2[%c0_1, %c0_2] : memref<64x32xf32, #tpu.memory_space<vmem>>, vector<64x32xf32>
    %cst = arith.constant dense<0.000000e+00> : vector<24x32xf32>
    %2 = tpu.matmul %0, %1, %cst {dimension_numbers = #tpu.dot_dimension_numbers<[1], [0], [0], [1], [0, 0, 1, 1], [], []>} : vector<24x64xf32>, vector<64x32xf32>, vector<24x32xf32> -> vector<24x32xf32>
    %c0_3 = arith.constant 0 : index
    %c0_4 = arith.constant 0 : index
    %3 = vector.load %arg3[%c0_3, %c0_4] : memref<1x32xf32, #tpu.memory_space<vmem>>, vector<1x32xf32>
    %4 = vector.broadcast %3 : vector<1x32xf32> to vector<24x32xf32>
    %5 = arith.addf %2, %4 : vector<24x32xf32>
    %c0_5 = arith.constant 0 : index
    %c0_6 = arith.constant 0 : index
    %6 = vector.load %arg4[%c0_5, %c0_6] : memref<24x32xf32, #tpu.memory_space<vmem>>, vector<24x32xf32>
    tpu.vector_store %arg4[%c0_5, %c0_6], %5 {strides = array<i32>} : memref<24x32xf32, #tpu.memory_space<vmem>>, vector<24x32xf32>,
    return
  }
  func.func @transform_0(%arg0: i32) -> (i32, i32) {
    %c0_i32 = arith.constant 0 : i32
    %c0_i32_0 = arith.constant 0 : i32
    %c0_i32_1 = arith.constant 0 : i32
    return %c0_i32, %c0_i32_0 : i32, i32
  }
  func.func @transform_1(%arg0: i32) -> (i32, i32) {
    %c0_i32 = arith.constant 0 : i32
    %c0_i32_0 = arith.constant 0 : i32
    %c0_i32_1 = arith.constant 0 : i32
    return %c0_i32, %c0_i32_0 : i32, i32
  }
  func.func @transform_2(%arg0: i32) -> (i32, i32) {
    %c0_i32 = arith.constant 0 : i32
    %c0_i32_0 = arith.constant 0 : i32
    %c0_i32_1 = arith.constant 0 : i32
    return %c0_i32, %c0_i32_0 : i32, i32
  }
  func.func @transform_3(%arg0: i32) -> (i32, i32) {
    %c0_i32 = arith.constant 0 : i32
    %c0_i32_0 = arith.constant 0 : i32
    %c0_i32_1 = arith.constant 0 : i32
    return %c0_i32, %c0_i32_0 : i32, i32
  }
}

module attributes {stable_mosaic.version = 11 : i64} {
  func.func @_encoder_layer_kernel(%arg0: i32, %arg1: memref<1x8x32xf32, #tpu.memory_space<vmem>>, %arg2: memref<32x96xf32, #tpu.memory_space<vmem>>, %arg3: memref<1x96xf32, #tpu.memory_space<vmem>>, %arg4: memref<32x32xf32, #tpu.memory_space<vmem>>, %arg5: memref<1x32xf32, #tpu.memory_space<vmem>>, %arg6: memref<1x32xf32, #tpu.memory_space<vmem>>, %arg7: memref<1x32xf32, #tpu.memory_space<vmem>>, %arg8: memref<32x64xf32, #tpu.memory_space<vmem>>, %arg9: memref<1x64xf32, #tpu.memory_space<vmem>>, %arg10: memref<64x32xf32, #tpu.memory_space<vmem>>, %arg11: memref<1x32xf32, #tpu.memory_space<vmem>>, %arg12: memref<1x32xf32, #tpu.memory_space<vmem>>, %arg13: memref<1x32xf32, #tpu.memory_space<vmem>>, %arg14: memref<1x8x32xf32, #tpu.memory_space<vmem>>) attributes {dimension_semantics = [#tpu.dimension_semantics<parallel>], iteration_bounds = array<i64: 2>, scalar_prefetch = 0 : i64, scratch_operands = 0 : i64, tpu.core_type = #tpu.core_type<tc>, window_params = [{transform_indices = @transform_0, window_bounds = array<i64: 1, 8, 32>}, {pipeline_mode = #tpu.pipeline_mode<synchronous>, transform_indices = @transform_1, window_bounds = array<i64: 32, 96>}, {pipeline_mode = #tpu.pipeline_mode<synchronous>, transform_indices = @transform_2, window_bounds = array<i64: 1, 96>}, {pipeline_mode = #tpu.pipeline_mode<synchronous>, transform_indices = @transform_3, window_bounds = array<i64: 32, 32>}, {pipeline_mode = #tpu.pipeline_mode<synchronous>, transform_indices = @transform_4, window_bounds = array<i64: 1, 32>}, {pipeline_mode = #tpu.pipeline_mode<synchronous>, transform_indices = @transform_5, window_bounds = array<i64: 1, 32>}, {pipeline_mode = #tpu.pipeline_mode<synchronous>, transform_indices = @transform_6, window_bounds = array<i64: 1, 32>}, {pipeline_mode = #tpu.pipeline_mode<synchronous>, transform_indices = @transform_7, window_bounds = array<i64: 32, 64>}, {pipeline_mode = #tpu.pipeline_mode<synchronous>, transform_indices = @transform_8, window_bounds = array<i64: 1, 64>}, {pipeline_mode = #tpu.pipeline_mode<synchronous>, transform_indices = @transform_9, window_bounds = array<i64: 64, 32>}, {pipeline_mode = #tpu.pipeline_mode<synchronous>, transform_indices = @transform_10, window_bounds = array<i64: 1, 32>}, {pipeline_mode = #tpu.pipeline_mode<synchronous>, transform_indices = @transform_11, window_bounds = array<i64: 1, 32>}, {pipeline_mode = #tpu.pipeline_mode<synchronous>, transform_indices = @transform_12, window_bounds = array<i64: 1, 32>}, {transform_indices = @transform_13, window_bounds = array<i64: 1, 8, 32>}]} {
    %c0 = arith.constant 0 : index
    %c0_0 = arith.constant 0 : index
    %c0_1 = arith.constant 0 : index
    %0 = vector.load %arg1[%c0, %c0_0, %c0_1] : memref<1x8x32xf32, #tpu.memory_space<vmem>>, vector<1x8x32xf32>
    %1 = vector.shape_cast %0 : vector<1x8x32xf32> to vector<8x32xf32>
    %c0_2 = arith.constant 0 : index
    %c0_3 = arith.constant 0 : index
    %2 = vector.load %arg2[%c0_2, %c0_3] : memref<32x96xf32, #tpu.memory_space<vmem>>, vector<32x96xf32>
    %cst = arith.constant dense<0.000000e+00> : vector<8x96xf32>
    %3 = tpu.matmul %1, %2, %cst {dimension_numbers = #tpu.dot_dimension_numbers<[1], [0], [0], [1], [0, 0, 1, 1], [], []>} : vector<8x32xf32>, vector<32x96xf32>, vector<8x96xf32> -> vector<8x96xf32>
    %c0_4 = arith.constant 0 : index
    %c0_5 = arith.constant 0 : index
    %4 = vector.load %arg3[%c0_4, %c0_5] : memref<1x96xf32, #tpu.memory_space<vmem>>, vector<1x96xf32>
    %5 = vector.broadcast %4 : vector<1x96xf32> to vector<8x96xf32>
    %6 = arith.addf %3, %5 : vector<8x96xf32>
    %c0_6 = arith.constant 0 : index
    %c0_7 = arith.constant 0 : index
    %7 = vector.load %arg4[%c0_6, %c0_7] : memref<32x32xf32, #tpu.memory_space<vmem>>, vector<32x32xf32>
    %cst_8 = arith.constant 0.000000e+00 : f32
    %8 = vector.broadcast %cst_8 : f32 to vector<8x32xf32>
    %9 = vector.extract_strided_slice %6 {offsets = [0, 0], sizes = [8, 8], strides = [1, 1]} : vector<8x96xf32> to vector<8x8xf32>
    %10 = vector.extract_strided_slice %6 {offsets = [0, 32], sizes = [8, 8], strides = [1, 1]} : vector<8x96xf32> to vector<8x8xf32>
    %11 = vector.extract_strided_slice %6 {offsets = [0, 64], sizes = [8, 8], strides = [1, 1]} : vector<8x96xf32> to vector<8x8xf32>
    %cst_9 = arith.constant dense<0.000000e+00> : vector<8x8xf32>
    %12 = tpu.matmul %9, %10, %cst_9 {dimension_numbers = #tpu.dot_dimension_numbers<[1], [1], [0], [0], [0, 0, 1, 0], [], []>} : vector<8x8xf32>, vector<8x8xf32>, vector<8x8xf32> -> vector<8x8xf32>
    %cst_10 = arith.constant 0.353553385 : f32
    %13 = vector.broadcast %cst_10 : f32 to vector<8x8xf32>
    %14 = arith.mulf %12, %13 : vector<8x8xf32>
    %cst_11 = arith.constant dense<0xFF800000> : vector<8xf32>
    %15 = vector.multi_reduction <maximumf>, %14, %cst_11 [1] : vector<8x8xf32> to vector<8xf32>
    %16 = vector.shape_cast %15 : vector<8xf32> to vector<8x1xf32>
    %17 = vector.broadcast %16 : vector<8x1xf32> to vector<8x8xf32>
    %18 = arith.subf %14, %17 : vector<8x8xf32>
    %19 = math.exp %18 : vector<8x8xf32>
    %cst_12 = arith.constant dense<0.000000e+00> : vector<8xf32>
    %20 = vector.multi_reduction <add>, %19, %cst_12 [1] : vector<8x8xf32> to vector<8xf32>
    %21 = vector.shape_cast %20 : vector<8xf32> to vector<8x1xf32>
    %22 = tpu.reciprocal %21 {approx = true} : vector<8x1xf32> -> vector<8x1xf32>
    %23 = vector.broadcast %22 : vector<8x1xf32> to vector<8x8xf32>
    %24 = arith.mulf %19, %23 : vector<8x8xf32>
    %cst_13 = arith.constant dense<0.000000e+00> : vector<8x8xf32>
    %25 = tpu.matmul %24, %11, %cst_13 {dimension_numbers = #tpu.dot_dimension_numbers<[1], [0], [0], [1], [0, 0, 1, 1], [], []>} : vector<8x8xf32>, vector<8x8xf32>, vector<8x8xf32> -> vector<8x8xf32>
    %26 = vector.extract_strided_slice %7 {offsets = [0, 0], sizes = [8, 32], strides = [1, 1]} : vector<32x32xf32> to vector<8x32xf32>
    %cst_14 = arith.constant dense<0.000000e+00> : vector<8x32xf32>
    %27 = tpu.matmul %25, %26, %cst_14 {dimension_numbers = #tpu.dot_dimension_numbers<[1], [0], [0], [1], [0, 0, 1, 1], [], []>} : vector<8x8xf32>, vector<8x32xf32>, vector<8x32xf32> -> vector<8x32xf32>
    %28 = arith.addf %8, %27 : vector<8x32xf32>
    %29 = vector.extract_strided_slice %6 {offsets = [0, 8], sizes = [8, 8], strides = [1, 1]} : vector<8x96xf32> to vector<8x8xf32>
    %30 = vector.extract_strided_slice %6 {offsets = [0, 40], sizes = [8, 8], strides = [1, 1]} : vector<8x96xf32> to vector<8x8xf32>
    %31 = vector.extract_strided_slice %6 {offsets = [0, 72], sizes = [8, 8], strides = [1, 1]} : vector<8x96xf32> to vector<8x8xf32>
    %cst_15 = arith.constant dense<0.000000e+00> : vector<8x8xf32>
    %32 = tpu.matmul %29, %30, %cst_15 {dimension_numbers = #tpu.dot_dimension_numbers<[1], [1], [0], [0], [0, 0, 1, 0], [], []>} : vector<8x8xf32>, vector<8x8xf32>, vector<8x8xf32> -> vector<8x8xf32>
    %cst_16 = arith.constant 0.353553385 : f32
    %33 = vector.broadcast %cst_16 : f32 to vector<8x8xf32>
    %34 = arith.mulf %32, %33 : vector<8x8xf32>
    %cst_17 = arith.constant dense<0xFF800000> : vector<8xf32>
    %35 = vector.multi_reduction <maximumf>, %34, %cst_17 [1] : vector<8x8xf32> to vector<8xf32>
    %36 = vector.shape_cast %35 : vector<8xf32> to vector<8x1xf32>
    %37 = vector.broadcast %36 : vector<8x1xf32> to vector<8x8xf32>
    %38 = arith.subf %34, %37 : vector<8x8xf32>
    %39 = math.exp %38 : vector<8x8xf32>
    %cst_18 = arith.constant dense<0.000000e+00> : vector<8xf32>
    %40 = vector.multi_reduction <add>, %39, %cst_18 [1] : vector<8x8xf32> to vector<8xf32>
    %41 = vector.shape_cast %40 : vector<8xf32> to vector<8x1xf32>
    %42 = tpu.reciprocal %41 {approx = true} : vector<8x1xf32> -> vector<8x1xf32>
    %43 = vector.broadcast %42 : vector<8x1xf32> to vector<8x8xf32>
    %44 = arith.mulf %39, %43 : vector<8x8xf32>
    %cst_19 = arith.constant dense<0.000000e+00> : vector<8x8xf32>
    %45 = tpu.matmul %44, %31, %cst_19 {dimension_numbers = #tpu.dot_dimension_numbers<[1], [0], [0], [1], [0, 0, 1, 1], [], []>} : vector<8x8xf32>, vector<8x8xf32>, vector<8x8xf32> -> vector<8x8xf32>
    %46 = vector.extract_strided_slice %7 {offsets = [8, 0], sizes = [8, 32], strides = [1, 1]} : vector<32x32xf32> to vector<8x32xf32>
    %cst_20 = arith.constant dense<0.000000e+00> : vector<8x32xf32>
    %47 = tpu.matmul %45, %46, %cst_20 {dimension_numbers = #tpu.dot_dimension_numbers<[1], [0], [0], [1], [0, 0, 1, 1], [], []>} : vector<8x8xf32>, vector<8x32xf32>, vector<8x32xf32> -> vector<8x32xf32>
    %48 = arith.addf %28, %47 : vector<8x32xf32>
    %49 = vector.extract_strided_slice %6 {offsets = [0, 16], sizes = [8, 8], strides = [1, 1]} : vector<8x96xf32> to vector<8x8xf32>
    %50 = vector.extract_strided_slice %6 {offsets = [0, 48], sizes = [8, 8], strides = [1, 1]} : vector<8x96xf32> to vector<8x8xf32>
    %51 = vector.extract_strided_slice %6 {offsets = [0, 80], sizes = [8, 8], strides = [1, 1]} : vector<8x96xf32> to vector<8x8xf32>
    %cst_21 = arith.constant dense<0.000000e+00> : vector<8x8xf32>
    %52 = tpu.matmul %49, %50, %cst_21 {dimension_numbers = #tpu.dot_dimension_numbers<[1], [1], [0], [0], [0, 0, 1, 0], [], []>} : vector<8x8xf32>, vector<8x8xf32>, vector<8x8xf32> -> vector<8x8xf32>
    %cst_22 = arith.constant 0.353553385 : f32
    %53 = vector.broadcast %cst_22 : f32 to vector<8x8xf32>
    %54 = arith.mulf %52, %53 : vector<8x8xf32>
    %cst_23 = arith.constant dense<0xFF800000> : vector<8xf32>
    %55 = vector.multi_reduction <maximumf>, %54, %cst_23 [1] : vector<8x8xf32> to vector<8xf32>
    %56 = vector.shape_cast %55 : vector<8xf32> to vector<8x1xf32>
    %57 = vector.broadcast %56 : vector<8x1xf32> to vector<8x8xf32>
    %58 = arith.subf %54, %57 : vector<8x8xf32>
    %59 = math.exp %58 : vector<8x8xf32>
    %cst_24 = arith.constant dense<0.000000e+00> : vector<8xf32>
    %60 = vector.multi_reduction <add>, %59, %cst_24 [1] : vector<8x8xf32> to vector<8xf32>
    %61 = vector.shape_cast %60 : vector<8xf32> to vector<8x1xf32>
    %62 = tpu.reciprocal %61 {approx = true} : vector<8x1xf32> -> vector<8x1xf32>
    %63 = vector.broadcast %62 : vector<8x1xf32> to vector<8x8xf32>
    %64 = arith.mulf %59, %63 : vector<8x8xf32>
    %cst_25 = arith.constant dense<0.000000e+00> : vector<8x8xf32>
    %65 = tpu.matmul %64, %51, %cst_25 {dimension_numbers = #tpu.dot_dimension_numbers<[1], [0], [0], [1], [0, 0, 1, 1], [], []>} : vector<8x8xf32>, vector<8x8xf32>, vector<8x8xf32> -> vector<8x8xf32>
    %66 = vector.extract_strided_slice %7 {offsets = [16, 0], sizes = [8, 32], strides = [1, 1]} : vector<32x32xf32> to vector<8x32xf32>
    %cst_26 = arith.constant dense<0.000000e+00> : vector<8x32xf32>
    %67 = tpu.matmul %65, %66, %cst_26 {dimension_numbers = #tpu.dot_dimension_numbers<[1], [0], [0], [1], [0, 0, 1, 1], [], []>} : vector<8x8xf32>, vector<8x32xf32>, vector<8x32xf32> -> vector<8x32xf32>
    %68 = arith.addf %48, %67 : vector<8x32xf32>
    %69 = vector.extract_strided_slice %6 {offsets = [0, 24], sizes = [8, 8], strides = [1, 1]} : vector<8x96xf32> to vector<8x8xf32>
    %70 = vector.extract_strided_slice %6 {offsets = [0, 56], sizes = [8, 8], strides = [1, 1]} : vector<8x96xf32> to vector<8x8xf32>
    %71 = vector.extract_strided_slice %6 {offsets = [0, 88], sizes = [8, 8], strides = [1, 1]} : vector<8x96xf32> to vector<8x8xf32>
    %cst_27 = arith.constant dense<0.000000e+00> : vector<8x8xf32>
    %72 = tpu.matmul %69, %70, %cst_27 {dimension_numbers = #tpu.dot_dimension_numbers<[1], [1], [0], [0], [0, 0, 1, 0], [], []>} : vector<8x8xf32>, vector<8x8xf32>, vector<8x8xf32> -> vector<8x8xf32>
    %cst_28 = arith.constant 0.353553385 : f32
    %73 = vector.broadcast %cst_28 : f32 to vector<8x8xf32>
    %74 = arith.mulf %72, %73 : vector<8x8xf32>
    %cst_29 = arith.constant dense<0xFF800000> : vector<8xf32>
    %75 = vector.multi_reduction <maximumf>, %74, %cst_29 [1] : vector<8x8xf32> to vector<8xf32>
    %76 = vector.shape_cast %75 : vector<8xf32> to vector<8x1xf32>
    %77 = vector.broadcast %76 : vector<8x1xf32> to vector<8x8xf32>
    %78 = arith.subf %74, %77 : vector<8x8xf32>
    %79 = math.exp %78 : vector<8x8xf32>
    %cst_30 = arith.constant dense<0.000000e+00> : vector<8xf32>
    %80 = vector.multi_reduction <add>, %79, %cst_30 [1] : vector<8x8xf32> to vector<8xf32>
    %81 = vector.shape_cast %80 : vector<8xf32> to vector<8x1xf32>
    %82 = tpu.reciprocal %81 {approx = true} : vector<8x1xf32> -> vector<8x1xf32>
    %83 = vector.broadcast %82 : vector<8x1xf32> to vector<8x8xf32>
    %84 = arith.mulf %79, %83 : vector<8x8xf32>
    %cst_31 = arith.constant dense<0.000000e+00> : vector<8x8xf32>
    %85 = tpu.matmul %84, %71, %cst_31 {dimension_numbers = #tpu.dot_dimension_numbers<[1], [0], [0], [1], [0, 0, 1, 1], [], []>} : vector<8x8xf32>, vector<8x8xf32>, vector<8x8xf32> -> vector<8x8xf32>
    %86 = vector.extract_strided_slice %7 {offsets = [24, 0], sizes = [8, 32], strides = [1, 1]} : vector<32x32xf32> to vector<8x32xf32>
    %cst_32 = arith.constant dense<0.000000e+00> : vector<8x32xf32>
    %87 = tpu.matmul %85, %86, %cst_32 {dimension_numbers = #tpu.dot_dimension_numbers<[1], [0], [0], [1], [0, 0, 1, 1], [], []>} : vector<8x8xf32>, vector<8x32xf32>, vector<8x32xf32> -> vector<8x32xf32>
    %88 = arith.addf %68, %87 : vector<8x32xf32>
    %c0_33 = arith.constant 0 : index
    %c0_34 = arith.constant 0 : index
    %89 = vector.load %arg5[%c0_33, %c0_34] : memref<1x32xf32, #tpu.memory_space<vmem>>, vector<1x32xf32>
    %90 = vector.broadcast %89 : vector<1x32xf32> to vector<8x32xf32>
    %91 = arith.addf %88, %90 : vector<8x32xf32>
    %92 = arith.addf %1, %91 : vector<8x32xf32>
    %c0_35 = arith.constant 0 : index
    %c0_36 = arith.constant 0 : index
    %93 = vector.load %arg6[%c0_35, %c0_36] : memref<1x32xf32, #tpu.memory_space<vmem>>, vector<1x32xf32>
    %c0_37 = arith.constant 0 : index
    %c0_38 = arith.constant 0 : index
    %94 = vector.load %arg7[%c0_37, %c0_38] : memref<1x32xf32, #tpu.memory_space<vmem>>, vector<1x32xf32>
    %cst_39 = arith.constant dense<0.000000e+00> : vector<8xf32>
    %95 = vector.multi_reduction <add>, %92, %cst_39 [1] : vector<8x32xf32> to vector<8xf32>
    %96 = vector.shape_cast %95 : vector<8xf32> to vector<8x1xf32>
    %cst_40 = arith.constant 3.200000e+01 : f32
    %97 = vector.broadcast %cst_40 : f32 to vector<8x1xf32>
    %98 = arith.divf %96, %97 : vector<8x1xf32>
    %99 = vector.broadcast %98 : vector<8x1xf32> to vector<8x32xf32>
    %100 = arith.subf %92, %99 : vector<8x32xf32>
    %101 = arith.mulf %100, %100 : vector<8x32xf32>
    %cst_41 = arith.constant dense<0.000000e+00> : vector<8xf32>
    %102 = vector.multi_reduction <add>, %101, %cst_41 [1] : vector<8x32xf32> to vector<8xf32>
    %103 = vector.shape_cast %102 : vector<8xf32> to vector<8x1xf32>
    %cst_42 = arith.constant 3.200000e+01 : f32
    %104 = vector.broadcast %cst_42 : f32 to vector<8x1xf32>
    %105 = arith.divf %103, %104 : vector<8x1xf32>
    %106 = vector.broadcast %98 : vector<8x1xf32> to vector<8x32xf32>
    %107 = arith.subf %92, %106 : vector<8x32xf32>
    %cst_43 = arith.constant 9.99999974E-6 : f32
    %108 = vector.broadcast %cst_43 : f32 to vector<8x1xf32>
    %109 = arith.addf %105, %108 : vector<8x1xf32>
    %110 = math.rsqrt %109 : vector<8x1xf32>
    %111 = vector.broadcast %110 : vector<8x1xf32> to vector<8x32xf32>
    %112 = arith.mulf %107, %111 : vector<8x32xf32>
    %113 = vector.broadcast %93 : vector<1x32xf32> to vector<8x32xf32>
    %114 = arith.mulf %112, %113 : vector<8x32xf32>
    %115 = vector.broadcast %94 : vector<1x32xf32> to vector<8x32xf32>
    %116 = arith.addf %114, %115 : vector<8x32xf32>
    %c0_44 = arith.constant 0 : index
    %c0_45 = arith.constant 0 : index
    %117 = vector.load %arg8[%c0_44, %c0_45] : memref<32x64xf32, #tpu.memory_space<vmem>>, vector<32x64xf32>
    %cst_46 = arith.constant dense<0.000000e+00> : vector<8x64xf32>
    %118 = tpu.matmul %116, %117, %cst_46 {dimension_numbers = #tpu.dot_dimension_numbers<[1], [0], [0], [1], [0, 0, 1, 1], [], []>} : vector<8x32xf32>, vector<32x64xf32>, vector<8x64xf32> -> vector<8x64xf32>
    %c0_47 = arith.constant 0 : index
    %c0_48 = arith.constant 0 : index
    %119 = vector.load %arg9[%c0_47, %c0_48] : memref<1x64xf32, #tpu.memory_space<vmem>>, vector<1x64xf32>
    %120 = vector.broadcast %119 : vector<1x64xf32> to vector<8x64xf32>
    %121 = arith.addf %118, %120 : vector<8x64xf32>
    %cst_49 = arith.constant 0.000000e+00 : f32
    %122 = vector.broadcast %cst_49 : f32 to vector<8x64xf32>
    %123 = arith.maximumf %121, %122 : vector<8x64xf32>
    %c0_50 = arith.constant 0 : index
    %c0_51 = arith.constant 0 : index
    %124 = vector.load %arg10[%c0_50, %c0_51] : memref<64x32xf32, #tpu.memory_space<vmem>>, vector<64x32xf32>
    %cst_52 = arith.constant dense<0.000000e+00> : vector<8x32xf32>
    %125 = tpu.matmul %123, %124, %cst_52 {dimension_numbers = #tpu.dot_dimension_numbers<[1], [0], [0], [1], [0, 0, 1, 1], [], []>} : vector<8x64xf32>, vector<64x32xf32>, vector<8x32xf32> -> vector<8x32xf32>
    %c0_53 = arith.constant 0 : index
    %c0_54 = arith.constant 0 : index
    %126 = vector.load %arg11[%c0_53, %c0_54] : memref<1x32xf32, #tpu.memory_space<vmem>>, vector<1x32xf32>
    %127 = vector.broadcast %126 : vector<1x32xf32> to vector<8x32xf32>
    %128 = arith.addf %125, %127 : vector<8x32xf32>
    %129 = arith.addf %116, %128 : vector<8x32xf32>
    %c0_55 = arith.constant 0 : index
    %c0_56 = arith.constant 0 : index
    %130 = vector.load %arg12[%c0_55, %c0_56] : memref<1x32xf32, #tpu.memory_space<vmem>>, vector<1x32xf32>
    %c0_57 = arith.constant 0 : index
    %c0_58 = arith.constant 0 : index
    %131 = vector.load %arg13[%c0_57, %c0_58] : memref<1x32xf32, #tpu.memory_space<vmem>>, vector<1x32xf32>
    %cst_59 = arith.constant dense<0.000000e+00> : vector<8xf32>
    %132 = vector.multi_reduction <add>, %129, %cst_59 [1] : vector<8x32xf32> to vector<8xf32>
    %133 = vector.shape_cast %132 : vector<8xf32> to vector<8x1xf32>
    %cst_60 = arith.constant 3.200000e+01 : f32
    %134 = vector.broadcast %cst_60 : f32 to vector<8x1xf32>
    %135 = arith.divf %133, %134 : vector<8x1xf32>
    %136 = vector.broadcast %135 : vector<8x1xf32> to vector<8x32xf32>
    %137 = arith.subf %129, %136 : vector<8x32xf32>
    %138 = arith.mulf %137, %137 : vector<8x32xf32>
    %cst_61 = arith.constant dense<0.000000e+00> : vector<8xf32>
    %139 = vector.multi_reduction <add>, %138, %cst_61 [1] : vector<8x32xf32> to vector<8xf32>
    %140 = vector.shape_cast %139 : vector<8xf32> to vector<8x1xf32>
    %cst_62 = arith.constant 3.200000e+01 : f32
    %141 = vector.broadcast %cst_62 : f32 to vector<8x1xf32>
    %142 = arith.divf %140, %141 : vector<8x1xf32>
    %143 = vector.broadcast %135 : vector<8x1xf32> to vector<8x32xf32>
    %144 = arith.subf %129, %143 : vector<8x32xf32>
    %cst_63 = arith.constant 9.99999974E-6 : f32
    %145 = vector.broadcast %cst_63 : f32 to vector<8x1xf32>
    %146 = arith.addf %142, %145 : vector<8x1xf32>
    %147 = math.rsqrt %146 : vector<8x1xf32>
    %148 = vector.broadcast %147 : vector<8x1xf32> to vector<8x32xf32>
    %149 = arith.mulf %144, %148 : vector<8x32xf32>
    %150 = vector.broadcast %130 : vector<1x32xf32> to vector<8x32xf32>
    %151 = arith.mulf %149, %150 : vector<8x32xf32>
    %152 = vector.broadcast %131 : vector<1x32xf32> to vector<8x32xf32>
    %153 = arith.addf %151, %152 : vector<8x32xf32>
    %c0_64 = arith.constant 0 : index
    %c0_65 = arith.constant 0 : index
    %c0_66 = arith.constant 0 : index
    %154 = vector.load %arg14[%c0_64, %c0_65, %c0_66] : memref<1x8x32xf32, #tpu.memory_space<vmem>>, vector<1x8x32xf32>
    %155 = vector.shape_cast %154 : vector<1x8x32xf32> to vector<8x32xf32>
    %156 = vector.shape_cast %153 : vector<8x32xf32> to vector<1x8x32xf32>
    tpu.vector_store %arg14[%c0_64, %c0_65, %c0_66], %156 {strides = array<i32>} : memref<1x8x32xf32, #tpu.memory_space<vmem>>, vector<1x8x32xf32>,
    return
  }
  func.func @transform_0(%arg0: i32) -> (i32, i32, i32) {
    %c0_i32 = arith.constant 0 : i32
    %c0_i32_0 = arith.constant 0 : i32
    %c0_i32_1 = arith.constant 0 : i32
    return %arg0, %c0_i32, %c0_i32_0 : i32, i32, i32
  }
  func.func @transform_1(%arg0: i32) -> (i32, i32) {
    %c0_i32 = arith.constant 0 : i32
    %c0_i32_0 = arith.constant 0 : i32
    %c0_i32_1 = arith.constant 0 : i32
    return %c0_i32, %c0_i32_0 : i32, i32
  }
  func.func @transform_2(%arg0: i32) -> (i32, i32) {
    %c0_i32 = arith.constant 0 : i32
    %c0_i32_0 = arith.constant 0 : i32
    %c0_i32_1 = arith.constant 0 : i32
    return %c0_i32, %c0_i32_0 : i32, i32
  }
  func.func @transform_3(%arg0: i32) -> (i32, i32) {
    %c0_i32 = arith.constant 0 : i32
    %c0_i32_0 = arith.constant 0 : i32
    %c0_i32_1 = arith.constant 0 : i32
    return %c0_i32, %c0_i32_0 : i32, i32
  }
  func.func @transform_4(%arg0: i32) -> (i32, i32) {
    %c0_i32 = arith.constant 0 : i32
    %c0_i32_0 = arith.constant 0 : i32
    %c0_i32_1 = arith.constant 0 : i32
    return %c0_i32, %c0_i32_0 : i32, i32
  }
  func.func @transform_5(%arg0: i32) -> (i32, i32) {
    %c0_i32 = arith.constant 0 : i32
    %c0_i32_0 = arith.constant 0 : i32
    %c0_i32_1 = arith.constant 0 : i32
    return %c0_i32, %c0_i32_0 : i32, i32
  }
  func.func @transform_6(%arg0: i32) -> (i32, i32) {
    %c0_i32 = arith.constant 0 : i32
    %c0_i32_0 = arith.constant 0 : i32
    %c0_i32_1 = arith.constant 0 : i32
    return %c0_i32, %c0_i32_0 : i32, i32
  }
  func.func @transform_7(%arg0: i32) -> (i32, i32) {
    %c0_i32 = arith.constant 0 : i32
    %c0_i32_0 = arith.constant 0 : i32
    %c0_i32_1 = arith.constant 0 : i32
    return %c0_i32, %c0_i32_0 : i32, i32
  }
  func.func @transform_8(%arg0: i32) -> (i32, i32) {
    %c0_i32 = arith.constant 0 : i32
    %c0_i32_0 = arith.constant 0 : i32
    %c0_i32_1 = arith.constant 0 : i32
    return %c0_i32, %c0_i32_0 : i32, i32
  }
  func.func @transform_9(%arg0: i32) -> (i32, i32) {
    %c0_i32 = arith.constant 0 : i32
    %c0_i32_0 = arith.constant 0 : i32
    %c0_i32_1 = arith.constant 0 : i32
    return %c0_i32, %c0_i32_0 : i32, i32
  }
  func.func @transform_10(%arg0: i32) -> (i32, i32) {
    %c0_i32 = arith.constant 0 : i32
    %c0_i32_0 = arith.constant 0 : i32
    %c0_i32_1 = arith.constant 0 : i32
    return %c0_i32, %c0_i32_0 : i32, i32
  }
  func.func @transform_11(%arg0: i32) -> (i32, i32) {
    %c0_i32 = arith.constant 0 : i32
    %c0_i32_0 = arith.constant 0 : i32
    %c0_i32_1 = arith.constant 0 : i32
    return %c0_i32, %c0_i32_0 : i32, i32
  }
  func.func @transform_12(%arg0: i32) -> (i32, i32) {
    %c0_i32 = arith.constant 0 : i32
    %c0_i32_0 = arith.constant 0 : i32
    %c0_i32_1 = arith.constant 0 : i32
    return %c0_i32, %c0_i32_0 : i32, i32
  }
  func.func @transform_13(%arg0: i32) -> (i32, i32, i32) {
    %c0_i32 = arith.constant 0 : i32
    %c0_i32_0 = arith.constant 0 : i32
    %c0_i32_1 = arith.constant 0 : i32
    return %arg0, %c0_i32, %c0_i32_0 : i32, i32, i32
  }
}

module attributes {stable_mosaic.version = 11 : i64} {
  func.func @_cross_attn_kernel(%arg0: i32, %arg1: memref<1x12x32xf32, #tpu.memory_space<vmem>>, %arg2: memref<1x8x32xf32, #tpu.memory_space<vmem>>, %arg3: memref<32x32xf32, #tpu.memory_space<vmem>>, %arg4: memref<1x32xf32, #tpu.memory_space<vmem>>, %arg5: memref<32x64xf32, #tpu.memory_space<vmem>>, %arg6: memref<1x64xf32, #tpu.memory_space<vmem>>, %arg7: memref<32x32xf32, #tpu.memory_space<vmem>>, %arg8: memref<1x32xf32, #tpu.memory_space<vmem>>, %arg9: memref<1x12x32xf32, #tpu.memory_space<vmem>>) attributes {dimension_semantics = [#tpu.dimension_semantics<parallel>], iteration_bounds = array<i64: 2>, scalar_prefetch = 0 : i64, scratch_operands = 0 : i64, tpu.core_type = #tpu.core_type<tc>, window_params = [{transform_indices = @transform_0, window_bounds = array<i64: 1, 12, 32>}, {transform_indices = @transform_1, window_bounds = array<i64: 1, 8, 32>}, {pipeline_mode = #tpu.pipeline_mode<synchronous>, transform_indices = @transform_2, window_bounds = array<i64: 32, 32>}, {pipeline_mode = #tpu.pipeline_mode<synchronous>, transform_indices = @transform_3, window_bounds = array<i64: 1, 32>}, {pipeline_mode = #tpu.pipeline_mode<synchronous>, transform_indices = @transform_4, window_bounds = array<i64: 32, 64>}, {pipeline_mode = #tpu.pipeline_mode<synchronous>, transform_indices = @transform_5, window_bounds = array<i64: 1, 64>}, {pipeline_mode = #tpu.pipeline_mode<synchronous>, transform_indices = @transform_6, window_bounds = array<i64: 32, 32>}, {pipeline_mode = #tpu.pipeline_mode<synchronous>, transform_indices = @transform_7, window_bounds = array<i64: 1, 32>}, {transform_indices = @transform_8, window_bounds = array<i64: 1, 12, 32>}]} {
    %c0 = arith.constant 0 : index
    %c0_0 = arith.constant 0 : index
    %c0_1 = arith.constant 0 : index
    %0 = vector.load %arg1[%c0, %c0_0, %c0_1] : memref<1x12x32xf32, #tpu.memory_space<vmem>>, vector<1x12x32xf32>
    %1 = vector.shape_cast %0 : vector<1x12x32xf32> to vector<12x32xf32>
    %c0_2 = arith.constant 0 : index
    %c0_3 = arith.constant 0 : index
    %c0_4 = arith.constant 0 : index
    %2 = vector.load %arg2[%c0_2, %c0_3, %c0_4] : memref<1x8x32xf32, #tpu.memory_space<vmem>>, vector<1x8x32xf32>
    %3 = vector.shape_cast %2 : vector<1x8x32xf32> to vector<8x32xf32>
    %c0_5 = arith.constant 0 : index
    %c0_6 = arith.constant 0 : index
    %4 = vector.load %arg3[%c0_5, %c0_6] : memref<32x32xf32, #tpu.memory_space<vmem>>, vector<32x32xf32>
    %cst = arith.constant dense<0.000000e+00> : vector<12x32xf32>
    %5 = tpu.matmul %1, %4, %cst {dimension_numbers = #tpu.dot_dimension_numbers<[1], [0], [0], [1], [0, 0, 1, 1], [], []>} : vector<12x32xf32>, vector<32x32xf32>, vector<12x32xf32> -> vector<12x32xf32>
    %c0_7 = arith.constant 0 : index
    %c0_8 = arith.constant 0 : index
    %6 = vector.load %arg4[%c0_7, %c0_8] : memref<1x32xf32, #tpu.memory_space<vmem>>, vector<1x32xf32>
    %7 = vector.broadcast %6 : vector<1x32xf32> to vector<12x32xf32>
    %8 = arith.addf %5, %7 : vector<12x32xf32>
    %c0_9 = arith.constant 0 : index
    %c0_10 = arith.constant 0 : index
    %9 = vector.load %arg5[%c0_9, %c0_10] : memref<32x64xf32, #tpu.memory_space<vmem>>, vector<32x64xf32>
    %cst_11 = arith.constant dense<0.000000e+00> : vector<8x64xf32>
    %10 = tpu.matmul %3, %9, %cst_11 {dimension_numbers = #tpu.dot_dimension_numbers<[1], [0], [0], [1], [0, 0, 1, 1], [], []>} : vector<8x32xf32>, vector<32x64xf32>, vector<8x64xf32> -> vector<8x64xf32>
    %c0_12 = arith.constant 0 : index
    %c0_13 = arith.constant 0 : index
    %11 = vector.load %arg6[%c0_12, %c0_13] : memref<1x64xf32, #tpu.memory_space<vmem>>, vector<1x64xf32>
    %12 = vector.broadcast %11 : vector<1x64xf32> to vector<8x64xf32>
    %13 = arith.addf %10, %12 : vector<8x64xf32>
    %14 = vector.extract_strided_slice %13 {offsets = [0, 0], sizes = [8, 32], strides = [1, 1]} : vector<8x64xf32> to vector<8x32xf32>
    %15 = vector.extract_strided_slice %13 {offsets = [0, 32], sizes = [8, 32], strides = [1, 1]} : vector<8x64xf32> to vector<8x32xf32>
    %cst_14 = arith.constant dense<0.000000e+00> : vector<12x8xf32>
    %16 = tpu.matmul %8, %14, %cst_14 {dimension_numbers = #tpu.dot_dimension_numbers<[1], [1], [0], [0], [0, 0, 1, 0], [], []>} : vector<12x32xf32>, vector<8x32xf32>, vector<12x8xf32> -> vector<12x8xf32>
    %cst_15 = arith.constant 0.176776692 : f32
    %17 = vector.broadcast %cst_15 : f32 to vector<12x8xf32>
    %18 = arith.mulf %16, %17 : vector<12x8xf32>
    %cst_16 = arith.constant dense<0xFF800000> : vector<12xf32>
    %19 = vector.multi_reduction <maximumf>, %18, %cst_16 [1] : vector<12x8xf32> to vector<12xf32>
    %20 = vector.shape_cast %19 : vector<12xf32> to vector<12x1xf32>
    %21 = vector.broadcast %20 : vector<12x1xf32> to vector<12x8xf32>
    %22 = arith.subf %18, %21 : vector<12x8xf32>
    %23 = math.exp %22 : vector<12x8xf32>
    %cst_17 = arith.constant dense<0.000000e+00> : vector<12xf32>
    %24 = vector.multi_reduction <add>, %23, %cst_17 [1] : vector<12x8xf32> to vector<12xf32>
    %25 = vector.shape_cast %24 : vector<12xf32> to vector<12x1xf32>
    %26 = tpu.reciprocal %25 {approx = true} : vector<12x1xf32> -> vector<12x1xf32>
    %27 = vector.broadcast %26 : vector<12x1xf32> to vector<12x8xf32>
    %28 = arith.mulf %23, %27 : vector<12x8xf32>
    %cst_18 = arith.constant dense<0.000000e+00> : vector<12x32xf32>
    %29 = tpu.matmul %28, %15, %cst_18 {dimension_numbers = #tpu.dot_dimension_numbers<[1], [0], [0], [1], [0, 0, 1, 1], [], []>} : vector<12x8xf32>, vector<8x32xf32>, vector<12x32xf32> -> vector<12x32xf32>
    %c0_19 = arith.constant 0 : index
    %c0_20 = arith.constant 0 : index
    %30 = vector.load %arg7[%c0_19, %c0_20] : memref<32x32xf32, #tpu.memory_space<vmem>>, vector<32x32xf32>
    %cst_21 = arith.constant dense<0.000000e+00> : vector<12x32xf32>
    %31 = tpu.matmul %29, %30, %cst_21 {dimension_numbers = #tpu.dot_dimension_numbers<[1], [0], [0], [1], [0, 0, 1, 1], [], []>} : vector<12x32xf32>, vector<32x32xf32>, vector<12x32xf32> -> vector<12x32xf32>
    %c0_22 = arith.constant 0 : index
    %c0_23 = arith.constant 0 : index
    %32 = vector.load %arg8[%c0_22, %c0_23] : memref<1x32xf32, #tpu.memory_space<vmem>>, vector<1x32xf32>
    %33 = vector.broadcast %32 : vector<1x32xf32> to vector<12x32xf32>
    %34 = arith.addf %31, %33 : vector<12x32xf32>
    %35 = arith.addf %1, %34 : vector<12x32xf32>
    %c0_24 = arith.constant 0 : index
    %c0_25 = arith.constant 0 : index
    %c0_26 = arith.constant 0 : index
    %36 = vector.load %arg9[%c0_24, %c0_25, %c0_26] : memref<1x12x32xf32, #tpu.memory_space<vmem>>, vector<1x12x32xf32>
    %37 = vector.shape_cast %36 : vector<1x12x32xf32> to vector<12x32xf32>
    %38 = vector.shape_cast %35 : vector<12x32xf32> to vector<1x12x32xf32>
    tpu.vector_store %arg9[%c0_24, %c0_25, %c0_26], %38 {strides = array<i32>} : memref<1x12x32xf32, #tpu.memory_space<vmem>>, vector<1x12x32xf32>,
    return
  }
  func.func @transform_0(%arg0: i32) -> (i32, i32, i32) {
    %c0_i32 = arith.constant 0 : i32
    %c0_i32_0 = arith.constant 0 : i32
    %c0_i32_1 = arith.constant 0 : i32
    return %arg0, %c0_i32, %c0_i32_0 : i32, i32, i32
  }
  func.func @transform_1(%arg0: i32) -> (i32, i32, i32) {
    %c0_i32 = arith.constant 0 : i32
    %c0_i32_0 = arith.constant 0 : i32
    %c0_i32_1 = arith.constant 0 : i32
    return %arg0, %c0_i32, %c0_i32_0 : i32, i32, i32
  }
  func.func @transform_2(%arg0: i32) -> (i32, i32) {
    %c0_i32 = arith.constant 0 : i32
    %c0_i32_0 = arith.constant 0 : i32
    %c0_i32_1 = arith.constant 0 : i32
    return %c0_i32, %c0_i32_0 : i32, i32
  }
  func.func @transform_3(%arg0: i32) -> (i32, i32) {
    %c0_i32 = arith.constant 0 : i32
    %c0_i32_0 = arith.constant 0 : i32
    %c0_i32_1 = arith.constant 0 : i32
    return %c0_i32, %c0_i32_0 : i32, i32
  }
  func.func @transform_4(%arg0: i32) -> (i32, i32) {
    %c0_i32 = arith.constant 0 : i32
    %c0_i32_0 = arith.constant 0 : i32
    %c0_i32_1 = arith.constant 0 : i32
    return %c0_i32, %c0_i32_0 : i32, i32
  }
  func.func @transform_5(%arg0: i32) -> (i32, i32) {
    %c0_i32 = arith.constant 0 : i32
    %c0_i32_0 = arith.constant 0 : i32
    %c0_i32_1 = arith.constant 0 : i32
    return %c0_i32, %c0_i32_0 : i32, i32
  }
  func.func @transform_6(%arg0: i32) -> (i32, i32) {
    %c0_i32 = arith.constant 0 : i32
    %c0_i32_0 = arith.constant 0 : i32
    %c0_i32_1 = arith.constant 0 : i32
    return %c0_i32, %c0_i32_0 : i32, i32
  }
  func.func @transform_7(%arg0: i32) -> (i32, i32) {
    %c0_i32 = arith.constant 0 : i32
    %c0_i32_0 = arith.constant 0 : i32
    %c0_i32_1 = arith.constant 0 : i32
    return %c0_i32, %c0_i32_0 : i32, i32
  }
  func.func @transform_8(%arg0: i32) -> (i32, i32, i32) {
    %c0_i32 = arith.constant 0 : i32
    %c0_i32_0 = arith.constant 0 : i32
    %c0_i32_1 = arith.constant 0 : i32
    return %arg0, %c0_i32, %c0_i32_0 : i32, i32, i32
  }
}

module attributes {stable_mosaic.version = 11 : i64} {
  func.func @_heads_kernel(%arg0: i32, %arg1: memref<2x384xf32, #tpu.memory_space<vmem>>, %arg2: memref<384x96xf32, #tpu.memory_space<vmem>>, %arg3: memref<1x96xf32, #tpu.memory_space<vmem>>, %arg4: memref<32x16xf32, #tpu.memory_space<vmem>>, %arg5: memref<1x16xf32, #tpu.memory_space<vmem>>, %arg6: memref<16x2xf32, #tpu.memory_space<vmem>>, %arg7: memref<1x2xf32, #tpu.memory_space<vmem>>, %arg8: memref<32x16xf32, #tpu.memory_space<vmem>>, %arg9: memref<1x16xf32, #tpu.memory_space<vmem>>, %arg10: memref<16x3xf32, #tpu.memory_space<vmem>>, %arg11: memref<1x3xf32, #tpu.memory_space<vmem>>, %arg12: memref<32x16xf32, #tpu.memory_space<vmem>>, %arg13: memref<1x16xf32, #tpu.memory_space<vmem>>, %arg14: memref<16x3xf32, #tpu.memory_space<vmem>>, %arg15: memref<1x3xf32, #tpu.memory_space<vmem>>, %arg16: memref<2x2xf32, #tpu.memory_space<vmem>>, %arg17: memref<2x3xf32, #tpu.memory_space<vmem>>, %arg18: memref<2x3xf32, #tpu.memory_space<vmem>>) attributes {dimension_semantics = [#tpu.dimension_semantics<arbitrary>], iteration_bounds = array<i64: 1>, scalar_prefetch = 0 : i64, scratch_operands = 0 : i64, tpu.core_type = #tpu.core_type<tc>, window_params = [{pipeline_mode = #tpu.pipeline_mode<synchronous>, transform_indices = @transform_0, window_bounds = array<i64: 2, 384>}, {pipeline_mode = #tpu.pipeline_mode<synchronous>, transform_indices = @transform_1, window_bounds = array<i64: 384, 96>}, {pipeline_mode = #tpu.pipeline_mode<synchronous>, transform_indices = @transform_2, window_bounds = array<i64: 1, 96>}, {pipeline_mode = #tpu.pipeline_mode<synchronous>, transform_indices = @transform_3, window_bounds = array<i64: 32, 16>}, {pipeline_mode = #tpu.pipeline_mode<synchronous>, transform_indices = @transform_4, window_bounds = array<i64: 1, 16>}, {pipeline_mode = #tpu.pipeline_mode<synchronous>, transform_indices = @transform_5, window_bounds = array<i64: 16, 2>}, {pipeline_mode = #tpu.pipeline_mode<synchronous>, transform_indices = @transform_6, window_bounds = array<i64: 1, 2>}, {pipeline_mode = #tpu.pipeline_mode<synchronous>, transform_indices = @transform_7, window_bounds = array<i64: 32, 16>}, {pipeline_mode = #tpu.pipeline_mode<synchronous>, transform_indices = @transform_8, window_bounds = array<i64: 1, 16>}, {pipeline_mode = #tpu.pipeline_mode<synchronous>, transform_indices = @transform_9, window_bounds = array<i64: 16, 3>}, {pipeline_mode = #tpu.pipeline_mode<synchronous>, transform_indices = @transform_10, window_bounds = array<i64: 1, 3>}, {pipeline_mode = #tpu.pipeline_mode<synchronous>, transform_indices = @transform_11, window_bounds = array<i64: 32, 16>}, {pipeline_mode = #tpu.pipeline_mode<synchronous>, transform_indices = @transform_12, window_bounds = array<i64: 1, 16>}, {pipeline_mode = #tpu.pipeline_mode<synchronous>, transform_indices = @transform_13, window_bounds = array<i64: 16, 3>}, {pipeline_mode = #tpu.pipeline_mode<synchronous>, transform_indices = @transform_14, window_bounds = array<i64: 1, 3>}, {pipeline_mode = #tpu.pipeline_mode<synchronous>, transform_indices = @transform_15, window_bounds = array<i64: 2, 2>}, {pipeline_mode = #tpu.pipeline_mode<synchronous>, transform_indices = @transform_16, window_bounds = array<i64: 2, 3>}, {pipeline_mode = #tpu.pipeline_mode<synchronous>, transform_indices = @transform_17, window_bounds = array<i64: 2, 3>}]} {
    %c0 = arith.constant 0 : index
    %c0_0 = arith.constant 0 : index
    %0 = vector.load %arg1[%c0, %c0_0] : memref<2x384xf32, #tpu.memory_space<vmem>>, vector<2x384xf32>
    %c0_1 = arith.constant 0 : index
    %c0_2 = arith.constant 0 : index
    %1 = vector.load %arg2[%c0_1, %c0_2] : memref<384x96xf32, #tpu.memory_space<vmem>>, vector<384x96xf32>
    %cst = arith.constant dense<0.000000e+00> : vector<2x96xf32>
    %2 = tpu.matmul %0, %1, %cst {dimension_numbers = #tpu.dot_dimension_numbers<[1], [0], [0], [1], [0, 0, 1, 1], [], []>} : vector<2x384xf32>, vector<384x96xf32>, vector<2x96xf32> -> vector<2x96xf32>
    %c0_3 = arith.constant 0 : index
    %c0_4 = arith.constant 0 : index
    %3 = vector.load %arg3[%c0_3, %c0_4] : memref<1x96xf32, #tpu.memory_space<vmem>>, vector<1x96xf32>
    %4 = vector.broadcast %3 : vector<1x96xf32> to vector<2x96xf32>
    %5 = arith.addf %2, %4 : vector<2x96xf32>
    %cst_5 = arith.constant 0.000000e+00 : f32
    %6 = vector.broadcast %cst_5 : f32 to vector<2x96xf32>
    %7 = arith.maximumf %5, %6 : vector<2x96xf32>
    %8 = vector.extract_strided_slice %7 {offsets = [0, 0], sizes = [2, 32], strides = [1, 1]} : vector<2x96xf32> to vector<2x32xf32>
    %c0_6 = arith.constant 0 : index
    %c0_7 = arith.constant 0 : index
    %9 = vector.load %arg4[%c0_6, %c0_7] : memref<32x16xf32, #tpu.memory_space<vmem>>, vector<32x16xf32>
    %c0_8 = arith.constant 0 : index
    %c0_9 = arith.constant 0 : index
    %10 = vector.load %arg5[%c0_8, %c0_9] : memref<1x16xf32, #tpu.memory_space<vmem>>, vector<1x16xf32>
    %c0_10 = arith.constant 0 : index
    %c0_11 = arith.constant 0 : index
    %11 = vector.load %arg6[%c0_10, %c0_11] : memref<16x2xf32, #tpu.memory_space<vmem>>, vector<16x2xf32>
    %c0_12 = arith.constant 0 : index
    %c0_13 = arith.constant 0 : index
    %12 = vector.load %arg7[%c0_12, %c0_13] : memref<1x2xf32, #tpu.memory_space<vmem>>, vector<1x2xf32>
    %cst_14 = arith.constant dense<0.000000e+00> : vector<2x16xf32>
    %13 = tpu.matmul %8, %9, %cst_14 {dimension_numbers = #tpu.dot_dimension_numbers<[1], [0], [0], [1], [0, 0, 1, 1], [], []>} : vector<2x32xf32>, vector<32x16xf32>, vector<2x16xf32> -> vector<2x16xf32>
    %14 = vector.broadcast %10 : vector<1x16xf32> to vector<2x16xf32>
    %15 = arith.addf %13, %14 : vector<2x16xf32>
    %cst_15 = arith.constant 0.000000e+00 : f32
    %16 = vector.broadcast %cst_15 : f32 to vector<2x16xf32>
    %17 = arith.maximumf %15, %16 : vector<2x16xf32>
    %cst_16 = arith.constant dense<0.000000e+00> : vector<2x2xf32>
    %18 = tpu.matmul %17, %11, %cst_16 {dimension_numbers = #tpu.dot_dimension_numbers<[1], [0], [0], [1], [0, 0, 1, 1], [], []>} : vector<2x16xf32>, vector<16x2xf32>, vector<2x2xf32> -> vector<2x2xf32>
    %19 = vector.broadcast %12 : vector<1x2xf32> to vector<2x2xf32>
    %20 = arith.addf %18, %19 : vector<2x2xf32>
    %c0_17 = arith.constant 0 : index
    %c0_18 = arith.constant 0 : index
    %21 = vector.load %arg16[%c0_17, %c0_18] : memref<2x2xf32, #tpu.memory_space<vmem>>, vector<2x2xf32>
    tpu.vector_store %arg16[%c0_17, %c0_18], %20 {strides = array<i32>} : memref<2x2xf32, #tpu.memory_space<vmem>>, vector<2x2xf32>,
    %22 = vector.extract_strided_slice %7 {offsets = [0, 32], sizes = [2, 32], strides = [1, 1]} : vector<2x96xf32> to vector<2x32xf32>
    %c0_19 = arith.constant 0 : index
    %c0_20 = arith.constant 0 : index
    %23 = vector.load %arg8[%c0_19, %c0_20] : memref<32x16xf32, #tpu.memory_space<vmem>>, vector<32x16xf32>
    %c0_21 = arith.constant 0 : index
    %c0_22 = arith.constant 0 : index
    %24 = vector.load %arg9[%c0_21, %c0_22] : memref<1x16xf32, #tpu.memory_space<vmem>>, vector<1x16xf32>
    %c0_23 = arith.constant 0 : index
    %c0_24 = arith.constant 0 : index
    %25 = vector.load %arg10[%c0_23, %c0_24] : memref<16x3xf32, #tpu.memory_space<vmem>>, vector<16x3xf32>
    %c0_25 = arith.constant 0 : index
    %c0_26 = arith.constant 0 : index
    %26 = vector.load %arg11[%c0_25, %c0_26] : memref<1x3xf32, #tpu.memory_space<vmem>>, vector<1x3xf32>
    %cst_27 = arith.constant dense<0.000000e+00> : vector<2x16xf32>
    %27 = tpu.matmul %22, %23, %cst_27 {dimension_numbers = #tpu.dot_dimension_numbers<[1], [0], [0], [1], [0, 0, 1, 1], [], []>} : vector<2x32xf32>, vector<32x16xf32>, vector<2x16xf32> -> vector<2x16xf32>
    %28 = vector.broadcast %24 : vector<1x16xf32> to vector<2x16xf32>
    %29 = arith.addf %27, %28 : vector<2x16xf32>
    %cst_28 = arith.constant 0.000000e+00 : f32
    %30 = vector.broadcast %cst_28 : f32 to vector<2x16xf32>
    %31 = arith.maximumf %29, %30 : vector<2x16xf32>
    %cst_29 = arith.constant dense<0.000000e+00> : vector<2x3xf32>
    %32 = tpu.matmul %31, %25, %cst_29 {dimension_numbers = #tpu.dot_dimension_numbers<[1], [0], [0], [1], [0, 0, 1, 1], [], []>} : vector<2x16xf32>, vector<16x3xf32>, vector<2x3xf32> -> vector<2x3xf32>
    %33 = vector.broadcast %26 : vector<1x3xf32> to vector<2x3xf32>
    %34 = arith.addf %32, %33 : vector<2x3xf32>
    %c0_30 = arith.constant 0 : index
    %c0_31 = arith.constant 0 : index
    %35 = vector.load %arg17[%c0_30, %c0_31] : memref<2x3xf32, #tpu.memory_space<vmem>>, vector<2x3xf32>
    tpu.vector_store %arg17[%c0_30, %c0_31], %34 {strides = array<i32>} : memref<2x3xf32, #tpu.memory_space<vmem>>, vector<2x3xf32>,
    %36 = vector.extract_strided_slice %7 {offsets = [0, 64], sizes = [2, 32], strides = [1, 1]} : vector<2x96xf32> to vector<2x32xf32>
    %c0_32 = arith.constant 0 : index
    %c0_33 = arith.constant 0 : index
    %37 = vector.load %arg12[%c0_32, %c0_33] : memref<32x16xf32, #tpu.memory_space<vmem>>, vector<32x16xf32>
    %c0_34 = arith.constant 0 : index
    %c0_35 = arith.constant 0 : index
    %38 = vector.load %arg13[%c0_34, %c0_35] : memref<1x16xf32, #tpu.memory_space<vmem>>, vector<1x16xf32>
    %c0_36 = arith.constant 0 : index
    %c0_37 = arith.constant 0 : index
    %39 = vector.load %arg14[%c0_36, %c0_37] : memref<16x3xf32, #tpu.memory_space<vmem>>, vector<16x3xf32>
    %c0_38 = arith.constant 0 : index
    %c0_39 = arith.constant 0 : index
    %40 = vector.load %arg15[%c0_38, %c0_39] : memref<1x3xf32, #tpu.memory_space<vmem>>, vector<1x3xf32>
    %cst_40 = arith.constant dense<0.000000e+00> : vector<2x16xf32>
    %41 = tpu.matmul %36, %37, %cst_40 {dimension_numbers = #tpu.dot_dimension_numbers<[1], [0], [0], [1], [0, 0, 1, 1], [], []>} : vector<2x32xf32>, vector<32x16xf32>, vector<2x16xf32> -> vector<2x16xf32>
    %42 = vector.broadcast %38 : vector<1x16xf32> to vector<2x16xf32>
    %43 = arith.addf %41, %42 : vector<2x16xf32>
    %cst_41 = arith.constant 0.000000e+00 : f32
    %44 = vector.broadcast %cst_41 : f32 to vector<2x16xf32>
    %45 = arith.maximumf %43, %44 : vector<2x16xf32>
    %cst_42 = arith.constant dense<0.000000e+00> : vector<2x3xf32>
    %46 = tpu.matmul %45, %39, %cst_42 {dimension_numbers = #tpu.dot_dimension_numbers<[1], [0], [0], [1], [0, 0, 1, 1], [], []>} : vector<2x16xf32>, vector<16x3xf32>, vector<2x3xf32> -> vector<2x3xf32>
    %47 = vector.broadcast %40 : vector<1x3xf32> to vector<2x3xf32>
    %48 = arith.addf %46, %47 : vector<2x3xf32>
    %c0_43 = arith.constant 0 : index
    %c0_44 = arith.constant 0 : index
    %49 = vector.load %arg18[%c0_43, %c0_44] : memref<2x3xf32, #tpu.memory_space<vmem>>, vector<2x3xf32>
    tpu.vector_store %arg18[%c0_43, %c0_44], %48 {strides = array<i32>} : memref<2x3xf32, #tpu.memory_space<vmem>>, vector<2x3xf32>,
    return
  }
  func.func @transform_0(%arg0: i32) -> (i32, i32) {
    %c0_i32 = arith.constant 0 : i32
    %c0_i32_0 = arith.constant 0 : i32
    %c0_i32_1 = arith.constant 0 : i32
    return %c0_i32, %c0_i32_0 : i32, i32
  }
  func.func @transform_1(%arg0: i32) -> (i32, i32) {
    %c0_i32 = arith.constant 0 : i32
    %c0_i32_0 = arith.constant 0 : i32
    %c0_i32_1 = arith.constant 0 : i32
    return %c0_i32, %c0_i32_0 : i32, i32
  }
  func.func @transform_2(%arg0: i32) -> (i32, i32) {
    %c0_i32 = arith.constant 0 : i32
    %c0_i32_0 = arith.constant 0 : i32
    %c0_i32_1 = arith.constant 0 : i32
    return %c0_i32, %c0_i32_0 : i32, i32
  }
  func.func @transform_3(%arg0: i32) -> (i32, i32) {
    %c0_i32 = arith.constant 0 : i32
    %c0_i32_0 = arith.constant 0 : i32
    %c0_i32_1 = arith.constant 0 : i32
    return %c0_i32, %c0_i32_0 : i32, i32
  }
  func.func @transform_4(%arg0: i32) -> (i32, i32) {
    %c0_i32 = arith.constant 0 : i32
    %c0_i32_0 = arith.constant 0 : i32
    %c0_i32_1 = arith.constant 0 : i32
    return %c0_i32, %c0_i32_0 : i32, i32
  }
  func.func @transform_5(%arg0: i32) -> (i32, i32) {
    %c0_i32 = arith.constant 0 : i32
    %c0_i32_0 = arith.constant 0 : i32
    %c0_i32_1 = arith.constant 0 : i32
    return %c0_i32, %c0_i32_0 : i32, i32
  }
  func.func @transform_6(%arg0: i32) -> (i32, i32) {
    %c0_i32 = arith.constant 0 : i32
    %c0_i32_0 = arith.constant 0 : i32
    %c0_i32_1 = arith.constant 0 : i32
    return %c0_i32, %c0_i32_0 : i32, i32
  }
  func.func @transform_7(%arg0: i32) -> (i32, i32) {
    %c0_i32 = arith.constant 0 : i32
    %c0_i32_0 = arith.constant 0 : i32
    %c0_i32_1 = arith.constant 0 : i32
    return %c0_i32, %c0_i32_0 : i32, i32
  }
  func.func @transform_8(%arg0: i32) -> (i32, i32) {
    %c0_i32 = arith.constant 0 : i32
    %c0_i32_0 = arith.constant 0 : i32
    %c0_i32_1 = arith.constant 0 : i32
    return %c0_i32, %c0_i32_0 : i32, i32
  }
  func.func @transform_9(%arg0: i32) -> (i32, i32) {
    %c0_i32 = arith.constant 0 : i32
    %c0_i32_0 = arith.constant 0 : i32
    %c0_i32_1 = arith.constant 0 : i32
    return %c0_i32, %c0_i32_0 : i32, i32
  }
  func.func @transform_10(%arg0: i32) -> (i32, i32) {
    %c0_i32 = arith.constant 0 : i32
    %c0_i32_0 = arith.constant 0 : i32
    %c0_i32_1 = arith.constant 0 : i32
    return %c0_i32, %c0_i32_0 : i32, i32
  }
  func.func @transform_11(%arg0: i32) -> (i32, i32) {
    %c0_i32 = arith.constant 0 : i32
    %c0_i32_0 = arith.constant 0 : i32
    %c0_i32_1 = arith.constant 0 : i32
    return %c0_i32, %c0_i32_0 : i32, i32
  }
  func.func @transform_12(%arg0: i32) -> (i32, i32) {
    %c0_i32 = arith.constant 0 : i32
    %c0_i32_0 = arith.constant 0 : i32
    %c0_i32_1 = arith.constant 0 : i32
    return %c0_i32, %c0_i32_0 : i32, i32
  }
  func.func @transform_13(%arg0: i32) -> (i32, i32) {
    %c0_i32 = arith.constant 0 : i32
    %c0_i32_0 = arith.constant 0 : i32
    %c0_i32_1 = arith.constant 0 : i32
    return %c0_i32, %c0_i32_0 : i32, i32
  }
  func.func @transform_14(%arg0: i32) -> (i32, i32) {
    %c0_i32 = arith.constant 0 : i32
    %c0_i32_0 = arith.constant 0 : i32
    %c0_i32_1 = arith.constant 0 : i32
    return %c0_i32, %c0_i32_0 : i32, i32
  }
  func.func @transform_15(%arg0: i32) -> (i32, i32) {
    %c0_i32 = arith.constant 0 : i32
    %c0_i32_0 = arith.constant 0 : i32
    %c0_i32_1 = arith.constant 0 : i32
    return %c0_i32, %c0_i32_0 : i32, i32
  }
  func.func @transform_16(%arg0: i32) -> (i32, i32) {
    %c0_i32 = arith.constant 0 : i32
    %c0_i32_0 = arith.constant 0 : i32
    %c0_i32_1 = arith.constant 0 : i32
    return %c0_i32, %c0_i32_0 : i32, i32
  }
  func.func @transform_17(%arg0: i32) -> (i32, i32) {
    %c0_i32 = arith.constant 0 : i32
    %c0_i32_0 = arith.constant 0 : i32
    %c0_i32_1 = arith.constant 0 : i32
    return %c0_i32, %c0_i32_0 : i32, i32
  }
}

</mosaic_0001>

<llo_original>
// kernel: vatep_forward.7
$region0: #{vatep_forward.7}
  #allocation0 [shape = 'u32[]', space=smem, size = 0x4, offset = 0x4, fixed_abs, tag = 'smem constant byte address 0x4 - core index']
  #allocation1 [shape = 'u32[144,128]{1,0:T(1,128)}', space=vmem, size = 0x12000, scoped, tag = 'internal scratch']
  %s0 = inlined_call_operand.vmem [shape: f32[24,64], index: 0, kind: input, shape index: {}]
  %s1 = inlined_call_operand.vmem [shape: f32[64,32], index: 1, kind: input, shape index: {}]
  %s2 = inlined_call_operand.vmem [shape: f32[1,32], index: 2, kind: input, shape index: {}]
  %s3 = inlined_call_operand.vmem [shape: f32[24,32], index: 3, kind: output, shape index: {}]
  %s4 = sld [smem:[#allocation0]]
  $region22: #{vatep_forward.7} parent=0
    _
  %s6 = ssub.s32 1, %s4
  %s7 = scalar_select 0, %s6, %s4
  // Predicated region
  $region2: #{vatep_forward.7} parent=0 // pred_check
    _
  $region3: #{vatep_forward.7} parent=0 // pred_check_branch
    %9 = sbr.rel (0) target = $region5
  $region4: #{vatep_forward.7} parent=0 // pred_region
    _
  $region5: #{vatep_forward.7} parent=0 // pred_fallthru
    _
  // Predicated region
  $region6: #{vatep_forward.7} parent=0 // pred_check
    _
  $region7: #{vatep_forward.7} parent=0 // pred_check_branch
    %11 = sbr.rel (0) target = $region9
  $region8: #{vatep_forward.7} parent=0 // pred_region
    _
  $region9: #{vatep_forward.7} parent=0 // pred_fallthru
    _
  // Predicated region
  $region10: #{vatep_forward.7} parent=0 // pred_check
    _
  $region11: #{vatep_forward.7} parent=0 // pred_check_branch
    %13 = sbr.rel (0) target = $region13
  $region12: #{vatep_forward.7} parent=0 // pred_region
    _
  $region13: #{vatep_forward.7} parent=0 // pred_fallthru
    _
  %v14 = vld [vmem:[%s0] sm:$0xff]
  %v15 = vld [vmem:[%s0 + $0x8] sm:$0xff]
  %v16 = vld [vmem:[%s0 + $0x10] sm:$0xff]
  %v17 = vld [vmem:[%s1] sm:$0xff]
  %v18 = vld [vmem:[%s1 + $0x8] sm:$0xff]
  %v19 = vld [vmem:[%s1 + $0x10] sm:$0xff]
  %v20 = vld [vmem:[%s1 + $0x18] sm:$0xff]
  %v21 = vld [vmem:[%s1 + $0x20] sm:$0xff]
  %v22 = vld [vmem:[%s1 + $0x28] sm:$0xff]
  %v23 = vld [vmem:[%s1 + $0x30] sm:$0xff]
  %v24 = vld [vmem:[%s1 + $0x38] sm:$0xff]
  %v25 = vld [vmem:[%s2] sm:$0x1]
  %v27 = vlaneseq
  %v28 = vshrl.u32 %v27, 7
  %v29 = vsub.s32 0, %v28
  %v30 = vrot.slane %v25, %v29
  %vm32 = vcmask 523264
  %v34 = vsel %vm32, %v14, 0
  %v37 = vsel %vm32, %v15, 0
  %v40 = vsel %vm32, %v16, 0
  %42 = vmatprep.subr.mxu0 0.0
  %43 = vmatpush1.msra.mxu0 0.0
  %44 = vmatprep.subr.mxu0 0.0
  %45 = vmatpush1.msra.mxu0 0.0
  %46 = vmatprep.subr.mxu0 0.0
  %47 = vmatpush1.msra.mxu0 0.0
  %48 = vmatprep.subr.mxu0 0.0
  %49 = vmatpush1.msra.mxu0 0.0
  %50 = vmatprep.subr.mxu0 0.0
  %51 = vmatpush1.msra.mxu0 0.0
  %52 = vmatprep.subr.mxu0 0.0
  %53 = vmatpush1.msra.mxu0 0.0
  %54 = vmatprep.subr.mxu0 0.0
  %55 = vmatpush1.msra.mxu0 0.0
  %56 = vmatprep.subr.mxu0 0.0
  %57 = vmatpush1.msra.mxu0 0.0
  %58 = vmatprep.subr.mxu0 0.0
  %59 = vmatpush1.msra.mxu0 %v24
  %60 = vmatprep.subr.mxu0 0.0
  %61 = vmatpush1.msra.mxu0 %v23
  %62 = vmatprep.subr.mxu0 0.0
  %63 = vmatpush1.msra.mxu0 %v22
  %64 = vmatprep.subr.mxu0 0.0
  %65 = vmatpush1.msra.mxu0 %v21
  %66 = vmatprep.subr.mxu0 0.0
  %67 = vmatpush1.msra.mxu0 %v20
  %68 = vmatprep.subr.mxu0 0.0
  %69 = vmatpush1.msra.mxu0 %v19
  %70 = vmatprep.subr.mxu0 0.0
  %71 = vmatpush1.msra.mxu0 %v18
  %72 = vmatprep.subr.mxu0 0.0
  %73 = vmatpush1.msra.mxu0 %v17
  %74 = vmatprep.subr.mxu0 0.0
  %75 = vmatpush2.msra.mxu0 0.0
  %76 = vmatprep.subr.mxu0 0.0
  %77 = vmatpush2.msra.mxu0 0.0
  %78 = vmatprep.subr.mxu0 0.0
  %79 = vmatpush2.msra.mxu0 0.0
  %80 = vmatprep.subr.mxu0 0.0
  %81 = vmatpush2.msra.mxu0 0.0
  %82 = vmatprep.subr.mxu0 0.0
  %83 = vmatpush2.msra.mxu0 0.0
  %84 = vmatprep.subr.mxu0 0.0
  %85 = vmatpush2.msra.mxu0 0.0
  %86 = vmatprep.subr.mxu0 0.0
  %87 = vmatpush2.msra.mxu0 0.0
  %88 = vmatprep.subr.mxu0 0.0
  %89 = vmatpush2.msra.mxu0 0.0
  %90 = vmatprep.subr.mxu0 0.0
  %91 = vmatpush2.msra.mxu0 0.0
  %92 = vmatprep.subr.mxu0 0.0
  %93 = vmatpush2.msra.mxu0 0.0
  %94 = vmatprep.subr.mxu0 0.0
  %95 = vmatpush2.msra.mxu0 0.0
  %96 = vmatprep.subr.mxu0 0.0
  %97 = vmatpush2.msra.mxu0 0.0
  %98 = vmatprep.subr.mxu0 0.0
  %99 = vmatpush2.msra.mxu0 0.0
  %100 = vmatprep.subr.mxu0 0.0
  %101 = vmatpush2.msra.mxu0 0.0
  %102 = vmatprep.subr.mxu0 0.0
  %103 = vmatpush2.msra.mxu0 0.0
  %104 = vmatprep.subr.mxu0 0.0
  %105 = vmatpush2.msra.mxu0 0.0
  %106 = vmatprep.mubr.f32.mxu0 0.0
  %107 = vmatmul.mubr.f32.gmra.mxu0 %v34
  %v108 = vpop.f32.mrf.mxu0
  %v109 = vadd.f32 %v30, %v108
  %v110 = vpop.f32.mrf.mxu0
  %111 = vmatprep.mubr.f32.mxu0 0.0
  %112 = vmatmul.mubr.f32.gmra.mxu0 %v37
  %v113 = vpop.f32.mrf.mxu0
  %v114 = vadd.f32 %v30, %v113
  %v115 = vpop.f32.mrf.mxu0
  %116 = vmatprep.mubr.f32.mxu0 0.0
  %117 = vmatmul.mubr.f32.gmra.mxu0 %v40
  %v118 = vpop.f32.mrf.mxu0
  %v119 = vadd.f32 %v30, %v118
  %v120 = vpop.f32.mrf.mxu0
  %121 = vdwg.mxu0
  %vm122 = vcmask 261120
  %123 = vst.msk [vmem:[%s3] sm:$0xff] %vm122, %v109
  %124 = vst.msk [vmem:[%s3 + $0x8] sm:$0xff] %vm122, %v114
  %125 = vst.msk [vmem:[%s3 + $0x10] sm:$0xff] %vm122, %v119
  // Predicated region
  $region14: #{vatep_forward.7} parent=0 // pred_check
    _
  $region15: #{vatep_forward.7} parent=0 // pred_check_branch
    %127 = sbr.rel (0) target = $region17
  $region16: #{vatep_forward.7} parent=0 // pred_region
    _
  $region17: #{vatep_forward.7} parent=0 // pred_fallthru
    _
  // Predicated region
  $region18: #{vatep_forward.7} parent=0 // pred_check
    _
  $region19: #{vatep_forward.7} parent=0 // pred_check_branch
    %129 = sbr.rel (0) target = $region21
  $region20: #{vatep_forward.7} parent=0 // pred_region
    _
  $region21: #{vatep_forward.7} parent=0 // pred_fallthru
    _

// kernel: vatep_forward.12
$region0: #{vatep_forward.12}
  #allocation0 [shape = 'u32[]', space=smem, size = 0x4, offset = 0x4, fixed_abs, tag = 'smem constant byte address 0x4 - core index']
  #allocation1 [shape = 'u32[144,128]{1,0:T(1,128)}', space=vmem, size = 0x12000, scoped, tag = 'internal scratch']
  %s0 = inlined_call_operand.vmem [shape: f32[2,12,32], index: 0, kind: input, shape index: {}]
  %s1 = inlined_call_operand.vmem [shape: f32[2,8,32], index: 1, kind: input, shape index: {}]
  %s2 = inlined_call_operand.vmem [shape: f32[32,32], index: 2, kind: input, shape index: {}]
  %s3 = inlined_call_operand.vmem [shape: f32[1,32], index: 3, kind: input, shape index: {}]
  %s4 = inlined_call_operand.vmem [shape: f32[32,64], index: 4, kind: input, shape index: {}]
  %s5 = inlined_call_operand.vmem [shape: f32[1,64], index: 5, kind: input, shape index: {}]
  %s6 = inlined_call_operand.vmem [shape: f32[32,32], index: 6, kind: input, shape index: {}]
  %s7 = inlined_call_operand.vmem [shape: f32[1,32], index: 7, kind: input, shape index: {}]
  %s8 = inlined_call_operand.vmem [shape: f32[2,12,32], index: 8, kind: output, shape index: {}]
  %s9 = sld [smem:[#allocation0]]
  $region65: #{vatep_forward.12} parent=0
    _
  %s11 = ssub.s32 1, %s9
  %s12 = scalar_select 0, %s11, %s9
  loop: start=0, step=1, limit=4
  $region2: #{vatep_forward.12} parent=0 // loop_pre_header
    _
  $region3: #{vatep_forward.12} parent=0 // loop_header
    %s14 = sphi 0, %s18
    %p15 = scmp.ge.s32.totalorder %s14, 4
    %s24 = sphi 0, %s26
    %s27 = sphi 0, %s24
    %s28 = sphi 0, %s27
    %s44 = sphi 0, %s28
    %s50 = sphi 0, %s52
    %s53 = sphi 0, %s50
    %s54 = sphi 0, %s53
    %s70 = sphi 0, %s54
    %s74 = sphi 0, %s74
    %s76 = sphi 0, %s74
    %s77 = sphi 0, %s76
    %s91 = sphi 0, %s77
    %s95 = sphi 0, %s95
    %s97 = sphi 0, %s95
    %s98 = sphi 0, %s97
    %s112 = sphi 0, %s98
    %s116 = sphi 0, %s116
    %s118 = sphi 0, %s116
    %s119 = sphi 0, %s118
    %s133 = sphi 0, %s119
    %s137 = sphi 0, %s137
    %s139 = sphi 0, %s137
    %s140 = sphi 0, %s139
    %s154 = sphi 0, %s140
    %s158 = sphi 0, %s158
    %s160 = sphi 0, %s158
    %s161 = sphi 0, %s160
    %s175 = sphi 0, %s161
    %s179 = sphi 0, %s179
    %s181 = sphi 0, %s179
    %s182 = sphi 0, %s181
    %s196 = sphi 0, %s182
    %s202 = sphi 0, %s204
    %s205 = sphi 0, %s202
    %s206 = sphi 0, %s205
    %s222 = sphi 0, %s206
  $region4: #{vatep_forward.12} parent=0 // loop_header_branch
    %17 = sbr.rel (%p15) target = $region8
  $region5: #{vatep_forward.12} parent=0 // loop_body
    %s19 = ssub.s32 %s14, 1
    %s20 = ssub.s32 %s14, 2
    %s21 = sadd.s32 %s14, 1
    %s22 = ssub.s32 %s14, %s21
    %p23 = scmp.eq.s32.totalorder %s22, 0
    %s25 = sadd.s32 %s24, 1
    %s26 = scalar_select %p23, %s24, %s25
    %p29 = pneg %p23
    %p30 = scmp.eq.s32.totalorder %s14, 1
    %p31 = por %p29, %p30
    %p32 = scmp.ne.s32.totalorder %s24, %s27
    %p33 = scmp.eq.s32.totalorder %s14, 0
    %p34 = por %p32, %p33
    %p35 = scmp.ne.s32.totalorder %s24, %s27
    %p36 = scmp.eq.s32.totalorder %s19, 1
    %p37 = por %p35, %p36
    %p38 = scmp.ne.s32.totalorder %s27, %s28
    %p39 = scmp.eq.s32.totalorder %s19, 0
    %p40 = por %p38, %p39
    %p41 = scmp.ne.s32.totalorder %s27, %s28
    %p42 = scmp.eq.s32.totalorder %s20, 1
    %p43 = por %p41, %p42
    %p45 = scmp.ne.s32.totalorder %s28, %s44
    %p46 = scmp.eq.s32.totalorder %s20, 0
    %p47 = por %p45, %p46
    %s48 = ssub.s32 %s14, %s21
    %p49 = scmp.eq.s32.totalorder %s48, 0
    %s51 = sadd.s32 %s50, 1
    %s52 = scalar_select %p49, %s50, %s51
    %p55 = pneg %p49
    %p56 = scmp.eq.s32.totalorder %s14, 1
    %p57 = por %p55, %p56
    %p58 = scmp.ne.s32.totalorder %s50, %s53
    %p59 = scmp.eq.s32.totalorder %s14, 0
    %p60 = por %p58, %p59
    %p61 = scmp.ne.s32.totalorder %s50, %s53
    %p62 = scmp.eq.s32.totalorder %s19, 1
    %p63 = por %p61, %p62
    %p64 = scmp.ne.s32.totalorder %s53, %s54
    %p65 = scmp.eq.s32.totalorder %s19, 0
    %p66 = por %p64, %p65
    %p67 = scmp.ne.s32.totalorder %s53, %s54
    %p68 = scmp.eq.s32.totalorder %s20, 1
    %p69 = por %p67, %p68
    %p71 = scmp.ne.s32.totalorder %s54, %s70
    %p72 = scmp.eq.s32.totalorder %s20, 0
    %p73 = por %p71, %p72
    %s75 = sadd.s32 %s74, 1
    %p78 = scmp.eq.s32.totalorder %s14, 1
    %p79 = scmp.ne.s32.totalorder %s74, %s76
    %p80 = scmp.eq.s32.totalorder %s14, 0
    %p81 = por %p79, %p80
    %p82 = scmp.ne.s32.totalorder %s74, %s76
    %p83 = scmp.eq.s32.totalorder %s19, 1
    %p84 = por %p82, %p83
    %p85 = scmp.ne.s32.totalorder %s76, %s77
    %p86 = scmp.eq.s32.totalorder %s19, 0
    %p87 = por %p85, %p86
    %p88 = scmp.ne.s32.totalorder %s76, %s77
    %p89 = scmp.eq.s32.totalorder %s20, 1
    %p90 = por %p88, %p89
    %p92 = scmp.ne.s32.totalorder %s77, %s91
    %p93 = scmp.eq.s32.totalorder %s20, 0
    %p94 = por %p92, %p93
    %s96 = sadd.s32 %s95, 1
    %p99 = scmp.eq.s32.totalorder %s14, 1
    %p100 = scmp.ne.s32.totalorder %s95, %s97
    %p101 = scmp.eq.s32.totalorder %s14, 0
    %p102 = por %p100, %p101
    %p103 = scmp.ne.s32.totalorder %s95, %s97
    %p104 = scmp.eq.s32.totalorder %s19, 1
    %p105 = por %p103, %p104
    %p106 = scmp.ne.s32.totalorder %s97, %s98
    %p107 = scmp.eq.s32.totalorder %s19, 0
    %p108 = por %p106, %p107
    %p109 = scmp.ne.s32.totalorder %s97, %s98
    %p110 = scmp.eq.s32.totalorder %s20, 1
    %p111 = por %p109, %p110
    %p113 = scmp.ne.s32.totalorder %s98, %s112
    %p114 = scmp.eq.s32.totalorder %s20, 0
    %p115 = por %p113, %p114
    %s117 = sadd.s32 %s116, 1
    %p120 = scmp.eq.s32.totalorder %s14, 1
    %p121 = scmp.ne.s32.totalorder %s116, %s118
    %p122 = scmp.eq.s32.totalorder %s14, 0
    %p123 = por %p121, %p122
    %p124 = scmp.ne.s32.totalorder %s116, %s118
    %p125 = scmp.eq.s32.totalorder %s19, 1
    %p126 = por %p124, %p125
    %p127 = scmp.ne.s32.totalorder %s118, %s119
    %p128 = scmp.eq.s32.totalorder %s19, 0
    %p129 = por %p127, %p128
    %p130 = scmp.ne.s32.totalorder %s118, %s119
    %p131 = scmp.eq.s32.totalorder %s20, 1
    %p132 = por %p130, %p131
    %p134 = scmp.ne.s32.totalorder %s119, %s133
    %p135 = scmp.eq.s32.totalorder %s20, 0
    %p136 = por %p134, %p135
    %s138 = sadd.s32 %s137, 1
    %p141 = scmp.eq.s32.totalorder %s14, 1
    %p142 = scmp.ne.s32.totalorder %s137, %s139
    %p143 = scmp.eq.s32.totalorder %s14, 0
    %p144 = por %p142, %p143
    %p145 = scmp.ne.s32.totalorder %s137, %s139
    %p146 = scmp.eq.s32.totalorder %s19, 1
    %p147 = por %p145, %p146
    %p148 = scmp.ne.s32.totalorder %s139, %s140
    %p149 = scmp.eq.s32.totalorder %s19, 0
    %p150 = por %p148, %p149
    %p151 = scmp.ne.s32.totalorder %s139, %s140
    %p152 = scmp.eq.s32.totalorder %s20, 1
    %p153 = por %p151, %p152
    %p155 = scmp.ne.s32.totalorder %s140, %s154
    %p156 = scmp.eq.s32.totalorder %s20, 0
    %p157 = por %p155, %p156
    %s159 = sadd.s32 %s158, 1
    %p162 = scmp.eq.s32.totalorder %s14, 1
    %p163 = scmp.ne.s32.totalorder %s158, %s160
    %p164 = scmp.eq.s32.totalorder %s14, 0
    %p165 = por %p163, %p164
    %p166 = scmp.ne.s32.totalorder %s158, %s160
    %p167 = scmp.eq.s32.totalorder %s19, 1
    %p168 = por %p166, %p167
    %p169 = scmp.ne.s32.totalorder %s160, %s161
    %p170 = scmp.eq.s32.totalorder %s19, 0
    %p171 = por %p169, %p170
    %p172 = scmp.ne.s32.totalorder %s160, %s161
    %p173 = scmp.eq.s32.totalorder %s20, 1
    %p174 = por %p172, %p173
    %p176 = scmp.ne.s32.totalorder %s161, %s175
    %p177 = scmp.eq.s32.totalorder %s20, 0
    %p178 = por %p176, %p177
    %s180 = sadd.s32 %s179, 1
    %p183 = scmp.eq.s32.totalorder %s14, 1
    %p184 = scmp.ne.s32.totalorder %s179, %s181
    %p185 = scmp.eq.s32.totalorder %s14, 0
    %p186 = por %p184, %p185
    %p187 = scmp.ne.s32.totalorder %s179, %s181
    %p188 = scmp.eq.s32.totalorder %s19, 1
    %p189 = por %p187, %p188
    %p190 = scmp.ne.s32.totalorder %s181, %s182
    %p191 = scmp.eq.s32.totalorder %s19, 0
    %p192 = por %p190, %p191
    %p193 = scmp.ne.s32.totalorder %s181, %s182
    %p194 = scmp.eq.s32.totalorder %s20, 1
    %p195 = por %p193, %p194
    %p197 = scmp.ne.s32.totalorder %s182, %s196
    %p198 = scmp.eq.s32.totalorder %s20, 0
    %p199 = por %p197, %p198
    %s200 = ssub.s32 %s14, %s21
    %p201 = scmp.eq.s32.totalorder %s200, 0
    %s203 = sadd.s32 %s202, 1
    %s204 = scalar_select %p201, %s202, %s203
    %p207 = pneg %p201
    %p208 = scmp.eq.s32.totalorder %s14, 1
    %p209 = por %p207, %p208
    %p210 = scmp.ne.s32.totalorder %s202, %s205
    %p211 = scmp.eq.s32.totalorder %s14, 0
    %p212 = por %p210, %p211
    %p213 = scmp.ne.s32.totalorder %s202, %s205
    %p214 = scmp.eq.s32.totalorder %s19, 1
    %p215 = por %p213, %p214
    %p216 = scmp.ne.s32.totalorder %s205, %s206
    %p217 = scmp.eq.s32.totalorder %s19, 0
    %p218 = por %p216, %p217
    %p219 = scmp.ne.s32.totalorder %s205, %s206
    %p220 = scmp.eq.s32.totalorder %s20, 1
    %p221 = por %p219, %p220
    %p223 = scmp.ne.s32.totalorder %s206, %s222
    %p224 = scmp.eq.s32.totalorder %s20, 0
    %p225 = por %p223, %p224
    %p226 = scmp.le.s32.totalorder 1, %s14
    %p227 = scmp.lt.s32.totalorder %s14, 3
    %p228 = pnand %p226, %p227
    %p229 = pneg %p228
    // Predicated region
    $region9: #{vatep_forward.12} parent=5 // pred_check
      _
    $region10: #{vatep_forward.12} parent=5 // pred_check_branch
      %231 = sbr.rel (%p228) target = $region12
    $region11: #{vatep_forward.12} parent=5 // pred_region
      %s232 = ssub.s32 %s14, 1
      // Predicated region
      $region13: #{vatep_forward.12} parent=11 // pred_check
        %p233 = pneg %p87
      $region14: #{vatep_forward.12} parent=11 // pred_check_branch
        %235 = sbr.rel (%p233) target = $region16
      $region15: #{vatep_forward.12} parent=11 // pred_region
        _
      $region16: #{vatep_forward.12} parent=11 // pred_fallthru
        _
      // Predicated region
      $region17: #{vatep_forward.12} parent=11 // pred_check
        %p236 = pneg %p108
      $region18: #{vatep_forward.12} parent=11 // pred_check_branch
        %238 = sbr.rel (%p236) target = $region20
      $region19: #{vatep_forward.12} parent=11 // pred_region
        _
      $region20: #{vatep_forward.12} parent=11 // pred_fallthru
        _
      // Predicated region
      $region21: #{vatep_forward.12} parent=11 // pred_check
        %p239 = pneg %p129
      $region22: #{vatep_forward.12} parent=11 // pred_check_branch
        %241 = sbr.rel (%p239) target = $region24
      $region23: #{vatep_forward.12} parent=11 // pred_region
        _
      $region24: #{vatep_forward.12} parent=11 // pred_fallthru
        _
      // Predicated region
      $region25: #{vatep_forward.12} parent=11 // pred_check
        %p242 = pneg %p150
      $region26: #{vatep_forward.12} parent=11 // pred_check_branch
        %244 = sbr.rel (%p242) target = $region28
      $region27: #{vatep_forward.12} parent=11 // pred_region
        _
      $region28: #{vatep_forward.12} parent=11 // pred_fallthru
        _
      // Predicated region
      $region29: #{vatep_forward.12} parent=11 // pred_check
        %p245 = pneg %p171
      $region30: #{vatep_forward.12} parent=11 // pred_check_branch
        %247 = sbr.rel (%p245) target = $region32
      $region31: #{vatep_forward.12} parent=11 // pred_region
        _
      $region32: #{vatep_forward.12} parent=11 // pred_fallthru
        _
      // Predicated region
      $region33: #{vatep_forward.12} parent=11 // pred_check
        %p248 = pneg %p192
      $region34: #{vatep_forward.12} parent=11 // pred_check_branch
        %250 = sbr.rel (%p248) target = $region36
      $region35: #{vatep_forward.12} parent=11 // pred_region
        _
      $region36: #{vatep_forward.12} parent=11 // pred_fallthru
        _
    $region12: #{vatep_forward.12} parent=5 // pred_fallthru
      _
    %p251 = scmp.lt.s32.totalorder %s14, 2
    // Predicated region
    $region37: #{vatep_forward.12} parent=5 // pred_check
      %p252 = pneg %p251
    $region38: #{vatep_forward.12} parent=5 // pred_check_branch
      %254 = sbr.rel (%p252) target = $region40
    $region39: #{vatep_forward.12} parent=5 // pred_region
      // Predicated region
      $region41: #{vatep_forward.12} parent=39 // pred_check
        %p255 = pneg %p34
      $region42: #{vatep_forward.12} parent=39 // pred_check_branch
        %257 = sbr.rel (%p255) target = $region44
      $region43: #{vatep_forward.12} parent=39 // pred_region
        %p258 = scmp.lt.s32.totalorder %s14, 1
        %s259 = scalar_select %p258, %s14, 1
        %s260 = smul.addr %s259, 2
        %s261 = smul.addr %s260, 8
        %s262 = scalar_lea.vmem %s0, %s261
      $region44: #{vatep_forward.12} parent=39 // pred_fallthru
        _
      // Predicated region
      $region45: #{vatep_forward.12} parent=39 // pred_check
        %p263 = pneg %p60
      $region46: #{vatep_forward.12} parent=39 // pred_check_branch
        %265 = sbr.rel (%p263) target = $region48
      $region47: #{vatep_forward.12} parent=39 // pred_region
        %p266 = scmp.lt.s32.totalorder %s14, 1
        %s267 = scalar_select %p266, %s14, 1
        %s268 = smul.addr %s267, 8
        %s269 = scalar_lea.vmem %s1, %s268
      $region48: #{vatep_forward.12} parent=39 // pred_fallthru
        _
    $region40: #{vatep_forward.12} parent=5 // pred_fallthru
      _
    %p270 = scmp.le.s32.totalorder 1, %s14
    %p271 = scmp.lt.s32.totalorder %s14, 3
    %p272 = pnand %p270, %p271
    %p273 = pneg %p272
    // Predicated region
    $region49: #{vatep_forward.12} parent=5 // pred_check
      _
    $region50: #{vatep_forward.12} parent=5 // pred_check_branch
      %275 = sbr.rel (%p272) target = $region52
    $region51: #{vatep_forward.12} parent=5 // pred_region
      %s276 = ssub.s32 %s14, 1
      %p277 = scmp.lt.s32.totalorder %s19, 1
      %s278 = scalar_select %p277, %s19, 1
      %s279 = smul.addr %s278, 2
      %s280 = smul.addr %s279, 8
      %s281 = scalar_lea.vmem %s0, %s280
      %p282 = pneg %p40
      %p283 = pneg %p37
      %p284 = scmp.lt.s32.totalorder %s19, 1
      %s285 = scalar_select %p284, %s19, 1
      %s286 = smul.addr %s285, 8
      %s287 = scalar_lea.vmem %s1, %s286
      %p288 = pneg %p66
      %p289 = pneg %p63
      %p290 = pneg %p87
      %p291 = pneg %p84
      %p292 = pneg %p108
      %p293 = pneg %p105
      %p294 = pneg %p129
      %p295 = pneg %p126
      %p296 = pneg %p150
      %p297 = pneg %p147
      %p298 = pneg %p171
      %p299 = pneg %p168
      %p300 = pneg %p192
      %p301 = pneg %p189
      %p302 = pneg %p218
      %p303 = pneg %p215
      %p304 = scmp.lt.s32.totalorder %s19, 1
      %s305 = scalar_select %p304, %s19, 1
      %s306 = smul.addr %s305, 2
      %s307 = smul.addr %s306, 8
      %s308 = scalar_lea.vmem %s8, %s307
      %p309 = scmp.lt.s32.totalorder %s19, 1
      %s310 = scalar_select %p309, %s19, 1
      %s311 = smul.addr %s310, 2
      %s312 = smul.addr %s311, 8
      %s313 = scalar_lea.vmem %s0, %s312
      %p314 = scmp.lt.s32.totalorder %s19, 1
      %s315 = scalar_select %p314, %s19, 1
      %s316 = smul.addr %s315, 8
      %s317 = scalar_lea.vmem %s1, %s316
      %p318 = scmp.lt.s32.totalorder %s19, 1
      %s319 = scalar_select %p318, %s19, 1
      %s320 = smul.addr %s319, 2
      %s321 = smul.addr %s320, 8
      %s322 = scalar_lea.vmem %s8, %s321
      %v323 = vld [vmem:[%s313] sm:$0xff]
      %v324 = vld [vmem:[%s313 + $0x8] sm:$0xf]
      %v325 = vld [vmem:[%s317] sm:$0xff]
      %v326 = vld [vmem:[%s2] sm:$0xff]
      %v327 = vld [vmem:[%s2 + $0x8] sm:$0xff]
      %v328 = vld [vmem:[%s2 + $0x10] sm:$0xff]
      %v329 = vld [vmem:[%s2 + $0x18] sm:$0xff]
      %v330 = vld [vmem:[%s3] sm:$0x1]
      %v332 = vlaneseq
      %v333 = vshrl.u32 %v332, 7
      %v334 = vsub.s32 0, %v333
      %v335 = vrot.slane %v330, %v334
      %vm337 = vcmask 261120
      %v339 = vsel %vm337, %v323, 0
      %v342 = vsel %vm337, %v324, 0
      %344 = vmatprep.subr.mxu0 0.0
      %345 = vmatpush1.msra.mxu0 0.0
      %346 = vmatprep.subr.mxu0 0.0
      %347 = vmatpush1.msra.mxu0 0.0
      %348 = vmatprep.subr.mxu0 0.0
      %349 = vmatpush1.msra.mxu0 0.0
      %350 = vmatprep.subr.mxu0 0.0
      %351 = vmatpush1.msra.mxu0 0.0
      %352 = vmatprep.subr.mxu0 0.0
      %353 = vmatpush1.msra.mxu0 0.0
      %354 = vmatprep.subr.mxu0 0.0
      %355 = vmatpush1.msra.mxu0 0.0
      %356 = vmatprep.subr.mxu0 0.0
      %357 = vmatpush1.msra.mxu0 0.0
      %358 = vmatprep.subr.mxu0 0.0
      %359 = vmatpush1.msra.mxu0 0.0
      %360 = vmatprep.subr.mxu0 0.0
      %361 = vmatpush1.msra.mxu0 0.0
      %362 = vmatprep.subr.mxu0 0.0
      %363 = vmatpush1.msra.mxu0 0.0
      %364 = vmatprep.subr.mxu0 0.0
      %365 = vmatpush1.msra.mxu0 0.0
      %366 = vmatprep.subr.mxu0 0.0
      %367 = vmatpush1.msra.mxu0 0.0
      %368 = vmatprep.subr.mxu0 0.0
      %369 = vmatpush1.msra.mxu0 %v329
      %370 = vmatprep.subr.mxu0 0.0
      %371 = vmatpush1.msra.mxu0 %v328
      %372 = vmatprep.subr.mxu0 0.0
      %373 = vmatpush1.msra.mxu0 %v327
      %374 = vmatprep.subr.mxu0 0.0
      %375 = vmatpush1.msra.mxu0 %v326
      %376 = vmatprep.subr.mxu0 0.0
      %377 = vmatpush2.msra.mxu0 0.0
      %378 = vmatprep.subr.mxu0 0.0
      %379 = vmatpush2.msra.mxu0 0.0
      %380 = vmatprep.subr.mxu0 0.0
      %381 = vmatpush2.msra.mxu0 0.0
      %382 = vmatprep.subr.mxu0 0.0
      %383 = vmatpush2.msra.mxu0 0.0
      %384 = vmatprep.subr.mxu0 0.0
      %385 = vmatpush2.msra.mxu0 0.0
      %386 = vmatprep.subr.mxu0 0.0
      %387 = vmatpush2.msra.mxu0 0.0
      %388 = vmatprep.subr.mxu0 0.0
      %389 = vmatpush2.msra.mxu0 0.0
      %390 = vmatprep.subr.mxu0 0.0
      %391 = vmatpush2.msra.mxu0 0.0
      %392 = vmatprep.subr.mxu0 0.0
      %393 = vmatpush2.msra.mxu0 0.0
      %394 = vmatprep.subr.mxu0 0.0
      %395 = vmatpush2.msra.mxu0 0.0
      %396 = vmatprep.subr.mxu0 0.0
      %397 = vmatpush2.msra.mxu0 0.0
      %398 = vmatprep.subr.mxu0 0.0
      %399 = vmatpush2.msra.mxu0 0.0
      %400 = vmatprep.subr.mxu0 0.0
      %401 = vmatpush2.msra.mxu0 0.0
      %402 = vmatprep.subr.mxu0 0.0
      %403 = vmatpush2.msra.mxu0 0.0
      %404 = vmatprep.subr.mxu0 0.0
      %405 = vmatpush2.msra.mxu0 0.0
      %406 = vmatprep.subr.mxu0 0.0
      %407 = vmatpush2.msra.mxu0 0.0
      %408 = vmatprep.mubr.f32.mxu0 0.0
      %409 = vmatmul.mubr.f32.gmra.mxu0 %v339
      %v410 = vpop.f32.mrf.mxu0
      %v411 = vadd.f32 %v335, %v410
      %v412 = vpop.f32.mrf.mxu0
      %413 = vmatprep.mubr.f32.mxu0 0.0
      %414 = vmatmul.mubr.f32.gmra.mxu0 %v342
      %v415 = vpop.f32.mrf.mxu0
      %v416 = vadd.f32 %v335, %v415
      %v417 = vpop.f32.mrf.mxu0
      %418 = vdwg.mxu0
      %v419 = vld [vmem:[%s4] sm:$0xff]
      %v420 = vld [vmem:[%s4 + $0x8] sm:$0xff]
      %v421 = vld [vmem:[%s4 + $0x10] sm:$0xff]
      %v422 = vld [vmem:[%s4 + $0x18] sm:$0xff]
      %v423 = vld [vmem:[%s5] sm:$0x1]
      %v425 = vlaneseq
      %v426 = vshrl.u32 %v425, 7
      %v427 = vsub.s32 0, %v426
      %v428 = vrot.slane %v423, %v427
      %v431 = vsel %vm337, %v325, 0
      %433 = vmatprep.subr.mxu0 0.0
      %434 = vmatpush1.msra.mxu0 0.0
      %435 = vmatprep.subr.mxu0 0.0
      %436 = vmatpush1.msra.mxu0 0.0
      %437 = vmatprep.subr.mxu0 0.0
      %438 = vmatpush1.msra.mxu0 0.0
      %439 = vmatprep.subr.mxu0 0.0
      %440 = vmatpush1.msra.mxu0 0.0
      %441 = vmatprep.subr.mxu0 0.0
      %442 = vmatpush1.msra.mxu0 0.0
      %443 = vmatprep.subr.mxu0 0.0
      %444 = vmatpush1.msra.mxu0 0.0
      %445 = vmatprep.subr.mxu0 0.0
      %446 = vmatpush1.msra.mxu0 0.0
      %447 = vmatprep.subr.mxu0 0.0
      %448 = vmatpush1.msra.mxu0 0.0
      %449 = vmatprep.subr.mxu0 0.0
      %450 = vmatpush1.msra.mxu0 0.0
      %451 = vmatprep.subr.mxu0 0.0
      %452 = vmatpush1.msra.mxu0 0.0
      %453 = vmatprep.subr.mxu0 0.0
      %454 = vmatpush1.msra.mxu0 0.0
      %455 = vmatprep.subr.mxu0 0.0
      %456 = vmatpush1.msra.mxu0 0.0
      %457 = vmatprep.subr.mxu0 0.0
      %458 = vmatpush1.msra.mxu0 %v422
      %459 = vmatprep.subr.mxu0 0.0
      %460 = vmatpush1.msra.mxu0 %v421
      %461 = vmatprep.subr.mxu0 0.0
      %462 = vmatpush1.msra.mxu0 %v420
      %463 = vmatprep.subr.mxu0 0.0
      %464 = vmatpush1.msra.mxu0 %v419
      %465 = vmatprep.subr.mxu0 0.0
      %466 = vmatpush2.msra.mxu0 0.0
      %467 = vmatprep.subr.mxu0 0.0
      %468 = vmatpush2.msra.mxu0 0.0
      %469 = vmatprep.subr.mxu0 0.0
      %470 = vmatpush2.msra.mxu0 0.0
      %471 = vmatprep.subr.mxu0 0.0
      %472 = vmatpush2.msra.mxu0 0.0
      %473 = vmatprep.subr.mxu0 0.0
      %474 = vmatpush2.msra.mxu0 0.0
      %475 = vmatprep.subr.mxu0 0.0
      %476 = vmatpush2.msra.mxu0 0.0
      %477 = vmatprep.subr.mxu0 0.0
      %478 = vmatpush2.msra.mxu0 0.0
      %479 = vmatprep.subr.mxu0 0.0
      %480 = vmatpush2.msra.mxu0 0.0
      %481 = vmatprep.subr.mxu0 0.0
      %482 = vmatpush2.msra.mxu0 0.0
      %483 = vmatprep.subr.mxu0 0.0
      %484 = vmatpush2.msra.mxu0 0.0
      %485 = vmatprep.subr.mxu0 0.0
      %486 = vmatpush2.msra.mxu0 0.0
      %487 = vmatprep.subr.mxu0 0.0
      %488 = vmatpush2.msra.mxu0 0.0
      %489 = vmatprep.subr.mxu0 0.0
      %490 = vmatpush2.msra.mxu0 0.0
      %491 = vmatprep.subr.mxu0 0.0
      %492 = vmatpush2.msra.mxu0 0.0
      %493 = vmatprep.subr.mxu0 0.0
      %494 = vmatpush2.msra.mxu0 0.0
      %495 = vmatprep.subr.mxu0 0.0
      %496 = vmatpush2.msra.mxu0 0.0
      %497 = vmatprep.mubr.f32.mxu0 0.0
      %498 = vmatmul.mubr.f32.gmra.mxu0 %v431
      %v499 = vpop.f32.mrf.mxu0
      %v500 = vadd.f32 %v428, %v499
      %v501 = vpop.f32.mrf.mxu0
      %502 = vdwg.mxu0
      %v504 = vsel %vm337, %v411, 0
      %v507 = vsel %vm337, %v416, 0
      %v510 = vsel %vm337, %v500, 0
      %512 = vmatprep.subr.mxu0 0.0
      %513 = vmatpush1.xpose.msra.mxu0 0.0
      %514 = vmatprep.subr.mxu0 0.0
      %515 = vmatpush1.xpose.msra.mxu0 0.0
      %516 = vmatprep.subr.mxu0 0.0
      %517 = vmatpush1.xpose.msra.mxu0 0.0
      %518 = vmatprep.subr.mxu0 0.0
      %519 = vmatpush1.xpose.msra.mxu0 0.0
      %520 = vmatprep.subr.mxu0 0.0
      %521 = vmatpush1.xpose.msra.mxu0 0.0
      %522 = vmatprep.subr.mxu0 0.0
      %523 = vmatpush1.xpose.msra.mxu0 0.0
      %524 = vmatprep.subr.mxu0 0.0
      %525 = vmatpush1.xpose.msra.mxu0 0.0
      %526 = vmatprep.subr.mxu0 0.0
      %527 = vmatpush1.xpose.msra.mxu0 0.0
      %528 = vmatprep.subr.mxu0 0.0
      %529 = vmatpush1.xpose.msra.mxu0 0.0
      %530 = vmatprep.subr.mxu0 0.0
      %531 = vmatpush1.xpose.msra.mxu0 0.0
      %532 = vmatprep.subr.mxu0 0.0
      %533 = vmatpush1.xpose.msra.mxu0 0.0
      %534 = vmatprep.subr.mxu0 0.0
      %535 = vmatpush1.xpose.msra.mxu0 0.0
      %536 = vmatprep.subr.mxu0 0.0
      %537 = vmatpush1.xpose.msra.mxu0 0.0
      %538 = vmatprep.subr.mxu0 0.0
      %539 = vmatpush1.xpose.msra.mxu0 0.0
      %540 = vmatprep.subr.mxu0 0.0
      %541 = vmatpush1.xpose.msra.mxu0 0.0
      %542 = vmatprep.subr.mxu0 0.0
      %543 = vmatpush1.xpose.msra.mxu0 %v510
      %544 = vmatprep.subr.mxu0 0.0
      %545 = vmatpush2.xpose.msra.mxu0 0.0
      %546 = vmatprep.subr.mxu0 0.0
      %547 = vmatpush2.xpose.msra.mxu0 0.0
      %548 = vmatprep.subr.mxu0 0.0
      %549 = vmatpush2.xpose.msra.mxu0 0.0
      %550 = vmatprep.subr.mxu0 0.0
      %551 = vmatpush2.xpose.msra.mxu0 0.0
      %552 = vmatprep.subr.mxu0 0.0
      %553 = vmatpush2.xpose.msra.mxu0 0.0
      %554 = vmatprep.subr.mxu0 0.0
      %555 = vmatpush2.xpose.msra.mxu0 0.0
      %556 = vmatprep.subr.mxu0 0.0
      %557 = vmatpush2.xpose.msra.mxu0 0.0
      %558 = vmatprep.subr.mxu0 0.0
      %559 = vmatpush2.xpose.msra.mxu0 0.0
      %560 = vmatprep.subr.mxu0 0.0
      %561 = vmatpush2.xpose.msra.mxu0 0.0
      %562 = vmatprep.subr.mxu0 0.0
      %563 = vmatpush2.xpose.msra.mxu0 0.0
      %564 = vmatprep.subr.mxu0 0.0
      %565 = vmatpush2.xpose.msra.mxu0 0.0
      %566 = vmatprep.subr.mxu0 0.0
      %567 = vmatpush2.xpose.msra.mxu0 0.0
      %568 = vmatprep.subr.mxu0 0.0
      %569 = vmatpush2.xpose.msra.mxu0 0.0
      %570 = vmatprep.subr.mxu0 0.0
      %571 = vmatpush2.xpose.msra.mxu0 0.0
      %572 = vmatprep.subr.mxu0 0.0
      %573 = vmatpush2.xpose.msra.mxu0 0.0
      %574 = vmatprep.subr.mxu0 0.0
      %575 = vmatpush2.xpose.msra.mxu0 0.0
      %576 = vmatprep.mubr.f32.mxu0 0.0
      %577 = vmatmul.mubr.f32.gmra.mxu0 %v504
      %v578 = vpop.f32.mrf.mxu0
      %v579 = vadd.f32 0.0, %v578
      %v580 = vpop.f32.mrf.mxu0
      %581 = vmatprep.mubr.f32.mxu0 0.0
      %582 = vmatmul.mubr.f32.gmra.mxu0 %v507
      %v583 = vpop.f32.mrf.mxu0
      %v584 = vadd.f32 0.0, %v583
      %v585 = vpop.f32.mrf.mxu0
      %586 = vdwg.mxu0
      %v587 = vmul.f32 %v579, 0.17677669
      %v588 = vmul.f32 %v584, 0.17677669
      %vm589 = vcmask 64512
      %v590 = vsel %vm589, %v587, -inf
      %591 = vmax.xlane.f32.xlu0 %v590
      %v592 = vpop.xlane.xlu0 %591
      %vm593 = vcmask 60416
      %v594 = vsel %vm593, %v588, -inf
      %595 = vmax.xlane.f32.xlu0 %v594
      %v596 = vpop.xlane.xlu0 %595
      %v597 = vsub.f32 %v587, %v592
      %v598 = vsub.f32 %v588, %v596
      %v599 = vmul.f32 %v597, 1.442695
      %v600 = vpow.pop %v599
      %v601 = vmul.f32 %v598, 1.442695
      %v602 = vpow.pop %v601
      %v603 = vsel %vm589, %v600, 0.0
      %604 = vadd.xlane.f32.xlu0 %v603
      %v605 = vpop.xlane.xlu0 %604
      %v606 = vsel %vm593, %v602, 0.0
      %607 = vadd.xlane.f32.xlu0 %v606
      %v608 = vpop.xlane.xlu0 %607
      %v609 = vrcp.pop %v605
      %v610 = vrcp.pop %v608
      %v611 = vmul.f32 %v600, %v609
      %v612 = vmul.f32 %v602, %v610
      %613 = vrot.lane.b32.xlu0 %v500, 96
      %v614 = vpop.permute.xlu0 %613
      %v617 = vsel %vm589, %v611, 0
      %v620 = vsel %vm589, %v612, 0
      %622 = vmatprep.subr.mxu0 0.0
      %623 = vmatpush1.msra.mxu0 0.0
      %624 = vmatprep.subr.mxu0 0.0
      %625 = vmatpush1.msra.mxu0 0.0
      %626 = vmatprep.subr.mxu0 0.0
      %627 = vmatpush1.msra.mxu0 0.0
      %628 = vmatprep.subr.mxu0 0.0
      %629 = vmatpush1.msra.mxu0 0.0
      %630 = vmatprep.subr.mxu0 0.0
      %631 = vmatpush1.msra.mxu0 0.0
      %632 = vmatprep.subr.mxu0 0.0
      %633 = vmatpush1.msra.mxu0 0.0
      %634 = vmatprep.subr.mxu0 0.0
      %635 = vmatpush1.msra.mxu0 0.0
      %636 = vmatprep.subr.mxu0 0.0
      %637 = vmatpush1.msra.mxu0 0.0
      %638 = vmatprep.subr.mxu0 0.0
      %639 = vmatpush1.msra.mxu0 0.0
      %640 = vmatprep.subr.mxu0 0.0
      %641 = vmatpush1.msra.mxu0 0.0
      %642 = vmatprep.subr.mxu0 0.0
      %643 = vmatpush1.msra.mxu0 0.0
      %644 = vmatprep.subr.mxu0 0.0
      %645 = vmatpush1.msra.mxu0 0.0
      %646 = vmatprep.subr.mxu0 0.0
      %647 = vmatpush1.msra.mxu0 0.0
      %648 = vmatprep.subr.mxu0 0.0
      %649 = vmatpush1.msra.mxu0 0.0
      %650 = vmatprep.subr.mxu0 0.0
      %651 = vmatpush1.msra.mxu0 0.0
      %652 = vmatprep.subr.mxu0 0.0
      %653 = vmatpush1.msra.mxu0 %v614
      %654 = vmatprep.subr.mxu0 0.0
      %655 = vmatpush2.msra.mxu0 0.0
      %656 = vmatprep.subr.mxu0 0.0
      %657 = vmatpush2.msra.mxu0 0.0
      %658 = vmatprep.subr.mxu0 0.0
      %659 = vmatpush2.msra.mxu0 0.0
      %660 = vmatprep.subr.mxu0 0.0
      %661 = vmatpush2.msra.mxu0 0.0
      %662 = vmatprep.subr.mxu0 0.0
      %663 = vmatpush2.msra.mxu0 0.0
      %664 = vmatprep.subr.mxu0 0.0
      %665 = vmatpush2.msra.mxu0 0.0
      %666 = vmatprep.subr.mxu0 0.0
      %667 = vmatpush2.msra.mxu0 0.0
      %668 = vmatprep.subr.mxu0 0.0
      %669 = vmatpush2.msra.mxu0 0.0
      %670 = vmatprep.subr.mxu0 0.0
      %671 = vmatpush2.msra.mxu0 0.0
      %672 = vmatprep.subr.mxu0 0.0
      %673 = vmatpush2.msra.mxu0 0.0
      %674 = vmatprep.subr.mxu0 0.0
      %675 = vmatpush2.msra.mxu0 0.0
      %676 = vmatprep.subr.mxu0 0.0
      %677 = vmatpush2.msra.mxu0 0.0
      %678 = vmatprep.subr.mxu0 0.0
      %679 = vmatpush2.msra.mxu0 0.0
      %680 = vmatprep.subr.mxu0 0.0
      %681 = vmatpush2.msra.mxu0 0.0
      %682 = vmatprep.subr.mxu0 0.0
      %683 = vmatpush2.msra.mxu0 0.0
      %684 = vmatprep.subr.mxu0 0.0
      %685 = vmatpush2.msra.mxu0 0.0
      %686 = vmatprep.mubr.f32.mxu0 0.0
      %687 = vmatmul.mubr.f32.gmra.mxu0 %v617
      %v688 = vpop.f32.mrf.mxu0
      %v689 = vadd.f32 0.0, %v688
      %v690 = vpop.f32.mrf.mxu0
      %691 = vmatprep.mubr.f32.mxu0 0.0
      %692 = vmatmul.mubr.f32.gmra.mxu0 %v620
      %v693 = vpop.f32.mrf.mxu0
      %v694 = vadd.f32 0.0, %v693
      %v695 = vpop.f32.mrf.mxu0
      %696 = vdwg.mxu0
      %v697 = vld [vmem:[%s6] sm:$0xff]
      %v698 = vld [vmem:[%s6 + $0x8] sm:$0xff]
      %v699 = vld [vmem:[%s6 + $0x10] sm:$0xff]
      %v700 = vld [vmem:[%s6 + $0x18] sm:$0xff]
      %v701 = vld [vmem:[%s7] sm:$0x1]
      %v703 = vlaneseq
      %v704 = vshrl.u32 %v703, 7
      %v705 = vsub.s32 0, %v704
      %v706 = vrot.slane %v701, %v705
      %v709 = vsel %vm337, %v689, 0
      %v712 = vsel %vm337, %v694, 0
      %714 = vmatprep.subr.mxu0 0.0
      %715 = vmatpush1.msra.mxu0 0.0
      %716 = vmatprep.subr.mxu0 0.0
      %717 = vmatpush1.msra.mxu0 0.0
      %718 = vmatprep.subr.mxu0 0.0
      %719 = vmatpush1.msra.mxu0 0.0
      %720 = vmatprep.subr.mxu0 0.0
      %721 = vmatpush1.msra.mxu0 0.0
      %722 = vmatprep.subr.mxu0 0.0
      %723 = vmatpush1.msra.mxu0 0.0
      %724 = vmatprep.subr.mxu0 0.0
      %725 = vmatpush1.msra.mxu0 0.0
      %726 = vmatprep.subr.mxu0 0.0
      %727 = vmatpush1.msra.mxu0 0.0
      %728 = vmatprep.subr.mxu0 0.0
      %729 = vmatpush1.msra.mxu0 0.0
      %730 = vmatprep.subr.mxu0 0.0
      %731 = vmatpush1.msra.mxu0 0.0
      %732 = vmatprep.subr.mxu0 0.0
      %733 = vmatpush1.msra.mxu0 0.0
      %734 = vmatprep.subr.mxu0 0.0
      %735 = vmatpush1.msra.mxu0 0.0
      %736 = vmatprep.subr.mxu0 0.0
      %737 = vmatpush1.msra.mxu0 0.0
      %738 = vmatprep.subr.mxu0 0.0
      %739 = vmatpush1.msra.mxu0 %v700
      %740 = vmatprep.subr.mxu0 0.0
      %741 = vmatpush1.msra.mxu0 %v699
      %742 = vmatprep.subr.mxu0 0.0
      %743 = vmatpush1.msra.mxu0 %v698
      %744 = vmatprep.subr.mxu0 0.0
      %745 = vmatpush1.msra.mxu0 %v697
      %746 = vmatprep.subr.mxu0 0.0
      %747 = vmatpush2.msra.mxu0 0.0
      %748 = vmatprep.subr.mxu0 0.0
      %749 = vmatpush2.msra.mxu0 0.0
      %750 = vmatprep.subr.mxu0 0.0
      %751 = vmatpush2.msra.mxu0 0.0
      %752 = vmatprep.subr.mxu0 0.0
      %753 = vmatpush2.msra.mxu0 0.0
      %754 = vmatprep.subr.mxu0 0.0
      %755 = vmatpush2.msra.mxu0 0.0
      %756 = vmatprep.subr.mxu0 0.0
      %757 = vmatpush2.msra.mxu0 0.0
      %758 = vmatprep.subr.mxu0 0.0
      %759 = vmatpush2.msra.mxu0 0.0
      %760 = vmatprep.subr.mxu0 0.0
      %761 = vmatpush2.msra.mxu0 0.0
      %762 = vmatprep.subr.mxu0 0.0
      %763 = vmatpush2.msra.mxu0 0.0
      %764 = vmatprep.subr.mxu0 0.0
      %765 = vmatpush2.msra.mxu0 0.0
      %766 = vmatprep.subr.mxu0 0.0
      %767 = vmatpush2.msra.mxu0 0.0
      %768 = vmatprep.subr.mxu0 0.0
      %769 = vmatpush2.msra.mxu0 0.0
      %770 = vmatprep.subr.mxu0 0.0
      %771 = vmatpush2.msra.mxu0 0.0
      %772 = vmatprep.subr.mxu0 0.0
      %773 = vmatpush2.msra.mxu0 0.0
      %774 = vmatprep.subr.mxu0 0.0
      %775 = vmatpush2.msra.mxu0 0.0
      %776 = vmatprep.subr.mxu0 0.0
      %777 = vmatpush2.msra.mxu0 0.0
      %778 = vmatprep.mubr.f32.mxu0 0.0
      %779 = vmatmul.mubr.f32.gmra.mxu0 %v709
      %v780 = vpop.f32.mrf.mxu0
      %v781 = vadd.f32 %v706, %v780
      %v782 = vpop.f32.mrf.mxu0
      %783 = vmatprep.mubr.f32.mxu0 0.0
      %784 = vmatmul.mubr.f32.gmra.mxu0 %v712
      %v785 = vpop.f32.mrf.mxu0
      %v786 = vadd.f32 %v706, %v785
      %v787 = vpop.f32.mrf.mxu0
      %788 = vdwg.mxu0
      %v789 = vadd.f32 %v323, %v781
      %v790 = vadd.f32 %v324, %v786
      %791 = vst.msk [vmem:[%s322] sm:$0xff] %vm337, %v789
      %vm792 = vcmask 257024
      %793 = vst.msk [vmem:[%s322 + $0x8] sm:$0xf] %vm792, %v790
      %p794 = scmp.lt.s32.totalorder %s19, 1
      %s795 = scalar_select %p794, %s19, 1
      %s796 = smul.addr %s795, 2
      %s797 = smul.addr %s796, 8
      %s798 = scalar_lea.vmem %s8, %s797
      // Predicated region
      $region53: #{vatep_forward.12} parent=51 // pred_check
        %p799 = pneg %p215
      $region54: #{vatep_forward.12} parent=51 // pred_check_branch
        %801 = sbr.rel (%p799) target = $region56
      $region55: #{vatep_forward.12} parent=51 // pred_region
        _
      $region56: #{vatep_forward.12} parent=51 // pred_fallthru
        _
    $region52: #{vatep_forward.12} parent=5 // pred_fallthru
      _
    %p802 = scmp.le.s32.totalorder 2, %s14
    // Predicated region
    $region57: #{vatep_forward.12} parent=5 // pred_check
      %p803 = pneg %p802
    $region58: #{vatep_forward.12} parent=5 // pred_check_branch
      %805 = sbr.rel (%p803) target = $region60
    $region59: #{vatep_forward.12} parent=5 // pred_region
      %s806 = ssub.s32 %s14, 2
      // Predicated region
      $region61: #{vatep_forward.12} parent=59 // pred_check
        %p807 = pneg %p221
      $region62: #{vatep_forward.12} parent=59 // pred_check_branch
        %809 = sbr.rel (%p807) target = $region64
      $region63: #{vatep_forward.12} parent=59 // pred_region
        %p810 = scmp.lt.s32.totalorder %s20, 1
        %s811 = scalar_select %p810, %s20, 1
        %s812 = smul.addr %s811, 2
        %s813 = smul.addr %s812, 8
        %s814 = scalar_lea.vmem %s8, %s813
      $region64: #{vatep_forward.12} parent=59 // pred_fallthru
        _
    $region60: #{vatep_forward.12} parent=5 // pred_fallthru
      _
  $region6: #{vatep_forward.12} parent=0 // loop_footer
    %s18 = sadd.s32 1, %s14
  $region7: #{vatep_forward.12} parent=0 // loop_footer_branch
    %13 = sbr.rel target = $region3
  $region8: #{vatep_forward.12} parent=0 // loop_exit
    _

// kernel: vatep_forward.13
$region0: #{vatep_forward.13}
  #allocation0 [shape = 'u32[]', space=smem, size = 0x4, offset = 0x4, fixed_abs, tag = 'smem constant byte address 0x4 - core index']
  #allocation1 [shape = 'u32[144,128]{1,0:T(1,128)}', space=vmem, size = 0x12000, scoped, tag = 'internal scratch']
  %s0 = inlined_call_operand.vmem [shape: f32[2,384], index: 0, kind: input, shape index: {}]
  %s1 = inlined_call_operand.vmem [shape: f32[384,96], index: 1, kind: input, shape index: {}]
  %s2 = inlined_call_operand.vmem [shape: f32[1,96], index: 2, kind: input, shape index: {}]
  %s3 = inlined_call_operand.vmem [shape: f32[32,16], index: 3, kind: input, shape index: {}]
  %s4 = inlined_call_operand.vmem [shape: f32[1,16], index: 4, kind: input, shape index: {}]
  %s5 = inlined_call_operand.vmem [shape: f32[16,2], index: 5, kind: input, shape index: {}]
  %s6 = inlined_call_operand.vmem [shape: f32[1,2], index: 6, kind: input, shape index: {}]
  %s7 = inlined_call_operand.vmem [shape: f32[32,16], index: 7, kind: input, shape index: {}]
  %s8 = inlined_call_operand.vmem [shape: f32[1,16], index: 8, kind: input, shape index: {}]
  %s9 = inlined_call_operand.vmem [shape: f32[16,3], index: 9, kind: input, shape index: {}]
  %s10 = inlined_call_operand.vmem [shape: f32[1,3], index: 10, kind: input, shape index: {}]
  %s11 = inlined_call_operand.vmem [shape: f32[32,16], index: 11, kind: input, shape index: {}]
  %s12 = inlined_call_operand.vmem [shape: f32[1,16], index: 12, kind: input, shape index: {}]
  %s13 = inlined_call_operand.vmem [shape: f32[16,3], index: 13, kind: input, shape index: {}]
  %s14 = inlined_call_operand.vmem [shape: f32[1,3], index: 14, kind: input, shape index: {}]
  %s15 = inlined_call_operand.hbm [shape: f32[2,2], index: 15, kind: output, shape index: {0}]
  %s16 = inlined_call_operand.hbm [shape: f32[2,3], index: 16, kind: output, shape index: {1}]
  %s17 = inlined_call_operand.hbm [shape: f32[2,3], index: 17, kind: output, shape index: {2}]
  %18 = xla_tuple %s15, %s16, %s17
  %s19 = sld [smem:[#allocation0]]
  $region86: #{vatep_forward.13} parent=0
    _
  %s21 = ssub.s32 1, %s19
  %s22 = scalar_select 0, %s21, %s19
  $region1: #{vatep_forward.13} parent=0
    #allocation2 [shape = 'u8[1024]{0}', space=vmem, size = 0x400, scoped, tag = 'output window, operand 0, single buffered']
    #allocation3 [shape = 's32[1]{0}', space=sflag, size = 0x4, scoped, tag = 'scoped memory for vatep_forward.13']
    #allocation4 [shape = 'u8[1024]{0}', space=vmem, size = 0x400, scoped, tag = 'output window, operand 1, single buffered']
    #allocation5 [shape = 's32[1]{0}', space=sflag, size = 0x4, scoped, tag = 'scoped memory for vatep_forward.13']
    #allocation6 [shape = 'u8[1024]{0}', space=vmem, size = 0x400, scoped, tag = 'output window, operand 2, single buffered']
    %23 = vsyncpa [#allocation3], 0
    %24 = vsyncpa [#allocation5], 0
    // Predicated region
    $region2: #{vatep_forward.13} parent=1 // pred_check
      _
    $region3: #{vatep_forward.13} parent=1 // pred_check_branch
      %26 = sbr.rel (0) target = $region5
    $region4: #{vatep_forward.13} parent=1 // pred_region
      _
    $region5: #{vatep_forward.13} parent=1 // pred_fallthru
      _
    // Predicated region
    $region6: #{vatep_forward.13} parent=1 // pred_check
      _
    $region7: #{vatep_forward.13} parent=1 // pred_check_branch
      %28 = sbr.rel (0) target = $region9
    $region8: #{vatep_forward.13} parent=1 // pred_region
      _
    $region9: #{vatep_forward.13} parent=1 // pred_fallthru
      _
    // Predicated region
    $region10: #{vatep_forward.13} parent=1 // pred_check
      _
    $region11: #{vatep_forward.13} parent=1 // pred_check_branch
      %30 = sbr.rel (0) target = $region13
    $region12: #{vatep_forward.13} parent=1 // pred_region
      _
    $region13: #{vatep_forward.13} parent=1 // pred_fallthru
      _
    // Predicated region
    $region14: #{vatep_forward.13} parent=1 // pred_check
      _
    $region15: #{vatep_forward.13} parent=1 // pred_check_branch
      %32 = sbr.rel (0) target = $region17
    $region16: #{vatep_forward.13} parent=1 // pred_region
      _
    $region17: #{vatep_forward.13} parent=1 // pred_fallthru
      _
    // Predicated region
    $region18: #{vatep_forward.13} parent=1 // pred_check
      _
    $region19: #{vatep_forward.13} parent=1 // pred_check_branch
      %34 = sbr.rel (0) target = $region21
    $region20: #{vatep_forward.13} parent=1 // pred_region
      _
    $region21: #{vatep_forward.13} parent=1 // pred_fallthru
      _
    // Predicated region
    $region22: #{vatep_forward.13} parent=1 // pred_check
      _
    $region23: #{vatep_forward.13} parent=1 // pred_check_branch
      %36 = sbr.rel (0) target = $region25
    $region24: #{vatep_forward.13} parent=1 // pred_region
      _
    $region25: #{vatep_forward.13} parent=1 // pred_fallthru
      _
    // Predicated region
    $region26: #{vatep_forward.13} parent=1 // pred_check
      _
    $region27: #{vatep_forward.13} parent=1 // pred_check_branch
      %38 = sbr.rel (0) target = $region29
    $region28: #{vatep_forward.13} parent=1 // pred_region
      _
    $region29: #{vatep_forward.13} parent=1 // pred_fallthru
      _
    // Predicated region
    $region30: #{vatep_forward.13} parent=1 // pred_check
      _
    $region31: #{vatep_forward.13} parent=1 // pred_check_branch
      %40 = sbr.rel (0) target = $region33
    $region32: #{vatep_forward.13} parent=1 // pred_region
      _
    $region33: #{vatep_forward.13} parent=1 // pred_fallthru
      _
    // Predicated region
    $region34: #{vatep_forward.13} parent=1 // pred_check
      _
    $region35: #{vatep_forward.13} parent=1 // pred_check_branch
      %42 = sbr.rel (0) target = $region37
    $region36: #{vatep_forward.13} parent=1 // pred_region
      _
    $region37: #{vatep_forward.13} parent=1 // pred_fallthru
      _
    // Predicated region
    $region38: #{vatep_forward.13} parent=1 // pred_check
      _
    $region39: #{vatep_forward.13} parent=1 // pred_check_branch
      %44 = sbr.rel (0) target = $region41
    $region40: #{vatep_forward.13} parent=1 // pred_region
      _
    $region41: #{vatep_forward.13} parent=1 // pred_fallthru
      _
    // Predicated region
    $region42: #{vatep_forward.13} parent=1 // pred_check
      _
    $region43: #{vatep_forward.13} parent=1 // pred_check_branch
      %46 = sbr.rel (0) target = $region45
    $region44: #{vatep_forward.13} parent=1 // pred_region
      _
    $region45: #{vatep_forward.13} parent=1 // pred_fallthru
      _
    // Predicated region
    $region46: #{vatep_forward.13} parent=1 // pred_check
      _
    $region47: #{vatep_forward.13} parent=1 // pred_check_branch
      %48 = sbr.rel (0) target = $region49
    $region48: #{vatep_forward.13} parent=1 // pred_region
      _
    $region49: #{vatep_forward.13} parent=1 // pred_fallthru
      _
    // Predicated region
    $region50: #{vatep_forward.13} parent=1 // pred_check
      _
    $region51: #{vatep_forward.13} parent=1 // pred_check_branch
      %50 = sbr.rel (0) target = $region53
    $region52: #{vatep_forward.13} parent=1 // pred_region
      _
    $region53: #{vatep_forward.13} parent=1 // pred_fallthru
      _
    // Predicated region
    $region54: #{vatep_forward.13} parent=1 // pred_check
      _
    $region55: #{vatep_forward.13} parent=1 // pred_check_branch
      %52 = sbr.rel (0) target = $region57
    $region56: #{vatep_forward.13} parent=1 // pred_region
      _
    $region57: #{vatep_forward.13} parent=1 // pred_fallthru
      _
    // Predicated region
    $region58: #{vatep_forward.13} parent=1 // pred_check
      _
    $region59: #{vatep_forward.13} parent=1 // pred_check_branch
      %54 = sbr.rel (0) target = $region61
    $region60: #{vatep_forward.13} parent=1 // pred_region
      _
    $region61: #{vatep_forward.13} parent=1 // pred_fallthru
      _
    %v55 = vld [vmem:[%s0] sm:$0x3f]
    %v56 = vld [vmem:[%s1] sm:$0xff]
    %v57 = vld [vmem:[%s1 + $0x8] sm:$0xff]
    %v58 = vld [vmem:[%s1 + $0x10] sm:$0xff]
    %v59 = vld [vmem:[%s1 + $0x18] sm:$0xff]
    %v60 = vld [vmem:[%s1 + $0x20] sm:$0xff]
    %v61 = vld [vmem:[%s1 + $0x28] sm:$0xff]
    %v62 = vld [vmem:[%s1 + $0x30] sm:$0xff]
    %v63 = vld [vmem:[%s1 + $0x38] sm:$0xff]
    %v64 = vld [vmem:[%s1 + $0x40] sm:$0xff]
    %v65 = vld [vmem:[%s1 + $0x48] sm:$0xff]
    %v66 = vld [vmem:[%s1 + $0x50] sm:$0xff]
    %v67 = vld [vmem:[%s1 + $0x58] sm:$0xff]
    %v68 = vld [vmem:[%s1 + $0x60] sm:$0xff]
    %v69 = vld [vmem:[%s1 + $0x68] sm:$0xff]
    %v70 = vld [vmem:[%s1 + $0x70] sm:$0xff]
    %v71 = vld [vmem:[%s1 + $0x78] sm:$0xff]
    %v72 = vld [vmem:[%s1 + $0x80] sm:$0xff]
    %v73 = vld [vmem:[%s1 + $0x88] sm:$0xff]
    %v74 = vld [vmem:[%s1 + $0x90] sm:$0xff]
    %v75 = vld [vmem:[%s1 + $0x98] sm:$0xff]
    %v76 = vld [vmem:[%s1 + $0xa0] sm:$0xff]
    %v77 = vld [vmem:[%s1 + $0xa8] sm:$0xff]
    %v78 = vld [vmem:[%s1 + $0xb0] sm:$0xff]
    %v79 = vld [vmem:[%s1 + $0xb8] sm:$0xff]
    %v80 = vld [vmem:[%s1 + $0xc0] sm:$0xff]
    %v81 = vld [vmem:[%s1 + $0xc8] sm:$0xff]
    %v82 = vld [vmem:[%s1 + $0xd0] sm:$0xff]
    %v83 = vld [vmem:[%s1 + $0xd8] sm:$0xff]
    %v84 = vld [vmem:[%s1 + $0xe0] sm:$0xff]
    %v85 = vld [vmem:[%s1 + $0xe8] sm:$0xff]
    %v86 = vld [vmem:[%s1 + $0xf0] sm:$0xff]
    %v87 = vld [vmem:[%s1 + $0xf8] sm:$0xff]
    %v88 = vld [vmem:[%s1 + $0x100] sm:$0xff]
    %v89 = vld [vmem:[%s1 + $0x108] sm:$0xff]
    %v90 = vld [vmem:[%s1 + $0x110] sm:$0xff]
    %v91 = vld [vmem:[%s1 + $0x118] sm:$0xff]
    %v92 = vld [vmem:[%s1 + $0x120] sm:$0xff]
    %v93 = vld [vmem:[%s1 + $0x128] sm:$0xff]
    %v94 = vld [vmem:[%s1 + $0x130] sm:$0xff]
    %v95 = vld [vmem:[%s1 + $0x138] sm:$0xff]
    %v96 = vld [vmem:[%s1 + $0x140] sm:$0xff]
    %v97 = vld [vmem:[%s1 + $0x148] sm:$0xff]
    %v98 = vld [vmem:[%s1 + $0x150] sm:$0xff]
    %v99 = vld [vmem:[%s1 + $0x158] sm:$0xff]
    %v100 = vld [vmem:[%s1 + $0x160] sm:$0xff]
    %v101 = vld [vmem:[%s1 + $0x168] sm:$0xff]
    %v102 = vld [vmem:[%s1 + $0x170] sm:$0xff]
    %v103 = vld [vmem:[%s1 + $0x178] sm:$0xff]
    %v104 = vld [vmem:[%s2] sm:$0x1]
    %v106 = vlaneseq
    %v107 = vshrl.u32 %v106, 7
    %v108 = vsub.s32 0, %v107
    %v109 = vrot.slane %v104, %v108
    %v112 = vcombine.high %v55, %v55
    %v114 = vunpack.c.l.s4 1983009808
    %v115 = vunpack.c.0.s8 %v114
    %v116 = vlaneseq
    %v117 = vshrl.u32 %v116, 7
    %v118 = vsub.s32 %v115, %v117
    %v119 = vrot.slane %v55, %v118
    %v121 = vunpack.c.l.s4 1983009808
    %v122 = vunpack.c.0.s8 %v121
    %v123 = vlaneseq
    %v124 = vshrl.u32 %v123, 7
    %v125 = vsub.s32 %v122, %v124
    %v126 = vrot.slane %v112, %v125
    %v127 = vcombine.high %v119, %v119
    %131 = vmatprep.subr.mxu0 0.0
    %132 = vmatpush1.msra.mxu0 %v71
    %133 = vmatprep.subr.mxu0 0.0
    %134 = vmatpush1.msra.mxu0 %v70
    %135 = vmatprep.subr.mxu0 0.0
    %136 = vmatpush1.msra.mxu0 %v69
    %137 = vmatprep.subr.mxu0 0.0
    %138 = vmatpush1.msra.mxu0 %v68
    %139 = vmatprep.subr.mxu0 0.0
    %140 = vmatpush1.msra.mxu0 %v67
    %141 = vmatprep.subr.mxu0 0.0
    %142 = vmatpush1.msra.mxu0 %v66
    %143 = vmatprep.subr.mxu0 0.0
    %144 = vmatpush1.msra.mxu0 %v65
    %145 = vmatprep.subr.mxu0 0.0
    %146 = vmatpush1.msra.mxu0 %v64
    %147 = vmatprep.subr.mxu0 0.0
    %148 = vmatpush1.msra.mxu0 %v63
    %149 = vmatprep.subr.mxu0 0.0
    %150 = vmatpush1.msra.mxu0 %v62
    %151 = vmatprep.subr.mxu0 0.0
    %152 = vmatpush1.msra.mxu0 %v61
    %153 = vmatprep.subr.mxu0 0.0
    %154 = vmatpush1.msra.mxu0 %v60
    %155 = vmatprep.subr.mxu0 0.0
    %156 = vmatpush1.msra.mxu0 %v59
    %157 = vmatprep.subr.mxu0 0.0
    %158 = vmatpush1.msra.mxu0 %v58
    %159 = vmatprep.subr.mxu0 0.0
    %160 = vmatpush1.msra.mxu0 %v57
    %161 = vmatprep.subr.mxu0 0.0
    %162 = vmatpush1.msra.mxu0 %v56
    %163 = vmatprep.subr.mxu0 0.0
    %164 = vmatpush2.msra.mxu0 %v87
    %165 = vmatprep.subr.mxu0 0.0
    %166 = vmatpush2.msra.mxu0 %v86
    %167 = vmatprep.subr.mxu0 0.0
    %168 = vmatpush2.msra.mxu0 %v85
    %169 = vmatprep.subr.mxu0 0.0
    %170 = vmatpush2.msra.mxu0 %v84
    %171 = vmatprep.subr.mxu0 0.0
    %172 = vmatpush2.msra.mxu0 %v83
    %173 = vmatprep.subr.mxu0 0.0
    %174 = vmatpush2.msra.mxu0 %v82
    %175 = vmatprep.subr.mxu0 0.0
    %176 = vmatpush2.msra.mxu0 %v81
    %177 = vmatprep.subr.mxu0 0.0
    %178 = vmatpush2.msra.mxu0 %v80
    %179 = vmatprep.subr.mxu0 0.0
    %180 = vmatpush2.msra.mxu0 %v79
    %181 = vmatprep.subr.mxu0 0.0
    %182 = vmatpush2.msra.mxu0 %v78
    %183 = vmatprep.subr.mxu0 0.0
    %184 = vmatpush2.msra.mxu0 %v77
    %185 = vmatprep.subr.mxu0 0.0
    %186 = vmatpush2.msra.mxu0 %v76
    %187 = vmatprep.subr.mxu0 0.0
    %188 = vmatpush2.msra.mxu0 %v75
    %189 = vmatprep.subr.mxu0 0.0
    %190 = vmatpush2.msra.mxu0 %v74
    %191 = vmatprep.subr.mxu0 0.0
    %192 = vmatpush2.msra.mxu0 %v73
    %193 = vmatprep.subr.mxu0 0.0
    %194 = vmatpush2.msra.mxu0 %v72
    %195 = vmatprep.mubr.f32.mxu0 %v127
    %196 = vmatmul.mubr.f32.gmra.mxu0 %v119
    %v197 = vpop.f32.mrf.mxu0
    %v198 = vadd.f32 %v109, %v197
    %v199 = vpop.f32.mrf.mxu0
    %200 = vdwg.mxu0
    %201 = vmatprep.subr.mxu0 0.0
    %202 = vmatpush1.msra.mxu0 %v103
    %203 = vmatprep.subr.mxu0 0.0
    %204 = vmatpush1.msra.mxu0 %v102
    %205 = vmatprep.subr.mxu0 0.0
    %206 = vmatpush1.msra.mxu0 %v101
    %207 = vmatprep.subr.mxu0 0.0
    %208 = vmatpush1.msra.mxu0 %v100
    %209 = vmatprep.subr.mxu0 0.0
    %210 = vmatpush1.msra.mxu0 %v99
    %211 = vmatprep.subr.mxu0 0.0
    %212 = vmatpush1.msra.mxu0 %v98
    %213 = vmatprep.subr.mxu0 0.0
    %214 = vmatpush1.msra.mxu0 %v97
    %215 = vmatprep.subr.mxu0 0.0
    %216 = vmatpush1.msra.mxu0 %v96
    %217 = vmatprep.subr.mxu0 0.0
    %218 = vmatpush1.msra.mxu0 %v95
    %219 = vmatprep.subr.mxu0 0.0
    %220 = vmatpush1.msra.mxu0 %v94
    %221 = vmatprep.subr.mxu0 0.0
    %222 = vmatpush1.msra.mxu0 %v93
    %223 = vmatprep.subr.mxu0 0.0
    %224 = vmatpush1.msra.mxu0 %v92
    %225 = vmatprep.subr.mxu0 0.0
    %226 = vmatpush1.msra.mxu0 %v91
    %227 = vmatprep.subr.mxu0 0.0
    %228 = vmatpush1.msra.mxu0 %v90
    %229 = vmatprep.subr.mxu0 0.0
    %230 = vmatpush1.msra.mxu0 %v89
    %231 = vmatprep.subr.mxu0 0.0
    %232 = vmatpush1.msra.mxu0 %v88
    %233 = vmatprep.subr.mxu0 0.0
    %234 = vmatpush2.msra.mxu0 0.0
    %235 = vmatprep.subr.mxu0 0.0
    %236 = vmatpush2.msra.mxu0 0.0
    %237 = vmatprep.subr.mxu0 0.0
    %238 = vmatpush2.msra.mxu0 0.0
    %239 = vmatprep.subr.mxu0 0.0
    %240 = vmatpush2.msra.mxu0 0.0
    %241 = vmatprep.subr.mxu0 0.0
    %242 = vmatpush2.msra.mxu0 0.0
    %243 = vmatprep.subr.mxu0 0.0
    %244 = vmatpush2.msra.mxu0 0.0
    %245 = vmatprep.subr.mxu0 0.0
    %246 = vmatpush2.msra.mxu0 0.0
    %247 = vmatprep.subr.mxu0 0.0
    %248 = vmatpush2.msra.mxu0 0.0
    %249 = vmatprep.subr.mxu0 0.0
    %250 = vmatpush2.msra.mxu0 0.0
    %251 = vmatprep.subr.mxu0 0.0
    %252 = vmatpush2.msra.mxu0 0.0
    %253 = vmatprep.subr.mxu0 0.0
    %254 = vmatpush2.msra.mxu0 0.0
    %255 = vmatprep.subr.mxu0 0.0
    %256 = vmatpush2.msra.mxu0 0.0
    %257 = vmatprep.subr.mxu0 0.0
    %258 = vmatpush2.msra.mxu0 0.0
    %259 = vmatprep.subr.mxu0 0.0
    %260 = vmatpush2.msra.mxu0 0.0
    %261 = vmatprep.subr.mxu0 0.0
    %262 = vmatpush2.msra.mxu0 0.0
    %263 = vmatprep.subr.mxu0 0.0
    %264 = vmatpush2.msra.mxu0 0.0
    %265 = vmatprep.mubr.f32.mxu0 0.0
    %266 = vmatmul.mubr.f32.gmra.mxu0 %v126
    %v267 = vpop.f32.mrf.mxu0
    %v268 = vadd.f32 %v198, %v267
    %v269 = vpop.f32.mrf.mxu0
    %270 = vdwg.mxu0
    %v271 = vmax.f32 %v268, 0.0
    %v272 = vld [vmem:[%s3] sm:$0xff]
    %v273 = vld [vmem:[%s3 + $0x8] sm:$0xff]
    %v274 = vld [vmem:[%s3 + $0x10] sm:$0xff]
    %v275 = vld [vmem:[%s3 + $0x18] sm:$0xff]
    %v276 = vld [vmem:[%s4] sm:$0x1]
    %v277 = vld [vmem:[%s5] sm:$0xff]
    %v278 = vld [vmem:[%s5 + $0x8] sm:$0xff]
    %v279 = vld [vmem:[%s6] sm:$0x1]
    %v281 = vlaneseq
    %v282 = vshrl.u32 %v281, 7
    %v283 = vsub.s32 0, %v282
    %v284 = vrot.slane %v276, %v283
    %vm286 = vcmask 261120
    %v288 = vsel %vm286, %v271, 0
    %290 = vmatprep.subr.mxu0 0.0
    %291 = vmatpush1.msra.mxu0 0.0
    %292 = vmatprep.subr.mxu0 0.0
    %293 = vmatpush1.msra.mxu0 0.0
    %294 = vmatprep.subr.mxu0 0.0
    %295 = vmatpush1.msra.mxu0 0.0
    %296 = vmatprep.subr.mxu0 0.0
    %297 = vmatpush1.msra.mxu0 0.0
    %298 = vmatprep.subr.mxu0 0.0
    %299 = vmatpush1.msra.mxu0 0.0
    %300 = vmatprep.subr.mxu0 0.0
    %301 = vmatpush1.msra.mxu0 0.0
    %302 = vmatprep.subr.mxu0 0.0
    %303 = vmatpush1.msra.mxu0 0.0
    %304 = vmatprep.subr.mxu0 0.0
    %305 = vmatpush1.msra.mxu0 0.0
    %306 = vmatprep.subr.mxu0 0.0
    %307 = vmatpush1.msra.mxu0 0.0
    %308 = vmatprep.subr.mxu0 0.0
    %309 = vmatpush1.msra.mxu0 0.0
    %310 = vmatprep.subr.mxu0 0.0
    %311 = vmatpush1.msra.mxu0 0.0
    %312 = vmatprep.subr.mxu0 0.0
    %313 = vmatpush1.msra.mxu0 0.0
    %314 = vmatprep.subr.mxu0 0.0
    %315 = vmatpush1.msra.mxu0 %v275
    %316 = vmatprep.subr.mxu0 0.0
    %317 = vmatpush1.msra.mxu0 %v274
    %318 = vmatprep.subr.mxu0 0.0
    %319 = vmatpush1.msra.mxu0 %v273
    %320 = vmatprep.subr.mxu0 0.0
    %321 = vmatpush1.msra.mxu0 %v272
    %322 = vmatprep.subr.mxu0 0.0
    %323 = vmatpush2.msra.mxu0 0.0
    %324 = vmatprep.subr.mxu0 0.0
    %325 = vmatpush2.msra.mxu0 0.0
    %326 = vmatprep.subr.mxu0 0.0
    %327 = vmatpush2.msra.mxu0 0.0
    %328 = vmatprep.subr.mxu0 0.0
    %329 = vmatpush2.msra.mxu0 0.0
    %330 = vmatprep.subr.mxu0 0.0
    %331 = vmatpush2.msra.mxu0 0.0
    %332 = vmatprep.subr.mxu0 0.0
    %333 = vmatpush2.msra.mxu0 0.0
    %334 = vmatprep.subr.mxu0 0.0
    %335 = vmatpush2.msra.mxu0 0.0
    %336 = vmatprep.subr.mxu0 0.0
    %337 = vmatpush2.msra.mxu0 0.0
    %338 = vmatprep.subr.mxu0 0.0
    %339 = vmatpush2.msra.mxu0 0.0
    %340 = vmatprep.subr.mxu0 0.0
    %341 = vmatpush2.msra.mxu0 0.0
    %342 = vmatprep.subr.mxu0 0.0
    %343 = vmatpush2.msra.mxu0 0.0
    %344 = vmatprep.subr.mxu0 0.0
    %345 = vmatpush2.msra.mxu0 0.0
    %346 = vmatprep.subr.mxu0 0.0
    %347 = vmatpush2.msra.mxu0 0.0
    %348 = vmatprep.subr.mxu0 0.0
    %349 = vmatpush2.msra.mxu0 0.0
    %350 = vmatprep.subr.mxu0 0.0
    %351 = vmatpush2.msra.mxu0 0.0
    %352 = vmatprep.subr.mxu0 0.0
    %353 = vmatpush2.msra.mxu0 0.0
    %354 = vmatprep.mubr.f32.mxu0 0.0
    %355 = vmatmul.mubr.f32.gmra.mxu0 %v288
    %v356 = vpop.f32.mrf.mxu0
    %v357 = vadd.f32 %v284, %v356
    %v358 = vpop.f32.mrf.mxu0
    %359 = vdwg.mxu0
    %v360 = vmax.f32 %v357, 0.0
    %v362 = vlaneseq
    %v363 = vshrl.u32 %v362, 7
    %v364 = vsub.s32 0, %v363
    %v365 = vrot.slane %v279, %v364
    %vm367 = vcmask 130048
    %v369 = vsel %vm367, %v360, 0
    %371 = vmatprep.subr.mxu0 0.0
    %372 = vmatpush1.msra.mxu0 0.0
    %373 = vmatprep.subr.mxu0 0.0
    %374 = vmatpush1.msra.mxu0 0.0
    %375 = vmatprep.subr.mxu0 0.0
    %376 = vmatpush1.msra.mxu0 0.0
    %377 = vmatprep.subr.mxu0 0.0
    %378 = vmatpush1.msra.mxu0 0.0
    %379 = vmatprep.subr.mxu0 0.0
    %380 = vmatpush1.msra.mxu0 0.0
    %381 = vmatprep.subr.mxu0 0.0
    %382 = vmatpush1.msra.mxu0 0.0
    %383 = vmatprep.subr.mxu0 0.0
    %384 = vmatpush1.msra.mxu0 0.0
    %385 = vmatprep.subr.mxu0 0.0
    %386 = vmatpush1.msra.mxu0 0.0
    %387 = vmatprep.subr.mxu0 0.0
    %388 = vmatpush1.msra.mxu0 0.0
    %389 = vmatprep.subr.mxu0 0.0
    %390 = vmatpush1.msra.mxu0 0.0
    %391 = vmatprep.subr.mxu0 0.0
    %392 = vmatpush1.msra.mxu0 0.0
    %393 = vmatprep.subr.mxu0 0.0
    %394 = vmatpush1.msra.mxu0 0.0
    %395 = vmatprep.subr.mxu0 0.0
    %396 = vmatpush1.msra.mxu0 0.0
    %397 = vmatprep.subr.mxu0 0.0
    %398 = vmatpush1.msra.mxu0 0.0
    %399 = vmatprep.subr.mxu0 0.0
    %400 = vmatpush1.msra.mxu0 %v278
    %401 = vmatprep.subr.mxu0 0.0
    %402 = vmatpush1.msra.mxu0 %v277
    %403 = vmatprep.subr.mxu0 0.0
    %404 = vmatpush2.msra.mxu0 0.0
    %405 = vmatprep.subr.mxu0 0.0
    %406 = vmatpush2.msra.mxu0 0.0
    %407 = vmatprep.subr.mxu0 0.0
    %408 = vmatpush2.msra.mxu0 0.0
    %409 = vmatprep.subr.mxu0 0.0
    %410 = vmatpush2.msra.mxu0 0.0
    %411 = vmatprep.subr.mxu0 0.0
    %412 = vmatpush2.msra.mxu0 0.0
    %413 = vmatprep.subr.mxu0 0.0
    %414 = vmatpush2.msra.mxu0 0.0
    %415 = vmatprep.subr.mxu0 0.0
    %416 = vmatpush2.msra.mxu0 0.0
    %417 = vmatprep.subr.mxu0 0.0
    %418 = vmatpush2.msra.mxu0 0.0
    %419 = vmatprep.subr.mxu0 0.0
    %420 = vmatpush2.msra.mxu0 0.0
    %421 = vmatprep.subr.mxu0 0.0
    %422 = vmatpush2.msra.mxu0 0.0
    %423 = vmatprep.subr.mxu0 0.0
    %424 = vmatpush2.msra.mxu0 0.0
    %425 = vmatprep.subr.mxu0 0.0
    %426 = vmatpush2.msra.mxu0 0.0
    %427 = vmatprep.subr.mxu0 0.0
    %428 = vmatpush2.msra.mxu0 0.0
    %429 = vmatprep.subr.mxu0 0.0
    %430 = vmatpush2.msra.mxu0 0.0
    %431 = vmatprep.subr.mxu0 0.0
    %432 = vmatpush2.msra.mxu0 0.0
    %433 = vmatprep.subr.mxu0 0.0
    %434 = vmatpush2.msra.mxu0 0.0
    %435 = vmatprep.mubr.f32.mxu0 0.0
    %436 = vmatmul.mubr.f32.gmra.mxu0 %v369
    %v437 = vpop.f32.mrf.mxu0
    %v438 = vadd.f32 %v365, %v437
    %v439 = vpop.f32.mrf.mxu0
    %440 = vdwg.mxu0
    %vm441 = vcmask 9216
    %442 = vst.msk [vmem:[#allocation2] sm:$0x3] %vm441, %v438
    %v443 = vld [vmem:[%s7] sm:$0xff]
    %v444 = vld [vmem:[%s7 + $0x8] sm:$0xff]
    %v445 = vld [vmem:[%s7 + $0x10] sm:$0xff]
    %v446 = vld [vmem:[%s7 + $0x18] sm:$0xff]
    %v447 = vld [vmem:[%s8] sm:$0x1]
    %v448 = vld [vmem:[%s9] sm:$0xff]
    %v449 = vld [vmem:[%s9 + $0x8] sm:$0xff]
    %v450 = vld [vmem:[%s10] sm:$0x1]
    %v452 = vlaneseq
    %v453 = vshrl.u32 %v452, 7
    %v454 = vsub.s32 0, %v453
    %v455 = vrot.slane %v447, %v454
    %457 = vrot.lane.b32.xlu0 %v271, 96
    %v458 = vpop.permute.xlu0 %457
    %v459 = vsel %vm286, %v458, 0
    %461 = vmatprep.subr.mxu0 0.0
    %462 = vmatpush1.msra.mxu0 0.0
    %463 = vmatprep.subr.mxu0 0.0
    %464 = vmatpush1.msra.mxu0 0.0
    %465 = vmatprep.subr.mxu0 0.0
    %466 = vmatpush1.msra.mxu0 0.0
    %467 = vmatprep.subr.mxu0 0.0
    %468 = vmatpush1.msra.mxu0 0.0
    %469 = vmatprep.subr.mxu0 0.0
    %470 = vmatpush1.msra.mxu0 0.0
    %471 = vmatprep.subr.mxu0 0.0
    %472 = vmatpush1.msra.mxu0 0.0
    %473 = vmatprep.subr.mxu0 0.0
    %474 = vmatpush1.msra.mxu0 0.0
    %475 = vmatprep.subr.mxu0 0.0
    %476 = vmatpush1.msra.mxu0 0.0
    %477 = vmatprep.subr.mxu0 0.0
    %478 = vmatpush1.msra.mxu0 0.0
    %479 = vmatprep.subr.mxu0 0.0
    %480 = vmatpush1.msra.mxu0 0.0
    %481 = vmatprep.subr.mxu0 0.0
    %482 = vmatpush1.msra.mxu0 0.0
    %483 = vmatprep.subr.mxu0 0.0
    %484 = vmatpush1.msra.mxu0 0.0
    %485 = vmatprep.subr.mxu0 0.0
    %486 = vmatpush1.msra.mxu0 %v446
    %487 = vmatprep.subr.mxu0 0.0
    %488 = vmatpush1.msra.mxu0 %v445
    %489 = vmatprep.subr.mxu0 0.0
    %490 = vmatpush1.msra.mxu0 %v444
    %491 = vmatprep.subr.mxu0 0.0
    %492 = vmatpush1.msra.mxu0 %v443
    %493 = vmatprep.subr.mxu0 0.0
    %494 = vmatpush2.msra.mxu0 0.0
    %495 = vmatprep.subr.mxu0 0.0
    %496 = vmatpush2.msra.mxu0 0.0
    %497 = vmatprep.subr.mxu0 0.0
    %498 = vmatpush2.msra.mxu0 0.0
    %499 = vmatprep.subr.mxu0 0.0
    %500 = vmatpush2.msra.mxu0 0.0
    %501 = vmatprep.subr.mxu0 0.0
    %502 = vmatpush2.msra.mxu0 0.0
    %503 = vmatprep.subr.mxu0 0.0
    %504 = vmatpush2.msra.mxu0 0.0
    %505 = vmatprep.subr.mxu0 0.0
    %506 = vmatpush2.msra.mxu0 0.0
    %507 = vmatprep.subr.mxu0 0.0
    %508 = vmatpush2.msra.mxu0 0.0
    %509 = vmatprep.subr.mxu0 0.0
    %510 = vmatpush2.msra.mxu0 0.0
    %511 = vmatprep.subr.mxu0 0.0
    %512 = vmatpush2.msra.mxu0 0.0
    %513 = vmatprep.subr.mxu0 0.0
    %514 = vmatpush2.msra.mxu0 0.0
    %515 = vmatprep.subr.mxu0 0.0
    %516 = vmatpush2.msra.mxu0 0.0
    %517 = vmatprep.subr.mxu0 0.0
    %518 = vmatpush2.msra.mxu0 0.0
    %519 = vmatprep.subr.mxu0 0.0
    %520 = vmatpush2.msra.mxu0 0.0
    %521 = vmatprep.subr.mxu0 0.0
    %522 = vmatpush2.msra.mxu0 0.0
    %523 = vmatprep.subr.mxu0 0.0
    %524 = vmatpush2.msra.mxu0 0.0
    %525 = vmatprep.mubr.f32.mxu0 0.0
    %526 = vmatmul.mubr.f32.gmra.mxu0 %v459
    %v527 = vpop.f32.mrf.mxu0
    %v528 = vadd.f32 %v455, %v527
    %v529 = vpop.f32.mrf.mxu0
    %530 = vdwg.mxu0
    %v531 = vmax.f32 %v528, 0.0
    %v533 = vlaneseq
    %v534 = vshrl.u32 %v533, 7
    %v535 = vsub.s32 0, %v534
    %v536 = vrot.slane %v450, %v535
    %v539 = vsel %vm367, %v531, 0
    %541 = vmatprep.subr.mxu0 0.0
    %542 = vmatpush1.msra.mxu0 0.0
    %543 = vmatprep.subr.mxu0 0.0
    %544 = vmatpush1.msra.mxu0 0.0
    %545 = vmatprep.subr.mxu0 0.0
    %546 = vmatpush1.msra.mxu0 0.0
    %547 = vmatprep.subr.mxu0 0.0
    %548 = vmatpush1.msra.mxu0 0.0
    %549 = vmatprep.subr.mxu0 0.0
    %550 = vmatpush1.msra.mxu0 0.0
    %551 = vmatprep.subr.mxu0 0.0
    %552 = vmatpush1.msra.mxu0 0.0
    %553 = vmatprep.subr.mxu0 0.0
    %554 = vmatpush1.msra.mxu0 0.0
    %555 = vmatprep.subr.mxu0 0.0
    %556 = vmatpush1.msra.mxu0 0.0
    %557 = vmatprep.subr.mxu0 0.0
    %558 = vmatpush1.msra.mxu0 0.0
    %559 = vmatprep.subr.mxu0 0.0
    %560 = vmatpush1.msra.mxu0 0.0
    %561 = vmatprep.subr.mxu0 0.0
    %562 = vmatpush1.msra.mxu0 0.0
    %563 = vmatprep.subr.mxu0 0.0
    %564 = vmatpush1.msra.mxu0 0.0
    %565 = vmatprep.subr.mxu0 0.0
    %566 = vmatpush1.msra.mxu0 0.0
    %567 = vmatprep.subr.mxu0 0.0
    %568 = vmatpush1.msra.mxu0 0.0
    %569 = vmatprep.subr.mxu0 0.0
    %570 = vmatpush1.msra.mxu0 %v449
    %571 = vmatprep.subr.mxu0 0.0
    %572 = vmatpush1.msra.mxu0 %v448
    %573 = vmatprep.subr.mxu0 0.0
    %574 = vmatpush2.msra.mxu0 0.0
    %575 = vmatprep.subr.mxu0 0.0
    %576 = vmatpush2.msra.mxu0 0.0
    %577 = vmatprep.subr.mxu0 0.0
    %578 = vmatpush2.msra.mxu0 0.0
    %579 = vmatprep.subr.mxu0 0.0
    %580 = vmatpush2.msra.mxu0 0.0
    %581 = vmatprep.subr.mxu0 0.0
    %582 = vmatpush2.msra.mxu0 0.0
    %583 = vmatprep.subr.mxu0 0.0
    %584 = vmatpush2.msra.mxu0 0.0
    %585 = vmatprep.subr.mxu0 0.0
    %586 = vmatpush2.msra.mxu0 0.0
    %587 = vmatprep.subr.mxu0 0.0
    %588 = vmatpush2.msra.mxu0 0.0
    %589 = vmatprep.subr.mxu0 0.0
    %590 = vmatpush2.msra.mxu0 0.0
    %591 = vmatprep.subr.mxu0 0.0
    %592 = vmatpush2.msra.mxu0 0.0
    %593 = vmatprep.subr.mxu0 0.0
    %594 = vmatpush2.msra.mxu0 0.0
    %595 = vmatprep.subr.mxu0 0.0
    %596 = vmatpush2.msra.mxu0 0.0
    %597 = vmatprep.subr.mxu0 0.0
    %598 = vmatpush2.msra.mxu0 0.0
    %599 = vmatprep.subr.mxu0 0.0
    %600 = vmatpush2.msra.mxu0 0.0
    %601 = vmatprep.subr.mxu0 0.0
    %602 = vmatpush2.msra.mxu0 0.0
    %603 = vmatprep.subr.mxu0 0.0
    %604 = vmatpush2.msra.mxu0 0.0
    %605 = vmatprep.mubr.f32.mxu0 0.0
    %606 = vmatmul.mubr.f32.gmra.mxu0 %v539
    %v607 = vpop.f32.mrf.mxu0
    %v608 = vadd.f32 %v536, %v607
    %v609 = vpop.f32.mrf.mxu0
    %610 = vdwg.mxu0
    %vm611 = vcmask 17408
    %612 = vst.msk [vmem:[#allocation4] sm:$0x3] %vm611, %v608
    %v613 = vld [vmem:[%s11] sm:$0xff]
    %v614 = vld [vmem:[%s11 + $0x8] sm:$0xff]
    %v615 = vld [vmem:[%s11 + $0x10] sm:$0xff]
    %v616 = vld [vmem:[%s11 + $0x18] sm:$0xff]
    %v617 = vld [vmem:[%s12] sm:$0x1]
    %v618 = vld [vmem:[%s13] sm:$0xff]
    %v619 = vld [vmem:[%s13 + $0x8] sm:$0xff]
    %v620 = vld [vmem:[%s14] sm:$0x1]
    %v622 = vlaneseq
    %v623 = vshrl.u32 %v622, 7
    %v624 = vsub.s32 0, %v623
    %v625 = vrot.slane %v617, %v624
    %627 = vrot.lane.b32.xlu0 %v271, 64
    %v628 = vpop.permute.xlu0 %627
    %v629 = vsel %vm286, %v628, 0
    %631 = vmatprep.subr.mxu0 0.0
    %632 = vmatpush1.msra.mxu0 0.0
    %633 = vmatprep.subr.mxu0 0.0
    %634 = vmatpush1.msra.mxu0 0.0
    %635 = vmatprep.subr.mxu0 0.0
    %636 = vmatpush1.msra.mxu0 0.0
    %637 = vmatprep.subr.mxu0 0.0
    %638 = vmatpush1.msra.mxu0 0.0
    %639 = vmatprep.subr.mxu0 0.0
    %640 = vmatpush1.msra.mxu0 0.0
    %641 = vmatprep.subr.mxu0 0.0
    %642 = vmatpush1.msra.mxu0 0.0
    %643 = vmatprep.subr.mxu0 0.0
    %644 = vmatpush1.msra.mxu0 0.0
    %645 = vmatprep.subr.mxu0 0.0
    %646 = vmatpush1.msra.mxu0 0.0
    %647 = vmatprep.subr.mxu0 0.0
    %648 = vmatpush1.msra.mxu0 0.0
    %649 = vmatprep.subr.mxu0 0.0
    %650 = vmatpush1.msra.mxu0 0.0
    %651 = vmatprep.subr.mxu0 0.0
    %652 = vmatpush1.msra.mxu0 0.0
    %653 = vmatprep.subr.mxu0 0.0
    %654 = vmatpush1.msra.mxu0 0.0
    %655 = vmatprep.subr.mxu0 0.0
    %656 = vmatpush1.msra.mxu0 %v616
    %657 = vmatprep.subr.mxu0 0.0
    %658 = vmatpush1.msra.mxu0 %v615
    %659 = vmatprep.subr.mxu0 0.0
    %660 = vmatpush1.msra.mxu0 %v614
    %661 = vmatprep.subr.mxu0 0.0
    %662 = vmatpush1.msra.mxu0 %v613
    %663 = vmatprep.subr.mxu0 0.0
    %664 = vmatpush2.msra.mxu0 0.0
    %665 = vmatprep.subr.mxu0 0.0
    %666 = vmatpush2.msra.mxu0 0.0
    %667 = vmatprep.subr.mxu0 0.0
    %668 = vmatpush2.msra.mxu0 0.0
    %669 = vmatprep.subr.mxu0 0.0
    %670 = vmatpush2.msra.mxu0 0.0
    %671 = vmatprep.subr.mxu0 0.0
    %672 = vmatpush2.msra.mxu0 0.0
    %673 = vmatprep.subr.mxu0 0.0
    %674 = vmatpush2.msra.mxu0 0.0
    %675 = vmatprep.subr.mxu0 0.0
    %676 = vmatpush2.msra.mxu0 0.0
    %677 = vmatprep.subr.mxu0 0.0
    %678 = vmatpush2.msra.mxu0 0.0
    %679 = vmatprep.subr.mxu0 0.0
    %680 = vmatpush2.msra.mxu0 0.0
    %681 = vmatprep.subr.mxu0 0.0
    %682 = vmatpush2.msra.mxu0 0.0
    %683 = vmatprep.subr.mxu0 0.0
    %684 = vmatpush2.msra.mxu0 0.0
    %685 = vmatprep.subr.mxu0 0.0
    %686 = vmatpush2.msra.mxu0 0.0
    %687 = vmatprep.subr.mxu0 0.0
    %688 = vmatpush2.msra.mxu0 0.0
    %689 = vmatprep.subr.mxu0 0.0
    %690 = vmatpush2.msra.mxu0 0.0
    %691 = vmatprep.subr.mxu0 0.0
    %692 = vmatpush2.msra.mxu0 0.0
    %693 = vmatprep.subr.mxu0 0.0
    %694 = vmatpush2.msra.mxu0 0.0
    %695 = vmatprep.mubr.f32.mxu0 0.0
    %696 = vmatmul.mubr.f32.gmra.mxu0 %v629
    %v697 = vpop.f32.mrf.mxu0
    %v698 = vadd.f32 %v625, %v697
    %v699 = vpop.f32.mrf.mxu0
    %700 = vdwg.mxu0
    %v701 = vmax.f32 %v698, 0.0
    %v703 = vlaneseq
    %v704 = vshrl.u32 %v703, 7
    %v705 = vsub.s32 0, %v704
    %v706 = vrot.slane %v620, %v705
    %v709 = vsel %vm367, %v701, 0
    %711 = vmatprep.subr.mxu0 0.0
    %712 = vmatpush1.msra.mxu0 0.0
    %713 = vmatprep.subr.mxu0 0.0
    %714 = vmatpush1.msra.mxu0 0.0
    %715 = vmatprep.subr.mxu0 0.0
    %716 = vmatpush1.msra.mxu0 0.0
    %717 = vmatprep.subr.mxu0 0.0
    %718 = vmatpush1.msra.mxu0 0.0
    %719 = vmatprep.subr.mxu0 0.0
    %720 = vmatpush1.msra.mxu0 0.0
    %721 = vmatprep.subr.mxu0 0.0
    %722 = vmatpush1.msra.mxu0 0.0
    %723 = vmatprep.subr.mxu0 0.0
    %724 = vmatpush1.msra.mxu0 0.0
    %725 = vmatprep.subr.mxu0 0.0
    %726 = vmatpush1.msra.mxu0 0.0
    %727 = vmatprep.subr.mxu0 0.0
    %728 = vmatpush1.msra.mxu0 0.0
    %729 = vmatprep.subr.mxu0 0.0
    %730 = vmatpush1.msra.mxu0 0.0
    %731 = vmatprep.subr.mxu0 0.0
    %732 = vmatpush1.msra.mxu0 0.0
    %733 = vmatprep.subr.mxu0 0.0
    %734 = vmatpush1.msra.mxu0 0.0
    %735 = vmatprep.subr.mxu0 0.0
    %736 = vmatpush1.msra.mxu0 0.0
    %737 = vmatprep.subr.mxu0 0.0
    %738 = vmatpush1.msra.mxu0 0.0
    %739 = vmatprep.subr.mxu0 0.0
    %740 = vmatpush1.msra.mxu0 %v619
    %741 = vmatprep.subr.mxu0 0.0
    %742 = vmatpush1.msra.mxu0 %v618
    %743 = vmatprep.subr.mxu0 0.0
    %744 = vmatpush2.msra.mxu0 0.0
    %745 = vmatprep.subr.mxu0 0.0
    %746 = vmatpush2.msra.mxu0 0.0
    %747 = vmatprep.subr.mxu0 0.0
    %748 = vmatpush2.msra.mxu0 0.0
    %749 = vmatprep.subr.mxu0 0.0
    %750 = vmatpush2.msra.mxu0 0.0
    %751 = vmatprep.subr.mxu0 0.0
    %752 = vmatpush2.msra.mxu0 0.0
    %753 = vmatprep.subr.mxu0 0.0
    %754 = vmatpush2.msra.mxu0 0.0
    %755 = vmatprep.subr.mxu0 0.0
    %756 = vmatpush2.msra.mxu0 0.0
    %757 = vmatprep.subr.mxu0 0.0
    %758 = vmatpush2.msra.mxu0 0.0
    %759 = vmatprep.subr.mxu0 0.0
    %760 = vmatpush2.msra.mxu0 0.0
    %761 = vmatprep.subr.mxu0 0.0
    %762 = vmatpush2.msra.mxu0 0.0
    %763 = vmatprep.subr.mxu0 0.0
    %764 = vmatpush2.msra.mxu0 0.0
    %765 = vmatprep.subr.mxu0 0.0
    %766 = vmatpush2.msra.mxu0 0.0
    %767 = vmatprep.subr.mxu0 0.0
    %768 = vmatpush2.msra.mxu0 0.0
    %769 = vmatprep.subr.mxu0 0.0
    %770 = vmatpush2.msra.mxu0 0.0
    %771 = vmatprep.subr.mxu0 0.0
    %772 = vmatpush2.msra.mxu0 0.0
    %773 = vmatprep.subr.mxu0 0.0
    %774 = vmatpush2.msra.mxu0 0.0
    %775 = vmatprep.mubr.f32.mxu0 0.0
    %776 = vmatmul.mubr.f32.gmra.mxu0 %v709
    %v777 = vpop.f32.mrf.mxu0
    %v778 = vadd.f32 %v706, %v777
    %v779 = vpop.f32.mrf.mxu0
    %780 = vdwg.mxu0
    %781 = vst.msk [vmem:[#allocation6] sm:$0x3] %vm611, %v778
    // Predicated region
    $region62: #{vatep_forward.13} parent=1 // pred_check
      _
    $region63: #{vatep_forward.13} parent=1 // pred_check_branch
      %783 = sbr.rel (0) target = $region65
    $region64: #{vatep_forward.13} parent=1 // pred_region
      %s785 = ssub.s32 32, 32
      %786 = vsyncadd [#allocation3], %s785
      %s788 = sshll.u32 [#allocation2], 4
      %s789 = int_to_ptr.vmem [resolvable:$true] %s788
      %791 = dma.vmem_to_hbm [thread:$0]  %s789, 32, %s15, [#allocation3]
    $region65: #{vatep_forward.13} parent=1 // pred_fallthru
      _
    // Predicated region
    $region66: #{vatep_forward.13} parent=1 // pred_check
      _
    $region67: #{vatep_forward.13} parent=1 // pred_check_branch
      %793 = sbr.rel (0) target = $region69
    $region68: #{vatep_forward.13} parent=1 // pred_region
      %s795 = ssub.s32 32, 32
      %796 = vsyncadd [#allocation5], %s795
      %s798 = sshll.u32 [#allocation4], 4
      %s799 = int_to_ptr.vmem [resolvable:$true] %s798
      %801 = dma.vmem_to_hbm [thread:$0]  %s799, 32, %s16, [#allocation5]
    $region69: #{vatep_forward.13} parent=1 // pred_fallthru
      _
    // Predicated region
    $region70: #{vatep_forward.13} parent=1 // pred_check
      _
    $region71: #{vatep_forward.13} parent=1 // pred_check_branch
      %803 = sbr.rel (0) target = $region73
    $region72: #{vatep_forward.13} parent=1 // pred_region
      %s805 = ssub.s32 32, 32
      %806 = vsyncadd [#allocation5], %s805
      %s808 = sshll.u32 [#allocation6], 4
      %s809 = int_to_ptr.vmem [resolvable:$true] %s808
      %811 = dma.vmem_to_hbm [thread:$0]  %s809, 32, %s17, [#allocation5]
    $region73: #{vatep_forward.13} parent=1 // pred_fallthru
      _
    // Predicated region
    $region74: #{vatep_forward.13} parent=1 // pred_check
      _
    $region75: #{vatep_forward.13} parent=1 // pred_check_branch
      %813 = sbr.rel (0) target = $region77
    $region76: #{vatep_forward.13} parent=1 // pred_region
      %814 = dma.done [#allocation3], 32
    $region77: #{vatep_forward.13} parent=1 // pred_fallthru
      _
    // Predicated region
    $region78: #{vatep_forward.13} parent=1 // pred_check
      _
    $region79: #{vatep_forward.13} parent=1 // pred_check_branch
      %816 = sbr.rel (0) target = $region81
    $region80: #{vatep_forward.13} parent=1 // pred_region
      %817 = dma.done [#allocation5], 32
    $region81: #{vatep_forward.13} parent=1 // pred_fallthru
      _
    // Predicated region
    $region82: #{vatep_forward.13} parent=1 // pred_check
      _
    $region83: #{vatep_forward.13} parent=1 // pred_check_branch
      %819 = sbr.rel (0) target = $region85
    $region84: #{vatep_forward.13} parent=1 // pred_region
      %820 = dma.done [#allocation5], 32
    $region85: #{vatep_forward.13} parent=1 // pred_fallthru
      _
    %821 = vsyncpa [#allocation3], 1
    %822 = vsyncpa [#allocation5], 1

// kernel: vatep_forward.8
$region0: #{vatep_forward.8}
  #allocation0 [shape = 'u32[]', space=smem, size = 0x4, offset = 0x4, fixed_abs, tag = 'smem constant byte address 0x4 - core index']
  #allocation1 [shape = 'u32[144,128]{1,0:T(1,128)}', space=vmem, size = 0x12000, scoped, tag = 'internal scratch']
  %s0 = inlined_call_operand.vmem [shape: f32[2,8,32], index: 0, kind: input, shape index: {}]
  %s1 = inlined_call_operand.vmem [shape: f32[32,96], index: 1, kind: input, shape index: {}]
  %s2 = inlined_call_operand.vmem [shape: f32[1,96], index: 2, kind: input, shape index: {}]
  %s3 = inlined_call_operand.vmem [shape: f32[32,32], index: 3, kind: input, shape index: {}]
  %s4 = inlined_call_operand.vmem [shape: f32[1,32], index: 4, kind: input, shape index: {}]
  %s5 = inlined_call_operand.vmem [shape: f32[1,32], index: 5, kind: input, shape index: {}]
  %s6 = inlined_call_operand.vmem [shape: f32[1,32], index: 6, kind: input, shape index: {}]
  %s7 = inlined_call_operand.vmem [shape: f32[32,64], index: 7, kind: input, shape index: {}]
  %s8 = inlined_call_operand.vmem [shape: f32[1,64], index: 8, kind: input, shape index: {}]
  %s9 = inlined_call_operand.vmem [shape: f32[64,32], index: 9, kind: input, shape index: {}]
  %s10 = inlined_call_operand.vmem [shape: f32[1,32], index: 10, kind: input, shape index: {}]
  %s11 = inlined_call_operand.vmem [shape: f32[1,32], index: 11, kind: input, shape index: {}]
  %s12 = inlined_call_operand.vmem [shape: f32[1,32], index: 12, kind: input, shape index: {}]
  %s13 = inlined_call_operand.vmem [shape: f32[2,8,32], index: 13, kind: output, shape index: {}]
  %s14 = sld [smem:[#allocation0]]
  $region85: #{vatep_forward.8} parent=0
    _
  %s16 = ssub.s32 1, %s14
  %s17 = scalar_select 0, %s16, %s14
  loop: start=0, step=1, limit=4
  $region2: #{vatep_forward.8} parent=0 // loop_pre_header
    _
  $region3: #{vatep_forward.8} parent=0 // loop_header
    %s19 = sphi 0, %s23
    %p20 = scmp.ge.s32.totalorder %s19, 4
    %s29 = sphi 0, %s31
    %s32 = sphi 0, %s29
    %s33 = sphi 0, %s32
    %s49 = sphi 0, %s33
    %s53 = sphi 0, %s53
    %s55 = sphi 0, %s53
    %s56 = sphi 0, %s55
    %s70 = sphi 0, %s56
    %s74 = sphi 0, %s74
    %s76 = sphi 0, %s74
    %s77 = sphi 0, %s76
    %s91 = sphi 0, %s77
    %s95 = sphi 0, %s95
    %s97 = sphi 0, %s95
    %s98 = sphi 0, %s97
    %s112 = sphi 0, %s98
    %s116 = sphi 0, %s116
    %s118 = sphi 0, %s116
    %s119 = sphi 0, %s118
    %s133 = sphi 0, %s119
    %s137 = sphi 0, %s137
    %s139 = sphi 0, %s137
    %s140 = sphi 0, %s139
    %s154 = sphi 0, %s140
    %s158 = sphi 0, %s158
    %s160 = sphi 0, %s158
    %s161 = sphi 0, %s160
    %s175 = sphi 0, %s161
    %s179 = sphi 0, %s179
    %s181 = sphi 0, %s179
    %s182 = sphi 0, %s181
    %s196 = sphi 0, %s182
    %s200 = sphi 0, %s200
    %s202 = sphi 0, %s200
    %s203 = sphi 0, %s202
    %s217 = sphi 0, %s203
    %s221 = sphi 0, %s221
    %s223 = sphi 0, %s221
    %s224 = sphi 0, %s223
    %s238 = sphi 0, %s224
    %s242 = sphi 0, %s242
    %s244 = sphi 0, %s242
    %s245 = sphi 0, %s244
    %s259 = sphi 0, %s245
    %s263 = sphi 0, %s263
    %s265 = sphi 0, %s263
    %s266 = sphi 0, %s265
    %s280 = sphi 0, %s266
    %s284 = sphi 0, %s284
    %s286 = sphi 0, %s284
    %s287 = sphi 0, %s286
    %s301 = sphi 0, %s287
    %s307 = sphi 0, %s309
    %s310 = sphi 0, %s307
    %s311 = sphi 0, %s310
    %s327 = sphi 0, %s311
  $region4: #{vatep_forward.8} parent=0 // loop_header_branch
    %22 = sbr.rel (%p20) target = $region8
  $region5: #{vatep_forward.8} parent=0 // loop_body
    %s24 = ssub.s32 %s19, 1
    %s25 = ssub.s32 %s19, 2
    %s26 = sadd.s32 %s19, 1
    %s27 = ssub.s32 %s19, %s26
    %p28 = scmp.eq.s32.totalorder %s27, 0
    %s30 = sadd.s32 %s29, 1
    %s31 = scalar_select %p28, %s29, %s30
    %p34 = pneg %p28
    %p35 = scmp.eq.s32.totalorder %s19, 1
    %p36 = por %p34, %p35
    %p37 = scmp.ne.s32.totalorder %s29, %s32
    %p38 = scmp.eq.s32.totalorder %s19, 0
    %p39 = por %p37, %p38
    %p40 = scmp.ne.s32.totalorder %s29, %s32
    %p41 = scmp.eq.s32.totalorder %s24, 1
    %p42 = por %p40, %p41
    %p43 = scmp.ne.s32.totalorder %s32, %s33
    %p44 = scmp.eq.s32.totalorder %s24, 0
    %p45 = por %p43, %p44
    %p46 = scmp.ne.s32.totalorder %s32, %s33
    %p47 = scmp.eq.s32.totalorder %s25, 1
    %p48 = por %p46, %p47
    %p50 = scmp.ne.s32.totalorder %s33, %s49
    %p51 = scmp.eq.s32.totalorder %s25, 0
    %p52 = por %p50, %p51
    %s54 = sadd.s32 %s53, 1
    %p57 = scmp.eq.s32.totalorder %s19, 1
    %p58 = scmp.ne.s32.totalorder %s53, %s55
    %p59 = scmp.eq.s32.totalorder %s19, 0
    %p60 = por %p58, %p59
    %p61 = scmp.ne.s32.totalorder %s53, %s55
    %p62 = scmp.eq.s32.totalorder %s24, 1
    %p63 = por %p61, %p62
    %p64 = scmp.ne.s32.totalorder %s55, %s56
    %p65 = scmp.eq.s32.totalorder %s24, 0
    %p66 = por %p64, %p65
    %p67 = scmp.ne.s32.totalorder %s55, %s56
    %p68 = scmp.eq.s32.totalorder %s25, 1
    %p69 = por %p67, %p68
    %p71 = scmp.ne.s32.totalorder %s56, %s70
    %p72 = scmp.eq.s32.totalorder %s25, 0
    %p73 = por %p71, %p72
    %s75 = sadd.s32 %s74, 1
    %p78 = scmp.eq.s32.totalorder %s19, 1
    %p79 = scmp.ne.s32.totalorder %s74, %s76
    %p80 = scmp.eq.s32.totalorder %s19, 0
    %p81 = por %p79, %p80
    %p82 = scmp.ne.s32.totalorder %s74, %s76
    %p83 = scmp.eq.s32.totalorder %s24, 1
    %p84 = por %p82, %p83
    %p85 = scmp.ne.s32.totalorder %s76, %s77
    %p86 = scmp.eq.s32.totalorder %s24, 0
    %p87 = por %p85, %p86
    %p88 = scmp.ne.s32.totalorder %s76, %s77
    %p89 = scmp.eq.s32.totalorder %s25, 1
    %p90 = por %p88, %p89
    %p92 = scmp.ne.s32.totalorder %s77, %s91
    %p93 = scmp.eq.s32.totalorder %s25, 0
    %p94 = por %p92, %p93
    %s96 = sadd.s32 %s95, 1
    %p99 = scmp.eq.s32.totalorder %s19, 1
    %p100 = scmp.ne.s32.totalorder %s95, %s97
    %p101 = scmp.eq.s32.totalorder %s19, 0
    %p102 = por %p100, %p101
    %p103 = scmp.ne.s32.totalorder %s95, %s97
    %p104 = scmp.eq.s32.totalorder %s24, 1
    %p105 = por %p103, %p104
    %p106 = scmp.ne.s32.totalorder %s97, %s98
    %p107 = scmp.eq.s32.totalorder %s24, 0
    %p108 = por %p106, %p107
    %p109 = scmp.ne.s32.totalorder %s97, %s98
    %p110 = scmp.eq.s32.totalorder %s25, 1
    %p111 = por %p109, %p110
    %p113 = scmp.ne.s32.totalorder %s98, %s112
    %p114 = scmp.eq.s32.totalorder %s25, 0
    %p115 = por %p113, %p114
    %s117 = sadd.s32 %s116, 1
    %p120 = scmp.eq.s32.totalorder %s19, 1
    %p121 = scmp.ne.s32.totalorder %s116, %s118
    %p122 = scmp.eq.s32.totalorder %s19, 0
    %p123 = por %p121, %p122
    %p124 = scmp.ne.s32.totalorder %s116, %s118
    %p125 = scmp.eq.s32.totalorder %s24, 1
    %p126 = por %p124, %p125
    %p127 = scmp.ne.s32.totalorder %s118, %s119
    %p128 = scmp.eq.s32.totalorder %s24, 0
    %p129 = por %p127, %p128
    %p130 = scmp.ne.s32.totalorder %s118, %s119
    %p131 = scmp.eq.s32.totalorder %s25, 1
    %p132 = por %p130, %p131
    %p134 = scmp.ne.s32.totalorder %s119, %s133
    %p135 = scmp.eq.s32.totalorder %s25, 0
    %p136 = por %p134, %p135
    %s138 = sadd.s32 %s137, 1
    %p141 = scmp.eq.s32.totalorder %s19, 1
    %p142 = scmp.ne.s32.totalorder %s137, %s139
    %p143 = scmp.eq.s32.totalorder %s19, 0
    %p144 = por %p142, %p143
    %p145 = scmp.ne.s32.totalorder %s137, %s139
    %p146 = scmp.eq.s32.totalorder %s24, 1
    %p147 = por %p145, %p146
    %p148 = scmp.ne.s32.totalorder %s139, %s140
    %p149 = scmp.eq.s32.totalorder %s24, 0
    %p150 = por %p148, %p149
    %p151 = scmp.ne.s32.totalorder %s139, %s140
    %p152 = scmp.eq.s32.totalorder %s25, 1
    %p153 = por %p151, %p152
    %p155 = scmp.ne.s32.totalorder %s140, %s154
    %p156 = scmp.eq.s32.totalorder %s25, 0
    %p157 = por %p155, %p156
    %s159 = sadd.s32 %s158, 1
    %p162 = scmp.eq.s32.totalorder %s19, 1
    %p163 = scmp.ne.s32.totalorder %s158, %s160
    %p164 = scmp.eq.s32.totalorder %s19, 0
    %p165 = por %p163, %p164
    %p166 = scmp.ne.s32.totalorder %s158, %s160
    %p167 = scmp.eq.s32.totalorder %s24, 1
    %p168 = por %p166, %p167
    %p169 = scmp.ne.s32.totalorder %s160, %s161
    %p170 = scmp.eq.s32.totalorder %s24, 0
    %p171 = por %p169, %p170
    %p172 = scmp.ne.s32.totalorder %s160, %s161
    %p173 = scmp.eq.s32.totalorder %s25, 1
    %p174 = por %p172, %p173
    %p176 = scmp.ne.s32.totalorder %s161, %s175
    %p177 = scmp.eq.s32.totalorder %s25, 0
    %p178 = por %p176, %p177
    %s180 = sadd.s32 %s179, 1
    %p183 = scmp.eq.s32.totalorder %s19, 1
    %p184 = scmp.ne.s32.totalorder %s179, %s181
    %p185 = scmp.eq.s32.totalorder %s19, 0
    %p186 = por %p184, %p185
    %p187 = scmp.ne.s32.totalorder %s179, %s181
    %p188 = scmp.eq.s32.totalorder %s24, 1
    %p189 = por %p187, %p188
    %p190 = scmp.ne.s32.totalorder %s181, %s182
    %p191 = scmp.eq.s32.totalorder %s24, 0
    %p192 = por %p190, %p191
    %p193 = scmp.ne.s32.totalorder %s181, %s182
    %p194 = scmp.eq.s32.totalorder %s25, 1
    %p195 = por %p193, %p194
    %p197 = scmp.ne.s32.totalorder %s182, %s196
    %p198 = scmp.eq.s32.totalorder %s25, 0
    %p199 = por %p197, %p198
    %s201 = sadd.s32 %s200, 1
    %p204 = scmp.eq.s32.totalorder %s19, 1
    %p205 = scmp.ne.s32.totalorder %s200, %s202
    %p206 = scmp.eq.s32.totalorder %s19, 0
    %p207 = por %p205, %p206
    %p208 = scmp.ne.s32.totalorder %s200, %s202
    %p209 = scmp.eq.s32.totalorder %s24, 1
    %p210 = por %p208, %p209
    %p211 = scmp.ne.s32.totalorder %s202, %s203
    %p212 = scmp.eq.s32.totalorder %s24, 0
    %p213 = por %p211, %p212
    %p214 = scmp.ne.s32.totalorder %s202, %s203
    %p215 = scmp.eq.s32.totalorder %s25, 1
    %p216 = por %p214, %p215
    %p218 = scmp.ne.s32.totalorder %s203, %s217
    %p219 = scmp.eq.s32.totalorder %s25, 0
    %p220 = por %p218, %p219
    %s222 = sadd.s32 %s221, 1
    %p225 = scmp.eq.s32.totalorder %s19, 1
    %p226 = scmp.ne.s32.totalorder %s221, %s223
    %p227 = scmp.eq.s32.totalorder %s19, 0
    %p228 = por %p226, %p227
    %p229 = scmp.ne.s32.totalorder %s221, %s223
    %p230 = scmp.eq.s32.totalorder %s24, 1
    %p231 = por %p229, %p230
    %p232 = scmp.ne.s32.totalorder %s223, %s224
    %p233 = scmp.eq.s32.totalorder %s24, 0
    %p234 = por %p232, %p233
    %p235 = scmp.ne.s32.totalorder %s223, %s224
    %p236 = scmp.eq.s32.totalorder %s25, 1
    %p237 = por %p235, %p236
    %p239 = scmp.ne.s32.totalorder %s224, %s238
    %p240 = scmp.eq.s32.totalorder %s25, 0
    %p241 = por %p239, %p240
    %s243 = sadd.s32 %s242, 1
    %p246 = scmp.eq.s32.totalorder %s19, 1
    %p247 = scmp.ne.s32.totalorder %s242, %s244
    %p248 = scmp.eq.s32.totalorder %s19, 0
    %p249 = por %p247, %p248
    %p250 = scmp.ne.s32.totalorder %s242, %s244
    %p251 = scmp.eq.s32.totalorder %s24, 1
    %p252 = por %p250, %p251
    %p253 = scmp.ne.s32.totalorder %s244, %s245
    %p254 = scmp.eq.s32.totalorder %s24, 0
    %p255 = por %p253, %p254
    %p256 = scmp.ne.s32.totalorder %s244, %s245
    %p257 = scmp.eq.s32.totalorder %s25, 1
    %p258 = por %p256, %p257
    %p260 = scmp.ne.s32.totalorder %s245, %s259
    %p261 = scmp.eq.s32.totalorder %s25, 0
    %p262 = por %p260, %p261
    %s264 = sadd.s32 %s263, 1
    %p267 = scmp.eq.s32.totalorder %s19, 1
    %p268 = scmp.ne.s32.totalorder %s263, %s265
    %p269 = scmp.eq.s32.totalorder %s19, 0
    %p270 = por %p268, %p269
    %p271 = scmp.ne.s32.totalorder %s263, %s265
    %p272 = scmp.eq.s32.totalorder %s24, 1
    %p273 = por %p271, %p272
    %p274 = scmp.ne.s32.totalorder %s265, %s266
    %p275 = scmp.eq.s32.totalorder %s24, 0
    %p276 = por %p274, %p275
    %p277 = scmp.ne.s32.totalorder %s265, %s266
    %p278 = scmp.eq.s32.totalorder %s25, 1
    %p279 = por %p277, %p278
    %p281 = scmp.ne.s32.totalorder %s266, %s280
    %p282 = scmp.eq.s32.totalorder %s25, 0
    %p283 = por %p281, %p282
    %s285 = sadd.s32 %s284, 1
    %p288 = scmp.eq.s32.totalorder %s19, 1
    %p289 = scmp.ne.s32.totalorder %s284, %s286
    %p290 = scmp.eq.s32.totalorder %s19, 0
    %p291 = por %p289, %p290
    %p292 = scmp.ne.s32.totalorder %s284, %s286
    %p293 = scmp.eq.s32.totalorder %s24, 1
    %p294 = por %p292, %p293
    %p295 = scmp.ne.s32.totalorder %s286, %s287
    %p296 = scmp.eq.s32.totalorder %s24, 0
    %p297 = por %p295, %p296
    %p298 = scmp.ne.s32.totalorder %s286, %s287
    %p299 = scmp.eq.s32.totalorder %s25, 1
    %p300 = por %p298, %p299
    %p302 = scmp.ne.s32.totalorder %s287, %s301
    %p303 = scmp.eq.s32.totalorder %s25, 0
    %p304 = por %p302, %p303
    %s305 = ssub.s32 %s19, %s26
    %p306 = scmp.eq.s32.totalorder %s305, 0
    %s308 = sadd.s32 %s307, 1
    %s309 = scalar_select %p306, %s307, %s308
    %p312 = pneg %p306
    %p313 = scmp.eq.s32.totalorder %s19, 1
    %p314 = por %p312, %p313
    %p315 = scmp.ne.s32.totalorder %s307, %s310
    %p316 = scmp.eq.s32.totalorder %s19, 0
    %p317 = por %p315, %p316
    %p318 = scmp.ne.s32.totalorder %s307, %s310
    %p319 = scmp.eq.s32.totalorder %s24, 1
    %p320 = por %p318, %p319
    %p321 = scmp.ne.s32.totalorder %s310, %s311
    %p322 = scmp.eq.s32.totalorder %s24, 0
    %p323 = por %p321, %p322
    %p324 = scmp.ne.s32.totalorder %s310, %s311
    %p325 = scmp.eq.s32.totalorder %s25, 1
    %p326 = por %p324, %p325
    %p328 = scmp.ne.s32.totalorder %s311, %s327
    %p329 = scmp.eq.s32.totalorder %s25, 0
    %p330 = por %p328, %p329
    %p331 = scmp.le.s32.totalorder 1, %s19
    %p332 = scmp.lt.s32.totalorder %s19, 3
    %p333 = pnand %p331, %p332
    %p334 = pneg %p333
    // Predicated region
    $region9: #{vatep_forward.8} parent=5 // pred_check
      _
    $region10: #{vatep_forward.8} parent=5 // pred_check_branch
      %336 = sbr.rel (%p333) target = $region12
    $region11: #{vatep_forward.8} parent=5 // pred_region
      %s337 = ssub.s32 %s19, 1
      // Predicated region
      $region13: #{vatep_forward.8} parent=11 // pred_check
        %p338 = pneg %p66
      $region14: #{vatep_forward.8} parent=11 // pred_check_branch
        %340 = sbr.rel (%p338) target = $region16
      $region15: #{vatep_forward.8} parent=11 // pred_region
        _
      $region16: #{vatep_forward.8} parent=11 // pred_fallthru
        _
      // Predicated region
      $region17: #{vatep_forward.8} parent=11 // pred_check
        %p341 = pneg %p87
      $region18: #{vatep_forward.8} parent=11 // pred_check_branch
        %343 = sbr.rel (%p341) target = $region20
      $region19: #{vatep_forward.8} parent=11 // pred_region
        _
      $region20: #{vatep_forward.8} parent=11 // pred_fallthru
        _
      // Predicated region
      $region21: #{vatep_forward.8} parent=11 // pred_check
        %p344 = pneg %p108
      $region22: #{vatep_forward.8} parent=11 // pred_check_branch
        %346 = sbr.rel (%p344) target = $region24
      $region23: #{vatep_forward.8} parent=11 // pred_region
        _
      $region24: #{vatep_forward.8} parent=11 // pred_fallthru
        _
      // Predicated region
      $region25: #{vatep_forward.8} parent=11 // pred_check
        %p347 = pneg %p129
      $region26: #{vatep_forward.8} parent=11 // pred_check_branch
        %349 = sbr.rel (%p347) target = $region28
      $region27: #{vatep_forward.8} parent=11 // pred_region
        _
      $region28: #{vatep_forward.8} parent=11 // pred_fallthru
        _
      // Predicated region
      $region29: #{vatep_forward.8} parent=11 // pred_check
        %p350 = pneg %p150
      $region30: #{vatep_forward.8} parent=11 // pred_check_branch
        %352 = sbr.rel (%p350) target = $region32
      $region31: #{vatep_forward.8} parent=11 // pred_region
        _
      $region32: #{vatep_forward.8} parent=11 // pred_fallthru
        _
      // Predicated region
      $region33: #{vatep_forward.8} parent=11 // pred_check
        %p353 = pneg %p171
      $region34: #{vatep_forward.8} parent=11 // pred_check_branch
        %355 = sbr.rel (%p353) target = $region36
      $region35: #{vatep_forward.8} parent=11 // pred_region
        _
      $region36: #{vatep_forward.8} parent=11 // pred_fallthru
        _
      // Predicated region
      $region37: #{vatep_forward.8} parent=11 // pred_check
        %p356 = pneg %p192
      $region38: #{vatep_forward.8} parent=11 // pred_check_branch
        %358 = sbr.rel (%p356) target = $region40
      $region39: #{vatep_forward.8} parent=11 // pred_region
        _
      $region40: #{vatep_forward.8} parent=11 // pred_fallthru
        _
      // Predicated region
      $region41: #{vatep_forward.8} parent=11 // pred_check
        %p359 = pneg %p213
      $region42: #{vatep_forward.8} parent=11 // pred_check_branch
        %361 = sbr.rel (%p359) target = $region44
      $region43: #{vatep_forward.8} parent=11 // pred_region
        _
      $region44: #{vatep_forward.8} parent=11 // pred_fallthru
        _
      // Predicated region
      $region45: #{vatep_forward.8} parent=11 // pred_check
        %p362 = pneg %p234
      $region46: #{vatep_forward.8} parent=11 // pred_check_branch
        %364 = sbr.rel (%p362) target = $region48
      $region47: #{vatep_forward.8} parent=11 // pred_region
        _
      $region48: #{vatep_forward.8} parent=11 // pred_fallthru
        _
      // Predicated region
      $region49: #{vatep_forward.8} parent=11 // pred_check
        %p365 = pneg %p255
      $region50: #{vatep_forward.8} parent=11 // pred_check_branch
        %367 = sbr.rel (%p365) target = $region52
      $region51: #{vatep_forward.8} parent=11 // pred_region
        _
      $region52: #{vatep_forward.8} parent=11 // pred_fallthru
        _
      // Predicated region
      $region53: #{vatep_forward.8} parent=11 // pred_check
        %p368 = pneg %p276
      $region54: #{vatep_forward.8} parent=11 // pred_check_branch
        %370 = sbr.rel (%p368) target = $region56
      $region55: #{vatep_forward.8} parent=11 // pred_region
        _
      $region56: #{vatep_forward.8} parent=11 // pred_fallthru
        _
      // Predicated region
      $region57: #{vatep_forward.8} parent=11 // pred_check
        %p371 = pneg %p297
      $region58: #{vatep_forward.8} parent=11 // pred_check_branch
        %373 = sbr.rel (%p371) target = $region60
      $region59: #{vatep_forward.8} parent=11 // pred_region
        _
      $region60: #{vatep_forward.8} parent=11 // pred_fallthru
        _
    $region12: #{vatep_forward.8} parent=5 // pred_fallthru
      _
    %p374 = scmp.lt.s32.totalorder %s19, 2
    // Predicated region
    $region61: #{vatep_forward.8} parent=5 // pred_check
      %p375 = pneg %p374
    $region62: #{vatep_forward.8} parent=5 // pred_check_branch
      %377 = sbr.rel (%p375) target = $region64
    $region63: #{vatep_forward.8} parent=5 // pred_region
      // Predicated region
      $region65: #{vatep_forward.8} parent=63 // pred_check
        %p378 = pneg %p39
      $region66: #{vatep_forward.8} parent=63 // pred_check_branch
        %380 = sbr.rel (%p378) target = $region68
      $region67: #{vatep_forward.8} parent=63 // pred_region
        %p381 = scmp.lt.s32.totalorder %s19, 1
        %s382 = scalar_select %p381, %s19, 1
        %s383 = smul.addr %s382, 8
        %s384 = scalar_lea.vmem %s0, %s383
      $region68: #{vatep_forward.8} parent=63 // pred_fallthru
        _
    $region64: #{vatep_forward.8} parent=5 // pred_fallthru
      _
    %p385 = scmp.le.s32.totalorder 1, %s19
    %p386 = scmp.lt.s32.totalorder %s19, 3
    %p387 = pnand %p385, %p386
    %p388 = pneg %p387
    // Predicated region
    $region69: #{vatep_forward.8} parent=5 // pred_check
      _
    $region70: #{vatep_forward.8} parent=5 // pred_check_branch
      %390 = sbr.rel (%p387) target = $region72
    $region71: #{vatep_forward.8} parent=5 // pred_region
      %s391 = ssub.s32 %s19, 1
      %p392 = scmp.lt.s32.totalorder %s24, 1
      %s393 = scalar_select %p392, %s24, 1
      %s394 = smul.addr %s393, 8
      %s395 = scalar_lea.vmem %s0, %s394
      %p396 = pneg %p45
      %p397 = pneg %p42
      %p398 = pneg %p66
      %p399 = pneg %p63
      %p400 = pneg %p87
      %p401 = pneg %p84
      %p402 = pneg %p108
      %p403 = pneg %p105
      %p404 = pneg %p129
      %p405 = pneg %p126
      %p406 = pneg %p150
      %p407 = pneg %p147
      %p408 = pneg %p171
      %p409 = pneg %p168
      %p410 = pneg %p192
      %p411 = pneg %p189
      %p412 = pneg %p213
      %p413 = pneg %p210
      %p414 = pneg %p234
      %p415 = pneg %p231
      %p416 = pneg %p255
      %p417 = pneg %p252
      %p418 = pneg %p276
      %p419 = pneg %p273
      %p420 = pneg %p297
      %p421 = pneg %p294
      %p422 = pneg %p323
      %p423 = pneg %p320
      %p424 = scmp.lt.s32.totalorder %s24, 1
      %s425 = scalar_select %p424, %s24, 1
      %s426 = smul.addr %s425, 8
      %s427 = scalar_lea.vmem %s13, %s426
      %p428 = scmp.lt.s32.totalorder %s24, 1
      %s429 = scalar_select %p428, %s24, 1
      %s430 = smul.addr %s429, 8
      %s431 = scalar_lea.vmem %s0, %s430
      %p432 = scmp.lt.s32.totalorder %s24, 1
      %s433 = scalar_select %p432, %s24, 1
      %s434 = smul.addr %s433, 8
      %s435 = scalar_lea.vmem %s13, %s434
      %v436 = vld [vmem:[%s431] sm:$0xff]
      %v437 = vld [vmem:[%s1] sm:$0xff]
      %v438 = vld [vmem:[%s1 + $0x8] sm:$0xff]
      %v439 = vld [vmem:[%s1 + $0x10] sm:$0xff]
      %v440 = vld [vmem:[%s1 + $0x18] sm:$0xff]
      %v441 = vld [vmem:[%s2] sm:$0x1]
      %v443 = vlaneseq
      %v444 = vshrl.u32 %v443, 7
      %v445 = vsub.s32 0, %v444
      %v446 = vrot.slane %v441, %v445
      %vm448 = vcmask 261120
      %v450 = vsel %vm448, %v436, 0
      %452 = vmatprep.subr.mxu0 0.0
      %453 = vmatpush1.msra.mxu0 0.0
      %454 = vmatprep.subr.mxu0 0.0
      %455 = vmatpush1.msra.mxu0 0.0
      %456 = vmatprep.subr.mxu0 0.0
      %457 = vmatpush1.msra.mxu0 0.0
      %458 = vmatprep.subr.mxu0 0.0
      %459 = vmatpush1.msra.mxu0 0.0
      %460 = vmatprep.subr.mxu0 0.0
      %461 = vmatpush1.msra.mxu0 0.0
      %462 = vmatprep.subr.mxu0 0.0
      %463 = vmatpush1.msra.mxu0 0.0
      %464 = vmatprep.subr.mxu0 0.0
      %465 = vmatpush1.msra.mxu0 0.0
      %466 = vmatprep.subr.mxu0 0.0
      %467 = vmatpush1.msra.mxu0 0.0
      %468 = vmatprep.subr.mxu0 0.0
      %469 = vmatpush1.msra.mxu0 0.0
      %470 = vmatprep.subr.mxu0 0.0
      %471 = vmatpush1.msra.mxu0 0.0
      %472 = vmatprep.subr.mxu0 0.0
      %473 = vmatpush1.msra.mxu0 0.0
      %474 = vmatprep.subr.mxu0 0.0
      %475 = vmatpush1.msra.mxu0 0.0
      %476 = vmatprep.subr.mxu0 0.0
      %477 = vmatpush1.msra.mxu0 %v440
      %478 = vmatprep.subr.mxu0 0.0
      %479 = vmatpush1.msra.mxu0 %v439
      %480 = vmatprep.subr.mxu0 0.0
      %481 = vmatpush1.msra.mxu0 %v438
      %482 = vmatprep.subr.mxu0 0.0
      %483 = vmatpush1.msra.mxu0 %v437
      %484 = vmatprep.subr.mxu0 0.0
      %485 = vmatpush2.msra.mxu0 0.0
      %486 = vmatprep.subr.mxu0 0.0
      %487 = vmatpush2.msra.mxu0 0.0
      %488 = vmatprep.subr.mxu0 0.0
      %489 = vmatpush2.msra.mxu0 0.0
      %490 = vmatprep.subr.mxu0 0.0
      %491 = vmatpush2.msra.mxu0 0.0
      %492 = vmatprep.subr.mxu0 0.0
      %493 = vmatpush2.msra.mxu0 0.0
      %494 = vmatprep.subr.mxu0 0.0
      %495 = vmatpush2.msra.mxu0 0.0
      %496 = vmatprep.subr.mxu0 0.0
      %497 = vmatpush2.msra.mxu0 0.0
      %498 = vmatprep.subr.mxu0 0.0
      %499 = vmatpush2.msra.mxu0 0.0
      %500 = vmatprep.subr.mxu0 0.0
      %501 = vmatpush2.msra.mxu0 0.0
      %502 = vmatprep.subr.mxu0 0.0
      %503 = vmatpush2.msra.mxu0 0.0
      %504 = vmatprep.subr.mxu0 0.0
      %505 = vmatpush2.msra.mxu0 0.0
      %506 = vmatprep.subr.mxu0 0.0
      %507 = vmatpush2.msra.mxu0 0.0
      %508 = vmatprep.subr.mxu0 0.0
      %509 = vmatpush2.msra.mxu0 0.0
      %510 = vmatprep.subr.mxu0 0.0
      %511 = vmatpush2.msra.mxu0 0.0
      %512 = vmatprep.subr.mxu0 0.0
      %513 = vmatpush2.msra.mxu0 0.0
      %514 = vmatprep.subr.mxu0 0.0
      %515 = vmatpush2.msra.mxu0 0.0
      %516 = vmatprep.mubr.f32.mxu0 0.0
      %517 = vmatmul.mubr.f32.gmra.mxu0 %v450
      %v518 = vpop.f32.mrf.mxu0
      %v519 = vadd.f32 %v446, %v518
      %v520 = vpop.f32.mrf.mxu0
      %521 = vdwg.mxu0
      %v522 = vld [vmem:[%s3] sm:$0xff]
      %v523 = vld [vmem:[%s3 + $0x8] sm:$0xff]
      %v524 = vld [vmem:[%s3 + $0x10] sm:$0xff]
      %v525 = vld [vmem:[%s3 + $0x18] sm:$0xff]
      %527 = vrot.lane.b32.xlu0 %v519, 96
      %v528 = vpop.permute.xlu0 %527
      %vm529 = vcmask 64512
      %v530 = vsel %vm529, %v519, 0
      %v532 = vsel %vm529, %v528, 0
      %534 = vmatprep.subr.mxu0 0.0
      %535 = vmatpush1.xpose.msra.mxu0 0.0
      %536 = vmatprep.subr.mxu0 0.0
      %537 = vmatpush1.xpose.msra.mxu0 0.0
      %538 = vmatprep.subr.mxu0 0.0
      %539 = vmatpush1.xpose.msra.mxu0 0.0
      %540 = vmatprep.subr.mxu0 0.0
      %541 = vmatpush1.xpose.msra.mxu0 0.0
      %542 = vmatprep.subr.mxu0 0.0
      %543 = vmatpush1.xpose.msra.mxu0 0.0
      %544 = vmatprep.subr.mxu0 0.0
      %545 = vmatpush1.xpose.msra.mxu0 0.0
      %546 = vmatprep.subr.mxu0 0.0
      %547 = vmatpush1.xpose.msra.mxu0 0.0
      %548 = vmatprep.subr.mxu0 0.0
      %549 = vmatpush1.xpose.msra.mxu0 0.0
      %550 = vmatprep.subr.mxu0 0.0
      %551 = vmatpush1.xpose.msra.mxu0 0.0
      %552 = vmatprep.subr.mxu0 0.0
      %553 = vmatpush1.xpose.msra.mxu0 0.0
      %554 = vmatprep.subr.mxu0 0.0
      %555 = vmatpush1.xpose.msra.mxu0 0.0
      %556 = vmatprep.subr.mxu0 0.0
      %557 = vmatpush1.xpose.msra.mxu0 0.0
      %558 = vmatprep.subr.mxu0 0.0
      %559 = vmatpush1.xpose.msra.mxu0 0.0
      %560 = vmatprep.subr.mxu0 0.0
      %561 = vmatpush1.xpose.msra.mxu0 0.0
      %562 = vmatprep.subr.mxu0 0.0
      %563 = vmatpush1.xpose.msra.mxu0 0.0
      %564 = vmatprep.subr.mxu0 0.0
      %565 = vmatpush1.xpose.msra.mxu0 %v532
      %566 = vmatprep.subr.mxu0 0.0
      %567 = vmatpush2.xpose.msra.mxu0 0.0
      %568 = vmatprep.subr.mxu0 0.0
      %569 = vmatpush2.xpose.msra.mxu0 0.0
      %570 = vmatprep.subr.mxu0 0.0
      %571 = vmatpush2.xpose.msra.mxu0 0.0
      %572 = vmatprep.subr.mxu0 0.0
      %573 = vmatpush2.xpose.msra.mxu0 0.0
      %574 = vmatprep.subr.mxu0 0.0
      %575 = vmatpush2.xpose.msra.mxu0 0.0
      %576 = vmatprep.subr.mxu0 0.0
      %577 = vmatpush2.xpose.msra.mxu0 0.0
      %578 = vmatprep.subr.mxu0 0.0
      %579 = vmatpush2.xpose.msra.mxu0 0.0
      %580 = vmatprep.subr.mxu0 0.0
      %581 = vmatpush2.xpose.msra.mxu0 0.0
      %582 = vmatprep.subr.mxu0 0.0
      %583 = vmatpush2.xpose.msra.mxu0 0.0
      %584 = vmatprep.subr.mxu0 0.0
      %585 = vmatpush2.xpose.msra.mxu0 0.0
      %586 = vmatprep.subr.mxu0 0.0
      %587 = vmatpush2.xpose.msra.mxu0 0.0
      %588 = vmatprep.subr.mxu0 0.0
      %589 = vmatpush2.xpose.msra.mxu0 0.0
      %590 = vmatprep.subr.mxu0 0.0
      %591 = vmatpush2.xpose.msra.mxu0 0.0
      %592 = vmatprep.subr.mxu0 0.0
      %593 = vmatpush2.xpose.msra.mxu0 0.0
      %594 = vmatprep.subr.mxu0 0.0
      %595 = vmatpush2.xpose.msra.mxu0 0.0
      %596 = vmatprep.subr.mxu0 0.0
      %597 = vmatpush2.xpose.msra.mxu0 0.0
      %598 = vmatprep.mubr.f32.mxu0 0.0
      %599 = vmatmul.mubr.f32.gmra.mxu0 %v530
      %v600 = vpop.f32.mrf.mxu0
      %v601 = vadd.f32 0.0, %v600
      %v602 = vpop.f32.mrf.mxu0
      %603 = vdwg.mxu0
      %v604 = vmul.f32 %v601, 0.35355338
      %v605 = vsel %vm529, %v604, -inf
      %606 = vmax.xlane.f32.xlu0 %v605
      %v607 = vpop.xlane.xlu0 %606
      %v608 = vsub.f32 %v604, %v607
      %v609 = vmul.f32 %v608, 1.442695
      %v610 = vpow.pop %v609
      %v611 = vsel %vm529, %v610, 0.0
      %612 = vadd.xlane.f32.xlu0 %v611
      %v613 = vpop.xlane.xlu0 %612
      %v614 = vrcp.pop %v613
      %v615 = vmul.f32 %v610, %v614
      %616 = vrot.lane.b32.xlu0 %v519, 64
      %v617 = vpop.permute.xlu0 %616
      %v620 = vsel %vm529, %v615, 0
      %622 = vmatprep.subr.mxu0 0.0
      %623 = vmatpush1.msra.mxu0 0.0
      %624 = vmatprep.subr.mxu0 0.0
      %625 = vmatpush1.msra.mxu0 0.0
      %626 = vmatprep.subr.mxu0 0.0
      %627 = vmatpush1.msra.mxu0 0.0
      %628 = vmatprep.subr.mxu0 0.0
      %629 = vmatpush1.msra.mxu0 0.0
      %630 = vmatprep.subr.mxu0 0.0
      %631 = vmatpush1.msra.mxu0 0.0
      %632 = vmatprep.subr.mxu0 0.0
      %633 = vmatpush1.msra.mxu0 0.0
      %634 = vmatprep.subr.mxu0 0.0
      %635 = vmatpush1.msra.mxu0 0.0
      %636 = vmatprep.subr.mxu0 0.0
      %637 = vmatpush1.msra.mxu0 0.0
      %638 = vmatprep.subr.mxu0 0.0
      %639 = vmatpush1.msra.mxu0 0.0
      %640 = vmatprep.subr.mxu0 0.0
      %641 = vmatpush1.msra.mxu0 0.0
      %642 = vmatprep.subr.mxu0 0.0
      %643 = vmatpush1.msra.mxu0 0.0
      %644 = vmatprep.subr.mxu0 0.0
      %645 = vmatpush1.msra.mxu0 0.0
      %646 = vmatprep.subr.mxu0 0.0
      %647 = vmatpush1.msra.mxu0 0.0
      %648 = vmatprep.subr.mxu0 0.0
      %649 = vmatpush1.msra.mxu0 0.0
      %650 = vmatprep.subr.mxu0 0.0
      %651 = vmatpush1.msra.mxu0 0.0
      %652 = vmatprep.subr.mxu0 0.0
      %653 = vmatpush1.msra.mxu0 %v617
      %654 = vmatprep.subr.mxu0 0.0
      %655 = vmatpush2.msra.mxu0 0.0
      %656 = vmatprep.subr.mxu0 0.0
      %657 = vmatpush2.msra.mxu0 0.0
      %658 = vmatprep.subr.mxu0 0.0
      %659 = vmatpush2.msra.mxu0 0.0
      %660 = vmatprep.subr.mxu0 0.0
      %661 = vmatpush2.msra.mxu0 0.0
      %662 = vmatprep.subr.mxu0 0.0
      %663 = vmatpush2.msra.mxu0 0.0
      %664 = vmatprep.subr.mxu0 0.0
      %665 = vmatpush2.msra.mxu0 0.0
      %666 = vmatprep.subr.mxu0 0.0
      %667 = vmatpush2.msra.mxu0 0.0
      %668 = vmatprep.subr.mxu0 0.0
      %669 = vmatpush2.msra.mxu0 0.0
      %670 = vmatprep.subr.mxu0 0.0
      %671 = vmatpush2.msra.mxu0 0.0
      %672 = vmatprep.subr.mxu0 0.0
      %673 = vmatpush2.msra.mxu0 0.0
      %674 = vmatprep.subr.mxu0 0.0
      %675 = vmatpush2.msra.mxu0 0.0
      %676 = vmatprep.subr.mxu0 0.0
      %677 = vmatpush2.msra.mxu0 0.0
      %678 = vmatprep.subr.mxu0 0.0
      %679 = vmatpush2.msra.mxu0 0.0
      %680 = vmatprep.subr.mxu0 0.0
      %681 = vmatpush2.msra.mxu0 0.0
      %682 = vmatprep.subr.mxu0 0.0
      %683 = vmatpush2.msra.mxu0 0.0
      %684 = vmatprep.subr.mxu0 0.0
      %685 = vmatpush2.msra.mxu0 0.0
      %686 = vmatprep.mubr.f32.mxu0 0.0
      %687 = vmatmul.mubr.f32.gmra.mxu0 %v620
      %v688 = vpop.f32.mrf.mxu0
      %v689 = vadd.f32 0.0, %v688
      %v690 = vpop.f32.mrf.mxu0
      %691 = vdwg.mxu0
      %692 = vrot.lane.b32.xlu0 %v519, 120
      %v693 = vpop.permute.xlu0 %692
      %694 = vrot.lane.b32.xlu0 %v519, 88
      %v695 = vpop.permute.xlu0 %694
      %v696 = vsel %vm529, %v693, 0
      %v698 = vsel %vm529, %v695, 0
      %700 = vmatprep.subr.mxu0 0.0
      %701 = vmatpush1.xpose.msra.mxu0 0.0
      %702 = vmatprep.subr.mxu0 0.0
      %703 = vmatpush1.xpose.msra.mxu0 0.0
      %704 = vmatprep.subr.mxu0 0.0
      %705 = vmatpush1.xpose.msra.mxu0 0.0
      %706 = vmatprep.subr.mxu0 0.0
      %707 = vmatpush1.xpose.msra.mxu0 0.0
      %708 = vmatprep.subr.mxu0 0.0
      %709 = vmatpush1.xpose.msra.mxu0 0.0
      %710 = vmatprep.subr.mxu0 0.0
      %711 = vmatpush1.xpose.msra.mxu0 0.0
      %712 = vmatprep.subr.mxu0 0.0
      %713 = vmatpush1.xpose.msra.mxu0 0.0
      %714 = vmatprep.subr.mxu0 0.0
      %715 = vmatpush1.xpose.msra.mxu0 0.0
      %716 = vmatprep.subr.mxu0 0.0
      %717 = vmatpush1.xpose.msra.mxu0 0.0
      %718 = vmatprep.subr.mxu0 0.0
      %719 = vmatpush1.xpose.msra.mxu0 0.0
      %720 = vmatprep.subr.mxu0 0.0
      %721 = vmatpush1.xpose.msra.mxu0 0.0
      %722 = vmatprep.subr.mxu0 0.0
      %723 = vmatpush1.xpose.msra.mxu0 0.0
      %724 = vmatprep.subr.mxu0 0.0
      %725 = vmatpush1.xpose.msra.mxu0 0.0
      %726 = vmatprep.subr.mxu0 0.0
      %727 = vmatpush1.xpose.msra.mxu0 0.0
      %728 = vmatprep.subr.mxu0 0.0
      %729 = vmatpush1.xpose.msra.mxu0 0.0
      %730 = vmatprep.subr.mxu0 0.0
      %731 = vmatpush1.xpose.msra.mxu0 %v698
      %732 = vmatprep.subr.mxu0 0.0
      %733 = vmatpush2.xpose.msra.mxu0 0.0
      %734 = vmatprep.subr.mxu0 0.0
      %735 = vmatpush2.xpose.msra.mxu0 0.0
      %736 = vmatprep.subr.mxu0 0.0
      %737 = vmatpush2.xpose.msra.mxu0 0.0
      %738 = vmatprep.subr.mxu0 0.0
      %739 = vmatpush2.xpose.msra.mxu0 0.0
      %740 = vmatprep.subr.mxu0 0.0
      %741 = vmatpush2.xpose.msra.mxu0 0.0
      %742 = vmatprep.subr.mxu0 0.0
      %743 = vmatpush2.xpose.msra.mxu0 0.0
      %744 = vmatprep.subr.mxu0 0.0
      %745 = vmatpush2.xpose.msra.mxu0 0.0
      %746 = vmatprep.subr.mxu0 0.0
      %747 = vmatpush2.xpose.msra.mxu0 0.0
      %748 = vmatprep.subr.mxu0 0.0
      %749 = vmatpush2.xpose.msra.mxu0 0.0
      %750 = vmatprep.subr.mxu0 0.0
      %751 = vmatpush2.xpose.msra.mxu0 0.0
      %752 = vmatprep.subr.mxu0 0.0
      %753 = vmatpush2.xpose.msra.mxu0 0.0
      %754 = vmatprep.subr.mxu0 0.0
      %755 = vmatpush2.xpose.msra.mxu0 0.0
      %756 = vmatprep.subr.mxu0 0.0
      %757 = vmatpush2.xpose.msra.mxu0 0.0
      %758 = vmatprep.subr.mxu0 0.0
      %759 = vmatpush2.xpose.msra.mxu0 0.0
      %760 = vmatprep.subr.mxu0 0.0
      %761 = vmatpush2.xpose.msra.mxu0 0.0
      %762 = vmatprep.subr.mxu0 0.0
      %763 = vmatpush2.xpose.msra.mxu0 0.0
      %764 = vmatprep.mubr.f32.mxu0 0.0
      %765 = vmatmul.mubr.f32.gmra.mxu0 %v696
      %v766 = vpop.f32.mrf.mxu0
      %v767 = vadd.f32 0.0, %v766
      %v768 = vpop.f32.mrf.mxu0
      %769 = vdwg.mxu0
      %v770 = vmul.f32 %v767, 0.35355338
      %v771 = vsel %vm529, %v770, -inf
      %772 = vmax.xlane.f32.xlu0 %v771
      %v773 = vpop.xlane.xlu0 %772
      %v774 = vsub.f32 %v770, %v773
      %v775 = vmul.f32 %v774, 1.442695
      %v776 = vpow.pop %v775
      %v777 = vsel %vm529, %v776, 0.0
      %778 = vadd.xlane.f32.xlu0 %v777
      %v779 = vpop.xlane.xlu0 %778
      %v780 = vrcp.pop %v779
      %v781 = vmul.f32 %v776, %v780
      %782 = vrot.lane.b32.xlu0 %v519, 56
      %v783 = vpop.permute.xlu0 %782
      %v786 = vsel %vm529, %v781, 0
      %788 = vmatprep.subr.mxu0 0.0
      %789 = vmatpush1.msra.mxu0 0.0
      %790 = vmatprep.subr.mxu0 0.0
      %791 = vmatpush1.msra.mxu0 0.0
      %792 = vmatprep.subr.mxu0 0.0
      %793 = vmatpush1.msra.mxu0 0.0
      %794 = vmatprep.subr.mxu0 0.0
      %795 = vmatpush1.msra.mxu0 0.0
      %796 = vmatprep.subr.mxu0 0.0
      %797 = vmatpush1.msra.mxu0 0.0
      %798 = vmatprep.subr.mxu0 0.0
      %799 = vmatpush1.msra.mxu0 0.0
      %800 = vmatprep.subr.mxu0 0.0
      %801 = vmatpush1.msra.mxu0 0.0
      %802 = vmatprep.subr.mxu0 0.0
      %803 = vmatpush1.msra.mxu0 0.0
      %804 = vmatprep.subr.mxu0 0.0
      %805 = vmatpush1.msra.mxu0 0.0
      %806 = vmatprep.subr.mxu0 0.0
      %807 = vmatpush1.msra.mxu0 0.0
      %808 = vmatprep.subr.mxu0 0.0
      %809 = vmatpush1.msra.mxu0 0.0
      %810 = vmatprep.subr.mxu0 0.0
      %811 = vmatpush1.msra.mxu0 0.0
      %812 = vmatprep.subr.mxu0 0.0
      %813 = vmatpush1.msra.mxu0 0.0
      %814 = vmatprep.subr.mxu0 0.0
      %815 = vmatpush1.msra.mxu0 0.0
      %816 = vmatprep.subr.mxu0 0.0
      %817 = vmatpush1.msra.mxu0 0.0
      %818 = vmatprep.subr.mxu0 0.0
      %819 = vmatpush1.msra.mxu0 %v783
      %820 = vmatprep.subr.mxu0 0.0
      %821 = vmatpush2.msra.mxu0 0.0
      %822 = vmatprep.subr.mxu0 0.0
      %823 = vmatpush2.msra.mxu0 0.0
      %824 = vmatprep.subr.mxu0 0.0
      %825 = vmatpush2.msra.mxu0 0.0
      %826 = vmatprep.subr.mxu0 0.0
      %827 = vmatpush2.msra.mxu0 0.0
      %828 = vmatprep.subr.mxu0 0.0
      %829 = vmatpush2.msra.mxu0 0.0
      %830 = vmatprep.subr.mxu0 0.0
      %831 = vmatpush2.msra.mxu0 0.0
      %832 = vmatprep.subr.mxu0 0.0
      %833 = vmatpush2.msra.mxu0 0.0
      %834 = vmatprep.subr.mxu0 0.0
      %835 = vmatpush2.msra.mxu0 0.0
      %836 = vmatprep.subr.mxu0 0.0
      %837 = vmatpush2.msra.mxu0 0.0
      %838 = vmatprep.subr.mxu0 0.0
      %839 = vmatpush2.msra.mxu0 0.0
      %840 = vmatprep.subr.mxu0 0.0
      %841 = vmatpush2.msra.mxu0 0.0
      %842 = vmatprep.subr.mxu0 0.0
      %843 = vmatpush2.msra.mxu0 0.0
      %844 = vmatprep.subr.mxu0 0.0
      %845 = vmatpush2.msra.mxu0 0.0
      %846 = vmatprep.subr.mxu0 0.0
      %847 = vmatpush2.msra.mxu0 0.0
      %848 = vmatprep.subr.mxu0 0.0
      %849 = vmatpush2.msra.mxu0 0.0
      %850 = vmatprep.subr.mxu0 0.0
      %851 = vmatpush2.msra.mxu0 0.0
      %852 = vmatprep.mubr.f32.mxu0 0.0
      %853 = vmatmul.mubr.f32.gmra.mxu0 %v786
      %v854 = vpop.f32.mrf.mxu0
      %v855 = vadd.f32 0.0, %v854
      %v856 = vpop.f32.mrf.mxu0
      %857 = vdwg.mxu0
      %v859 = vsel %vm529, %v855, 0
      %861 = vmatprep.subr.mxu0 0.0
      %862 = vmatpush1.msra.mxu0 0.0
      %863 = vmatprep.subr.mxu0 0.0
      %864 = vmatpush1.msra.mxu0 0.0
      %865 = vmatprep.subr.mxu0 0.0
      %866 = vmatpush1.msra.mxu0 0.0
      %867 = vmatprep.subr.mxu0 0.0
      %868 = vmatpush1.msra.mxu0 0.0
      %869 = vmatprep.subr.mxu0 0.0
      %870 = vmatpush1.msra.mxu0 0.0
      %871 = vmatprep.subr.mxu0 0.0
      %872 = vmatpush1.msra.mxu0 0.0
      %873 = vmatprep.subr.mxu0 0.0
      %874 = vmatpush1.msra.mxu0 0.0
      %875 = vmatprep.subr.mxu0 0.0
      %876 = vmatpush1.msra.mxu0 0.0
      %877 = vmatprep.subr.mxu0 0.0
      %878 = vmatpush1.msra.mxu0 0.0
      %879 = vmatprep.subr.mxu0 0.0
      %880 = vmatpush1.msra.mxu0 0.0
      %881 = vmatprep.subr.mxu0 0.0
      %882 = vmatpush1.msra.mxu0 0.0
      %883 = vmatprep.subr.mxu0 0.0
      %884 = vmatpush1.msra.mxu0 0.0
      %885 = vmatprep.subr.mxu0 0.0
      %886 = vmatpush1.msra.mxu0 0.0
      %887 = vmatprep.subr.mxu0 0.0
      %888 = vmatpush1.msra.mxu0 0.0
      %889 = vmatprep.subr.mxu0 0.0
      %890 = vmatpush1.msra.mxu0 0.0
      %891 = vmatprep.subr.mxu0 0.0
      %892 = vmatpush1.msra.mxu0 %v523
      %893 = vmatprep.subr.mxu0 0.0
      %894 = vmatpush2.msra.mxu0 0.0
      %895 = vmatprep.subr.mxu0 0.0
      %896 = vmatpush2.msra.mxu0 0.0
      %897 = vmatprep.subr.mxu0 0.0
      %898 = vmatpush2.msra.mxu0 0.0
      %899 = vmatprep.subr.mxu0 0.0
      %900 = vmatpush2.msra.mxu0 0.0
      %901 = vmatprep.subr.mxu0 0.0
      %902 = vmatpush2.msra.mxu0 0.0
      %903 = vmatprep.subr.mxu0 0.0
      %904 = vmatpush2.msra.mxu0 0.0
      %905 = vmatprep.subr.mxu0 0.0
      %906 = vmatpush2.msra.mxu0 0.0
      %907 = vmatprep.subr.mxu0 0.0
      %908 = vmatpush2.msra.mxu0 0.0
      %909 = vmatprep.subr.mxu0 0.0
      %910 = vmatpush2.msra.mxu0 0.0
      %911 = vmatprep.subr.mxu0 0.0
      %912 = vmatpush2.msra.mxu0 0.0
      %913 = vmatprep.subr.mxu0 0.0
      %914 = vmatpush2.msra.mxu0 0.0
      %915 = vmatprep.subr.mxu0 0.0
      %916 = vmatpush2.msra.mxu0 0.0
      %917 = vmatprep.subr.mxu0 0.0
      %918 = vmatpush2.msra.mxu0 0.0
      %919 = vmatprep.subr.mxu0 0.0
      %920 = vmatpush2.msra.mxu0 0.0
      %921 = vmatprep.subr.mxu0 0.0
      %922 = vmatpush2.msra.mxu0 0.0
      %923 = vmatprep.subr.mxu0 0.0
      %924 = vmatpush2.msra.mxu0 0.0
      %925 = vmatprep.mubr.f32.mxu0 0.0
      %926 = vmatmul.mubr.f32.gmra.mxu0 %v859
      %v927 = vpop.f32.mrf.mxu0
      %v928 = vadd.f32 0.0, %v927
      %v929 = vpop.f32.mrf.mxu0
      %930 = vdwg.mxu0
      %v932 = vsel %vm529, %v689, 0
      %934 = vmatprep.subr.mxu0 0.0
      %935 = vmatpush1.msra.mxu0 0.0
      %936 = vmatprep.subr.mxu0 0.0
      %937 = vmatpush1.msra.mxu0 0.0
      %938 = vmatprep.subr.mxu0 0.0
      %939 = vmatpush1.msra.mxu0 0.0
      %940 = vmatprep.subr.mxu0 0.0
      %941 = vmatpush1.msra.mxu0 0.0
      %942 = vmatprep.subr.mxu0 0.0
      %943 = vmatpush1.msra.mxu0 0.0
      %944 = vmatprep.subr.mxu0 0.0
      %945 = vmatpush1.msra.mxu0 0.0
      %946 = vmatprep.subr.mxu0 0.0
      %947 = vmatpush1.msra.mxu0 0.0
      %948 = vmatprep.subr.mxu0 0.0
      %949 = vmatpush1.msra.mxu0 0.0
      %950 = vmatprep.subr.mxu0 0.0
      %951 = vmatpush1.msra.mxu0 0.0
      %952 = vmatprep.subr.mxu0 0.0
      %953 = vmatpush1.msra.mxu0 0.0
      %954 = vmatprep.subr.mxu0 0.0
      %955 = vmatpush1.msra.mxu0 0.0
      %956 = vmatprep.subr.mxu0 0.0
      %957 = vmatpush1.msra.mxu0 0.0
      %958 = vmatprep.subr.mxu0 0.0
      %959 = vmatpush1.msra.mxu0 0.0
      %960 = vmatprep.subr.mxu0 0.0
      %961 = vmatpush1.msra.mxu0 0.0
      %962 = vmatprep.subr.mxu0 0.0
      %963 = vmatpush1.msra.mxu0 0.0
      %964 = vmatprep.subr.mxu0 0.0
      %965 = vmatpush1.msra.mxu0 %v522
      %966 = vmatprep.subr.mxu0 0.0
      %967 = vmatpush2.msra.mxu0 0.0
      %968 = vmatprep.subr.mxu0 0.0
      %969 = vmatpush2.msra.mxu0 0.0
      %970 = vmatprep.subr.mxu0 0.0
      %971 = vmatpush2.msra.mxu0 0.0
      %972 = vmatprep.subr.mxu0 0.0
      %973 = vmatpush2.msra.mxu0 0.0
      %974 = vmatprep.subr.mxu0 0.0
      %975 = vmatpush2.msra.mxu0 0.0
      %976 = vmatprep.subr.mxu0 0.0
      %977 = vmatpush2.msra.mxu0 0.0
      %978 = vmatprep.subr.mxu0 0.0
      %979 = vmatpush2.msra.mxu0 0.0
      %980 = vmatprep.subr.mxu0 0.0
      %981 = vmatpush2.msra.mxu0 0.0
      %982 = vmatprep.subr.mxu0 0.0
      %983 = vmatpush2.msra.mxu0 0.0
      %984 = vmatprep.subr.mxu0 0.0
      %985 = vmatpush2.msra.mxu0 0.0
      %986 = vmatprep.subr.mxu0 0.0
      %987 = vmatpush2.msra.mxu0 0.0
      %988 = vmatprep.subr.mxu0 0.0
      %989 = vmatpush2.msra.mxu0 0.0
      %990 = vmatprep.subr.mxu0 0.0
      %991 = vmatpush2.msra.mxu0 0.0
      %992 = vmatprep.subr.mxu0 0.0
      %993 = vmatpush2.msra.mxu0 0.0
      %994 = vmatprep.subr.mxu0 0.0
      %995 = vmatpush2.msra.mxu0 0.0
      %996 = vmatprep.subr.mxu0 0.0
      %997 = vmatpush2.msra.mxu0 0.0
      %998 = vmatprep.mubr.f32.mxu0 0.0
      %999 = vmatmul.mubr.f32.gmra.mxu0 %v932
      %v1000 = vpop.f32.mrf.mxu0
      %v1001 = vadd.f32 %v928, %v1000
      %v1002 = vpop.f32.mrf.mxu0
      %1003 = vdwg.mxu0
      %1004 = vrot.lane.b32.xlu0 %v519, 112
      %v1005 = vpop.permute.xlu0 %1004
      %1006 = vrot.lane.b32.xlu0 %v519, 80
      %v1007 = vpop.permute.xlu0 %1006
      %v1008 = vsel %vm529, %v1005, 0
      %v1010 = vsel %vm529, %v1007, 0
      %1012 = vmatprep.subr.mxu0 0.0
      %1013 = vmatpush1.xpose.msra.mxu0 0.0
      %1014 = vmatprep.subr.mxu0 0.0
      %1015 = vmatpush1.xpose.msra.mxu0 0.0
      %1016 = vmatprep.subr.mxu0 0.0
      %1017 = vmatpush1.xpose.msra.mxu0 0.0
      %1018 = vmatprep.subr.mxu0 0.0
      %1019 = vmatpush1.xpose.msra.mxu0 0.0
      %1020 = vmatprep.subr.mxu0 0.0
      %1021 = vmatpush1.xpose.msra.mxu0 0.0
      %1022 = vmatprep.subr.mxu0 0.0
      %1023 = vmatpush1.xpose.msra.mxu0 0.0
      %1024 = vmatprep.subr.mxu0 0.0
      %1025 = vmatpush1.xpose.msra.mxu0 0.0
      %1026 = vmatprep.subr.mxu0 0.0
      %1027 = vmatpush1.xpose.msra.mxu0 0.0
      %1028 = vmatprep.subr.mxu0 0.0
      %1029 = vmatpush1.xpose.msra.mxu0 0.0
      %1030 = vmatprep.subr.mxu0 0.0
      %1031 = vmatpush1.xpose.msra.mxu0 0.0
      %1032 = vmatprep.subr.mxu0 0.0
      %1033 = vmatpush1.xpose.msra.mxu0 0.0
      %1034 = vmatprep.subr.mxu0 0.0
      %1035 = vmatpush1.xpose.msra.mxu0 0.0
      %1036 = vmatprep.subr.mxu0 0.0
      %1037 = vmatpush1.xpose.msra.mxu0 0.0
      %1038 = vmatprep.subr.mxu0 0.0
      %1039 = vmatpush1.xpose.msra.mxu0 0.0
      %1040 = vmatprep.subr.mxu0 0.0
      %1041 = vmatpush1.xpose.msra.mxu0 0.0
      %1042 = vmatprep.subr.mxu0 0.0
      %1043 = vmatpush1.xpose.msra.mxu0 %v1010
      %1044 = vmatprep.subr.mxu0 0.0
      %1045 = vmatpush2.xpose.msra.mxu0 0.0
      %1046 = vmatprep.subr.mxu0 0.0
      %1047 = vmatpush2.xpose.msra.mxu0 0.0
      %1048 = vmatprep.subr.mxu0 0.0
      %1049 = vmatpush2.xpose.msra.mxu0 0.0
      %1050 = vmatprep.subr.mxu0 0.0
      %1051 = vmatpush2.xpose.msra.mxu0 0.0
      %1052 = vmatprep.subr.mxu0 0.0
      %1053 = vmatpush2.xpose.msra.mxu0 0.0
      %1054 = vmatprep.subr.mxu0 0.0
      %1055 = vmatpush2.xpose.msra.mxu0 0.0
      %1056 = vmatprep.subr.mxu0 0.0
      %1057 = vmatpush2.xpose.msra.mxu0 0.0
      %1058 = vmatprep.subr.mxu0 0.0
      %1059 = vmatpush2.xpose.msra.mxu0 0.0
      %1060 = vmatprep.subr.mxu0 0.0
      %1061 = vmatpush2.xpose.msra.mxu0 0.0
      %1062 = vmatprep.subr.mxu0 0.0
      %1063 = vmatpush2.xpose.msra.mxu0 0.0
      %1064 = vmatprep.subr.mxu0 0.0
      %1065 = vmatpush2.xpose.msra.mxu0 0.0
      %1066 = vmatprep.subr.mxu0 0.0
      %1067 = vmatpush2.xpose.msra.mxu0 0.0
      %1068 = vmatprep.subr.mxu0 0.0
      %1069 = vmatpush2.xpose.msra.mxu0 0.0
      %1070 = vmatprep.subr.mxu0 0.0
      %1071 = vmatpush2.xpose.msra.mxu0 0.0
      %1072 = vmatprep.subr.mxu0 0.0
      %1073 = vmatpush2.xpose.msra.mxu0 0.0
      %1074 = vmatprep.subr.mxu0 0.0
      %1075 = vmatpush2.xpose.msra.mxu0 0.0
      %1076 = vmatprep.mubr.f32.mxu0 0.0
      %1077 = vmatmul.mubr.f32.gmra.mxu0 %v1008
      %v1078 = vpop.f32.mrf.mxu0
      %v1079 = vadd.f32 0.0, %v1078
      %v1080 = vpop.f32.mrf.mxu0
      %1081 = vdwg.mxu0
      %v1082 = vmul.f32 %v1079, 0.35355338
      %v1083 = vsel %vm529, %v1082, -inf
      %1084 = vmax.xlane.f32.xlu0 %v1083
      %v1085 = vpop.xlane.xlu0 %1084
      %v1086 = vsub.f32 %v1082, %v1085
      %v1087 = vmul.f32 %v1086, 1.442695
      %v1088 = vpow.pop %v1087
      %v1089 = vsel %vm529, %v1088, 0.0
      %1090 = vadd.xlane.f32.xlu0 %v1089
      %v1091 = vpop.xlane.xlu0 %1090
      %v1092 = vrcp.pop %v1091
      %v1093 = vmul.f32 %v1088, %v1092
      %1094 = vrot.lane.b32.xlu0 %v519, 48
      %v1095 = vpop.permute.xlu0 %1094
      %v1098 = vsel %vm529, %v1093, 0
      %1100 = vmatprep.subr.mxu0 0.0
      %1101 = vmatpush1.msra.mxu0 0.0
      %1102 = vmatprep.subr.mxu0 0.0
      %1103 = vmatpush1.msra.mxu0 0.0
      %1104 = vmatprep.subr.mxu0 0.0
      %1105 = vmatpush1.msra.mxu0 0.0
      %1106 = vmatprep.subr.mxu0 0.0
      %1107 = vmatpush1.msra.mxu0 0.0
      %1108 = vmatprep.subr.mxu0 0.0
      %1109 = vmatpush1.msra.mxu0 0.0
      %1110 = vmatprep.subr.mxu0 0.0
      %1111 = vmatpush1.msra.mxu0 0.0
      %1112 = vmatprep.subr.mxu0 0.0
      %1113 = vmatpush1.msra.mxu0 0.0
      %1114 = vmatprep.subr.mxu0 0.0
      %1115 = vmatpush1.msra.mxu0 0.0
      %1116 = vmatprep.subr.mxu0 0.0
      %1117 = vmatpush1.msra.mxu0 0.0
      %1118 = vmatprep.subr.mxu0 0.0
      %1119 = vmatpush1.msra.mxu0 0.0
      %1120 = vmatprep.subr.mxu0 0.0
      %1121 = vmatpush1.msra.mxu0 0.0
      %1122 = vmatprep.subr.mxu0 0.0
      %1123 = vmatpush1.msra.mxu0 0.0
      %1124 = vmatprep.subr.mxu0 0.0
      %1125 = vmatpush1.msra.mxu0 0.0
      %1126 = vmatprep.subr.mxu0 0.0
      %1127 = vmatpush1.msra.mxu0 0.0
      %1128 = vmatprep.subr.mxu0 0.0
      %1129 = vmatpush1.msra.mxu0 0.0
      %1130 = vmatprep.subr.mxu0 0.0
      %1131 = vmatpush1.msra.mxu0 %v1095
      %1132 = vmatprep.subr.mxu0 0.0
      %1133 = vmatpush2.msra.mxu0 0.0
      %1134 = vmatprep.subr.mxu0 0.0
      %1135 = vmatpush2.msra.mxu0 0.0
      %1136 = vmatprep.subr.mxu0 0.0
      %1137 = vmatpush2.msra.mxu0 0.0
      %1138 = vmatprep.subr.mxu0 0.0
      %1139 = vmatpush2.msra.mxu0 0.0
      %1140 = vmatprep.subr.mxu0 0.0
      %1141 = vmatpush2.msra.mxu0 0.0
      %1142 = vmatprep.subr.mxu0 0.0
      %1143 = vmatpush2.msra.mxu0 0.0
      %1144 = vmatprep.subr.mxu0 0.0
      %1145 = vmatpush2.msra.mxu0 0.0
      %1146 = vmatprep.subr.mxu0 0.0
      %1147 = vmatpush2.msra.mxu0 0.0
      %1148 = vmatprep.subr.mxu0 0.0
      %1149 = vmatpush2.msra.mxu0 0.0
      %1150 = vmatprep.subr.mxu0 0.0
      %1151 = vmatpush2.msra.mxu0 0.0
      %1152 = vmatprep.subr.mxu0 0.0
      %1153 = vmatpush2.msra.mxu0 0.0
      %1154 = vmatprep.subr.mxu0 0.0
      %1155 = vmatpush2.msra.mxu0 0.0
      %1156 = vmatprep.subr.mxu0 0.0
      %1157 = vmatpush2.msra.mxu0 0.0
      %1158 = vmatprep.subr.mxu0 0.0
      %1159 = vmatpush2.msra.mxu0 0.0
      %1160 = vmatprep.subr.mxu0 0.0
      %1161 = vmatpush2.msra.mxu0 0.0
      %1162 = vmatprep.subr.mxu0 0.0
      %1163 = vmatpush2.msra.mxu0 0.0
      %1164 = vmatprep.mubr.f32.mxu0 0.0
      %1165 = vmatmul.mubr.f32.gmra.mxu0 %v1098
      %v1166 = vpop.f32.mrf.mxu0
      %v1167 = vadd.f32 0.0, %v1166
      %v1168 = vpop.f32.mrf.mxu0
      %1169 = vdwg.mxu0
      %v1171 = vsel %vm529, %v1167, 0
      %1173 = vmatprep.subr.mxu0 0.0
      %1174 = vmatpush1.msra.mxu0 0.0
      %1175 = vmatprep.subr.mxu0 0.0
      %1176 = vmatpush1.msra.mxu0 0.0
      %1177 = vmatprep.subr.mxu0 0.0
      %1178 = vmatpush1.msra.mxu0 0.0
      %1179 = vmatprep.subr.mxu0 0.0
      %1180 = vmatpush1.msra.mxu0 0.0
      %1181 = vmatprep.subr.mxu0 0.0
      %1182 = vmatpush1.msra.mxu0 0.0
      %1183 = vmatprep.subr.mxu0 0.0
      %1184 = vmatpush1.msra.mxu0 0.0
      %1185 = vmatprep.subr.mxu0 0.0
      %1186 = vmatpush1.msra.mxu0 0.0
      %1187 = vmatprep.subr.mxu0 0.0
      %1188 = vmatpush1.msra.mxu0 0.0
      %1189 = vmatprep.subr.mxu0 0.0
      %1190 = vmatpush1.msra.mxu0 0.0
      %1191 = vmatprep.subr.mxu0 0.0
      %1192 = vmatpush1.msra.mxu0 0.0
      %1193 = vmatprep.subr.mxu0 0.0
      %1194 = vmatpush1.msra.mxu0 0.0
      %1195 = vmatprep.subr.mxu0 0.0
      %1196 = vmatpush1.msra.mxu0 0.0
      %1197 = vmatprep.subr.mxu0 0.0
      %1198 = vmatpush1.msra.mxu0 0.0
      %1199 = vmatprep.subr.mxu0 0.0
      %1200 = vmatpush1.msra.mxu0 0.0
      %1201 = vmatprep.subr.mxu0 0.0
      %1202 = vmatpush1.msra.mxu0 0.0
      %1203 = vmatprep.subr.mxu0 0.0
      %1204 = vmatpush1.msra.mxu0 %v524
      %1205 = vmatprep.subr.mxu0 0.0
      %1206 = vmatpush2.msra.mxu0 0.0
      %1207 = vmatprep.subr.mxu0 0.0
      %1208 = vmatpush2.msra.mxu0 0.0
      %1209 = vmatprep.subr.mxu0 0.0
      %1210 = vmatpush2.msra.mxu0 0.0
      %1211 = vmatprep.subr.mxu0 0.0
      %1212 = vmatpush2.msra.mxu0 0.0
      %1213 = vmatprep.subr.mxu0 0.0
      %1214 = vmatpush2.msra.mxu0 0.0
      %1215 = vmatprep.subr.mxu0 0.0
      %1216 = vmatpush2.msra.mxu0 0.0
      %1217 = vmatprep.subr.mxu0 0.0
      %1218 = vmatpush2.msra.mxu0 0.0
      %1219 = vmatprep.subr.mxu0 0.0
      %1220 = vmatpush2.msra.mxu0 0.0
      %1221 = vmatprep.subr.mxu0 0.0
      %1222 = vmatpush2.msra.mxu0 0.0
      %1223 = vmatprep.subr.mxu0 0.0
      %1224 = vmatpush2.msra.mxu0 0.0
      %1225 = vmatprep.subr.mxu0 0.0
      %1226 = vmatpush2.msra.mxu0 0.0
      %1227 = vmatprep.subr.mxu0 0.0
      %1228 = vmatpush2.msra.mxu0 0.0
      %1229 = vmatprep.subr.mxu0 0.0
      %1230 = vmatpush2.msra.mxu0 0.0
      %1231 = vmatprep.subr.mxu0 0.0
      %1232 = vmatpush2.msra.mxu0 0.0
      %1233 = vmatprep.subr.mxu0 0.0
      %1234 = vmatpush2.msra.mxu0 0.0
      %1235 = vmatprep.subr.mxu0 0.0
      %1236 = vmatpush2.msra.mxu0 0.0
      %1237 = vmatprep.mubr.f32.mxu0 0.0
      %1238 = vmatmul.mubr.f32.gmra.mxu0 %v1171
      %v1239 = vpop.f32.mrf.mxu0
      %v1240 = vadd.f32 0.0, %v1239
      %v1241 = vpop.f32.mrf.mxu0
      %1242 = vdwg.mxu0
      %v1243 = vadd.f32 %v1001, %v1240
      %1244 = vrot.lane.b32.xlu0 %v519, 104
      %v1245 = vpop.permute.xlu0 %1244
      %1246 = vrot.lane.b32.xlu0 %v519, 72
      %v1247 = vpop.permute.xlu0 %1246
      %v1248 = vsel %vm529, %v1245, 0
      %v1250 = vsel %vm529, %v1247, 0
      %1252 = vmatprep.subr.mxu0 0.0
      %1253 = vmatpush1.xpose.msra.mxu0 0.0
      %1254 = vmatprep.subr.mxu0 0.0
      %1255 = vmatpush1.xpose.msra.mxu0 0.0
      %1256 = vmatprep.subr.mxu0 0.0
      %1257 = vmatpush1.xpose.msra.mxu0 0.0
      %1258 = vmatprep.subr.mxu0 0.0
      %1259 = vmatpush1.xpose.msra.mxu0 0.0
      %1260 = vmatprep.subr.mxu0 0.0
      %1261 = vmatpush1.xpose.msra.mxu0 0.0
      %1262 = vmatprep.subr.mxu0 0.0
      %1263 = vmatpush1.xpose.msra.mxu0 0.0
      %1264 = vmatprep.subr.mxu0 0.0
      %1265 = vmatpush1.xpose.msra.mxu0 0.0
      %1266 = vmatprep.subr.mxu0 0.0
      %1267 = vmatpush1.xpose.msra.mxu0 0.0
      %1268 = vmatprep.subr.mxu0 0.0
      %1269 = vmatpush1.xpose.msra.mxu0 0.0
      %1270 = vmatprep.subr.mxu0 0.0
      %1271 = vmatpush1.xpose.msra.mxu0 0.0
      %1272 = vmatprep.subr.mxu0 0.0
      %1273 = vmatpush1.xpose.msra.mxu0 0.0
      %1274 = vmatprep.subr.mxu0 0.0
      %1275 = vmatpush1.xpose.msra.mxu0 0.0
      %1276 = vmatprep.subr.mxu0 0.0
      %1277 = vmatpush1.xpose.msra.mxu0 0.0
      %1278 = vmatprep.subr.mxu0 0.0
      %1279 = vmatpush1.xpose.msra.mxu0 0.0
      %1280 = vmatprep.subr.mxu0 0.0
      %1281 = vmatpush1.xpose.msra.mxu0 0.0
      %1282 = vmatprep.subr.mxu0 0.0
      %1283 = vmatpush1.xpose.msra.mxu0 %v1250
      %1284 = vmatprep.subr.mxu0 0.0
      %1285 = vmatpush2.xpose.msra.mxu0 0.0
      %1286 = vmatprep.subr.mxu0 0.0
      %1287 = vmatpush2.xpose.msra.mxu0 0.0
      %1288 = vmatprep.subr.mxu0 0.0
      %1289 = vmatpush2.xpose.msra.mxu0 0.0
      %1290 = vmatprep.subr.mxu0 0.0
      %1291 = vmatpush2.xpose.msra.mxu0 0.0
      %1292 = vmatprep.subr.mxu0 0.0
      %1293 = vmatpush2.xpose.msra.mxu0 0.0
      %1294 = vmatprep.subr.mxu0 0.0
      %1295 = vmatpush2.xpose.msra.mxu0 0.0
      %1296 = vmatprep.subr.mxu0 0.0
      %1297 = vmatpush2.xpose.msra.mxu0 0.0
      %1298 = vmatprep.subr.mxu0 0.0
      %1299 = vmatpush2.xpose.msra.mxu0 0.0
      %1300 = vmatprep.subr.mxu0 0.0
      %1301 = vmatpush2.xpose.msra.mxu0 0.0
      %1302 = vmatprep.subr.mxu0 0.0
      %1303 = vmatpush2.xpose.msra.mxu0 0.0
      %1304 = vmatprep.subr.mxu0 0.0
      %1305 = vmatpush2.xpose.msra.mxu0 0.0
      %1306 = vmatprep.subr.mxu0 0.0
      %1307 = vmatpush2.xpose.msra.mxu0 0.0
      %1308 = vmatprep.subr.mxu0 0.0
      %1309 = vmatpush2.xpose.msra.mxu0 0.0
      %1310 = vmatprep.subr.mxu0 0.0
      %1311 = vmatpush2.xpose.msra.mxu0 0.0
      %1312 = vmatprep.subr.mxu0 0.0
      %1313 = vmatpush2.xpose.msra.mxu0 0.0
      %1314 = vmatprep.subr.mxu0 0.0
      %1315 = vmatpush2.xpose.msra.mxu0 0.0
      %1316 = vmatprep.mubr.f32.mxu0 0.0
      %1317 = vmatmul.mubr.f32.gmra.mxu0 %v1248
      %v1318 = vpop.f32.mrf.mxu0
      %v1319 = vadd.f32 0.0, %v1318
      %v1320 = vpop.f32.mrf.mxu0
      %1321 = vdwg.mxu0
      %v1322 = vmul.f32 %v1319, 0.35355338
      %v1323 = vsel %vm529, %v1322, -inf
      %1324 = vmax.xlane.f32.xlu0 %v1323
      %v1325 = vpop.xlane.xlu0 %1324
      %v1326 = vsub.f32 %v1322, %v1325
      %v1327 = vmul.f32 %v1326, 1.442695
      %v1328 = vpow.pop %v1327
      %v1329 = vsel %vm529, %v1328, 0.0
      %1330 = vadd.xlane.f32.xlu0 %v1329
      %v1331 = vpop.xlane.xlu0 %1330
      %v1332 = vrcp.pop %v1331
      %v1333 = vmul.f32 %v1328, %v1332
      %1334 = vrot.lane.b32.xlu0 %v519, 40
      %v1335 = vpop.permute.xlu0 %1334
      %v1338 = vsel %vm529, %v1333, 0
      %1340 = vmatprep.subr.mxu0 0.0
      %1341 = vmatpush1.msra.mxu0 0.0
      %1342 = vmatprep.subr.mxu0 0.0
      %1343 = vmatpush1.msra.mxu0 0.0
      %1344 = vmatprep.subr.mxu0 0.0
      %1345 = vmatpush1.msra.mxu0 0.0
      %1346 = vmatprep.subr.mxu0 0.0
      %1347 = vmatpush1.msra.mxu0 0.0
      %1348 = vmatprep.subr.mxu0 0.0
      %1349 = vmatpush1.msra.mxu0 0.0
      %1350 = vmatprep.subr.mxu0 0.0
      %1351 = vmatpush1.msra.mxu0 0.0
      %1352 = vmatprep.subr.mxu0 0.0
      %1353 = vmatpush1.msra.mxu0 0.0
      %1354 = vmatprep.subr.mxu0 0.0
      %1355 = vmatpush1.msra.mxu0 0.0
      %1356 = vmatprep.subr.mxu0 0.0
      %1357 = vmatpush1.msra.mxu0 0.0
      %1358 = vmatprep.subr.mxu0 0.0
      %1359 = vmatpush1.msra.mxu0 0.0
      %1360 = vmatprep.subr.mxu0 0.0
      %1361 = vmatpush1.msra.mxu0 0.0
      %1362 = vmatprep.subr.mxu0 0.0
      %1363 = vmatpush1.msra.mxu0 0.0
      %1364 = vmatprep.subr.mxu0 0.0
      %1365 = vmatpush1.msra.mxu0 0.0
      %1366 = vmatprep.subr.mxu0 0.0
      %1367 = vmatpush1.msra.mxu0 0.0
      %1368 = vmatprep.subr.mxu0 0.0
      %1369 = vmatpush1.msra.mxu0 0.0
      %1370 = vmatprep.subr.mxu0 0.0
      %1371 = vmatpush1.msra.mxu0 %v1335
      %1372 = vmatprep.subr.mxu0 0.0
      %1373 = vmatpush2.msra.mxu0 0.0
      %1374 = vmatprep.subr.mxu0 0.0
      %1375 = vmatpush2.msra.mxu0 0.0
      %1376 = vmatprep.subr.mxu0 0.0
      %1377 = vmatpush2.msra.mxu0 0.0
      %1378 = vmatprep.subr.mxu0 0.0
      %1379 = vmatpush2.msra.mxu0 0.0
      %1380 = vmatprep.subr.mxu0 0.0
      %1381 = vmatpush2.msra.mxu0 0.0
      %1382 = vmatprep.subr.mxu0 0.0
      %1383 = vmatpush2.msra.mxu0 0.0
      %1384 = vmatprep.subr.mxu0 0.0
      %1385 = vmatpush2.msra.mxu0 0.0
      %1386 = vmatprep.subr.mxu0 0.0
      %1387 = vmatpush2.msra.mxu0 0.0
      %1388 = vmatprep.subr.mxu0 0.0
      %1389 = vmatpush2.msra.mxu0 0.0
      %1390 = vmatprep.subr.mxu0 0.0
      %1391 = vmatpush2.msra.mxu0 0.0
      %1392 = vmatprep.subr.mxu0 0.0
      %1393 = vmatpush2.msra.mxu0 0.0
      %1394 = vmatprep.subr.mxu0 0.0
      %1395 = vmatpush2.msra.mxu0 0.0
      %1396 = vmatprep.subr.mxu0 0.0
      %1397 = vmatpush2.msra.mxu0 0.0
      %1398 = vmatprep.subr.mxu0 0.0
      %1399 = vmatpush2.msra.mxu0 0.0
      %1400 = vmatprep.subr.mxu0 0.0
      %1401 = vmatpush2.msra.mxu0 0.0
      %1402 = vmatprep.subr.mxu0 0.0
      %1403 = vmatpush2.msra.mxu0 0.0
      %1404 = vmatprep.mubr.f32.mxu0 0.0
      %1405 = vmatmul.mubr.f32.gmra.mxu0 %v1338
      %v1406 = vpop.f32.mrf.mxu0
      %v1407 = vadd.f32 0.0, %v1406
      %v1408 = vpop.f32.mrf.mxu0
      %1409 = vdwg.mxu0
      %v1411 = vsel %vm529, %v1407, 0
      %1413 = vmatprep.subr.mxu0 0.0
      %1414 = vmatpush1.msra.mxu0 0.0
      %1415 = vmatprep.subr.mxu0 0.0
      %1416 = vmatpush1.msra.mxu0 0.0
      %1417 = vmatprep.subr.mxu0 0.0
      %1418 = vmatpush1.msra.mxu0 0.0
      %1419 = vmatprep.subr.mxu0 0.0
      %1420 = vmatpush1.msra.mxu0 0.0
      %1421 = vmatprep.subr.mxu0 0.0
      %1422 = vmatpush1.msra.mxu0 0.0
      %1423 = vmatprep.subr.mxu0 0.0
      %1424 = vmatpush1.msra.mxu0 0.0
      %1425 = vmatprep.subr.mxu0 0.0
      %1426 = vmatpush1.msra.mxu0 0.0
      %1427 = vmatprep.subr.mxu0 0.0
      %1428 = vmatpush1.msra.mxu0 0.0
      %1429 = vmatprep.subr.mxu0 0.0
      %1430 = vmatpush1.msra.mxu0 0.0
      %1431 = vmatprep.subr.mxu0 0.0
      %1432 = vmatpush1.msra.mxu0 0.0
      %1433 = vmatprep.subr.mxu0 0.0
      %1434 = vmatpush1.msra.mxu0 0.0
      %1435 = vmatprep.subr.mxu0 0.0
      %1436 = vmatpush1.msra.mxu0 0.0
      %1437 = vmatprep.subr.mxu0 0.0
      %1438 = vmatpush1.msra.mxu0 0.0
      %1439 = vmatprep.subr.mxu0 0.0
      %1440 = vmatpush1.msra.mxu0 0.0
      %1441 = vmatprep.subr.mxu0 0.0
      %1442 = vmatpush1.msra.mxu0 0.0
      %1443 = vmatprep.subr.mxu0 0.0
      %1444 = vmatpush1.msra.mxu0 %v525
      %1445 = vmatprep.subr.mxu0 0.0
      %1446 = vmatpush2.msra.mxu0 0.0
      %1447 = vmatprep.subr.mxu0 0.0
      %1448 = vmatpush2.msra.mxu0 0.0
      %1449 = vmatprep.subr.mxu0 0.0
      %1450 = vmatpush2.msra.mxu0 0.0
      %1451 = vmatprep.subr.mxu0 0.0
      %1452 = vmatpush2.msra.mxu0 0.0
      %1453 = vmatprep.subr.mxu0 0.0
      %1454 = vmatpush2.msra.mxu0 0.0
      %1455 = vmatprep.subr.mxu0 0.0
      %1456 = vmatpush2.msra.mxu0 0.0
      %1457 = vmatprep.subr.mxu0 0.0
      %1458 = vmatpush2.msra.mxu0 0.0
      %1459 = vmatprep.subr.mxu0 0.0
      %1460 = vmatpush2.msra.mxu0 0.0
      %1461 = vmatprep.subr.mxu0 0.0
      %1462 = vmatpush2.msra.mxu0 0.0
      %1463 = vmatprep.subr.mxu0 0.0
      %1464 = vmatpush2.msra.mxu0 0.0
      %1465 = vmatprep.subr.mxu0 0.0
      %1466 = vmatpush2.msra.mxu0 0.0
      %1467 = vmatprep.subr.mxu0 0.0
      %1468 = vmatpush2.msra.mxu0 0.0
      %1469 = vmatprep.subr.mxu0 0.0
      %1470 = vmatpush2.msra.mxu0 0.0
      %1471 = vmatprep.subr.mxu0 0.0
      %1472 = vmatpush2.msra.mxu0 0.0
      %1473 = vmatprep.subr.mxu0 0.0
      %1474 = vmatpush2.msra.mxu0 0.0
      %1475 = vmatprep.subr.mxu0 0.0
      %1476 = vmatpush2.msra.mxu0 0.0
      %1477 = vmatprep.mubr.f32.mxu0 0.0
      %1478 = vmatmul.mubr.f32.gmra.mxu0 %v1411
      %v1479 = vpop.f32.mrf.mxu0
      %v1480 = vadd.f32 0.0, %v1479
      %v1481 = vpop.f32.mrf.mxu0
      %1482 = vdwg.mxu0
      %v1483 = vadd.f32 %v1243, %v1480
      %v1484 = vld [vmem:[%s4] sm:$0x1]
      %v1486 = vlaneseq
      %v1487 = vshrl.u32 %v1486, 7
      %v1488 = vsub.s32 0, %v1487
      %v1489 = vrot.slane %v1484, %v1488
      %v1491 = vadd.f32 %v1483, %v1489
      %v1492 = vadd.f32 %v436, %v1491
      %v1493 = vld [vmem:[%s5] sm:$0x1]
      %v1494 = vld [vmem:[%s6] sm:$0x1]
      %v1495 = vsel %vm448, %v1492, 0.0
      %1496 = vadd.xlane.f32.xlu0 %v1495
      %v1497 = vpop.xlane.xlu0 %1496
      %v1498 = vrcp.pop 32.0
      %v1499 = vmul.f32 %v1497, %v1498
      %v1500 = vsub.f32 %v1492, %v1499
      %v1501 = vmul.f32 %v1500, %v1500
      %v1502 = vsel %vm448, %v1501, 0.0
      %1503 = vadd.xlane.f32.xlu0 %v1502
      %v1504 = vpop.xlane.xlu0 %1503
      %v1505 = vmul.f32 %v1504, %v1498
      %v1506 = vadd.f32 %v1505, 1e-05
      %v1507 = vrsqrt.pop %v1506
      %v1508 = vmul.f32 %v1500, %v1507
      %v1510 = vlaneseq
      %v1511 = vshrl.u32 %v1510, 7
      %v1512 = vsub.s32 0, %v1511
      %v1513 = vrot.slane %v1493, %v1512
      %v1515 = vmul.f32 %v1508, %v1513
      %v1517 = vlaneseq
      %v1518 = vshrl.u32 %v1517, 7
      %v1519 = vsub.s32 0, %v1518
      %v1520 = vrot.slane %v1494, %v1519
      %v1522 = vadd.f32 %v1515, %v1520
      %v1523 = vld [vmem:[%s7] sm:$0xff]
      %v1524 = vld [vmem:[%s7 + $0x8] sm:$0xff]
      %v1525 = vld [vmem:[%s7 + $0x10] sm:$0xff]
      %v1526 = vld [vmem:[%s7 + $0x18] sm:$0xff]
      %v1527 = vld [vmem:[%s8] sm:$0x1]
      %v1529 = vlaneseq
      %v1530 = vshrl.u32 %v1529, 7
      %v1531 = vsub.s32 0, %v1530
      %v1532 = vrot.slane %v1527, %v1531
      %v1535 = vsel %vm448, %v1522, 0
      %1537 = vmatprep.subr.mxu0 0.0
      %1538 = vmatpush1.msra.mxu0 0.0
      %1539 = vmatprep.subr.mxu0 0.0
      %1540 = vmatpush1.msra.mxu0 0.0
      %1541 = vmatprep.subr.mxu0 0.0
      %1542 = vmatpush1.msra.mxu0 0.0
      %1543 = vmatprep.subr.mxu0 0.0
      %1544 = vmatpush1.msra.mxu0 0.0
      %1545 = vmatprep.subr.mxu0 0.0
      %1546 = vmatpush1.msra.mxu0 0.0
      %1547 = vmatprep.subr.mxu0 0.0
      %1548 = vmatpush1.msra.mxu0 0.0
      %1549 = vmatprep.subr.mxu0 0.0
      %1550 = vmatpush1.msra.mxu0 0.0
      %1551 = vmatprep.subr.mxu0 0.0
      %1552 = vmatpush1.msra.mxu0 0.0
      %1553 = vmatprep.subr.mxu0 0.0
      %1554 = vmatpush1.msra.mxu0 0.0
      %1555 = vmatprep.subr.mxu0 0.0
      %1556 = vmatpush1.msra.mxu0 0.0
      %1557 = vmatprep.subr.mxu0 0.0
      %1558 = vmatpush1.msra.mxu0 0.0
      %1559 = vmatprep.subr.mxu0 0.0
      %1560 = vmatpush1.msra.mxu0 0.0
      %1561 = vmatprep.subr.mxu0 0.0
      %1562 = vmatpush1.msra.mxu0 %v1526
      %1563 = vmatprep.subr.mxu0 0.0
      %1564 = vmatpush1.msra.mxu0 %v1525
      %1565 = vmatprep.subr.mxu0 0.0
      %1566 = vmatpush1.msra.mxu0 %v1524
      %1567 = vmatprep.subr.mxu0 0.0
      %1568 = vmatpush1.msra.mxu0 %v1523
      %1569 = vmatprep.subr.mxu0 0.0
      %1570 = vmatpush2.msra.mxu0 0.0
      %1571 = vmatprep.subr.mxu0 0.0
      %1572 = vmatpush2.msra.mxu0 0.0
      %1573 = vmatprep.subr.mxu0 0.0
      %1574 = vmatpush2.msra.mxu0 0.0
      %1575 = vmatprep.subr.mxu0 0.0
      %1576 = vmatpush2.msra.mxu0 0.0
      %1577 = vmatprep.subr.mxu0 0.0
      %1578 = vmatpush2.msra.mxu0 0.0
      %1579 = vmatprep.subr.mxu0 0.0
      %1580 = vmatpush2.msra.mxu0 0.0
      %1581 = vmatprep.subr.mxu0 0.0
      %1582 = vmatpush2.msra.mxu0 0.0
      %1583 = vmatprep.subr.mxu0 0.0
      %1584 = vmatpush2.msra.mxu0 0.0
      %1585 = vmatprep.subr.mxu0 0.0
      %1586 = vmatpush2.msra.mxu0 0.0
      %1587 = vmatprep.subr.mxu0 0.0
      %1588 = vmatpush2.msra.mxu0 0.0
      %1589 = vmatprep.subr.mxu0 0.0
      %1590 = vmatpush2.msra.mxu0 0.0
      %1591 = vmatprep.subr.mxu0 0.0
      %1592 = vmatpush2.msra.mxu0 0.0
      %1593 = vmatprep.subr.mxu0 0.0
      %1594 = vmatpush2.msra.mxu0 0.0
      %1595 = vmatprep.subr.mxu0 0.0
      %1596 = vmatpush2.msra.mxu0 0.0
      %1597 = vmatprep.subr.mxu0 0.0
      %1598 = vmatpush2.msra.mxu0 0.0
      %1599 = vmatprep.subr.mxu0 0.0
      %1600 = vmatpush2.msra.mxu0 0.0
      %1601 = vmatprep.mubr.f32.mxu0 0.0
      %1602 = vmatmul.mubr.f32.gmra.mxu0 %v1535
      %v1603 = vpop.f32.mrf.mxu0
      %v1604 = vadd.f32 %v1532, %v1603
      %v1605 = vpop.f32.mrf.mxu0
      %1606 = vdwg.mxu0
      %v1607 = vmax.f32 %v1604, 0.0
      %v1608 = vld [vmem:[%s9] sm:$0xff]
      %v1609 = vld [vmem:[%s9 + $0x8] sm:$0xff]
      %v1610 = vld [vmem:[%s9 + $0x10] sm:$0xff]
      %v1611 = vld [vmem:[%s9 + $0x18] sm:$0xff]
      %v1612 = vld [vmem:[%s9 + $0x20] sm:$0xff]
      %v1613 = vld [vmem:[%s9 + $0x28] sm:$0xff]
      %v1614 = vld [vmem:[%s9 + $0x30] sm:$0xff]
      %v1615 = vld [vmem:[%s9 + $0x38] sm:$0xff]
      %v1616 = vld [vmem:[%s10] sm:$0x1]
      %v1618 = vlaneseq
      %v1619 = vshrl.u32 %v1618, 7
      %v1620 = vsub.s32 0, %v1619
      %v1621 = vrot.slane %v1616, %v1620
      %vm1623 = vcmask 523264
      %v1625 = vsel %vm1623, %v1607, 0
      %1627 = vmatprep.subr.mxu0 0.0
      %1628 = vmatpush1.msra.mxu0 0.0
      %1629 = vmatprep.subr.mxu0 0.0
      %1630 = vmatpush1.msra.mxu0 0.0
      %1631 = vmatprep.subr.mxu0 0.0
      %1632 = vmatpush1.msra.mxu0 0.0
      %1633 = vmatprep.subr.mxu0 0.0
      %1634 = vmatpush1.msra.mxu0 0.0
      %1635 = vmatprep.subr.mxu0 0.0
      %1636 = vmatpush1.msra.mxu0 0.0
      %1637 = vmatprep.subr.mxu0 0.0
      %1638 = vmatpush1.msra.mxu0 0.0
      %1639 = vmatprep.subr.mxu0 0.0
      %1640 = vmatpush1.msra.mxu0 0.0
      %1641 = vmatprep.subr.mxu0 0.0
      %1642 = vmatpush1.msra.mxu0 0.0
      %1643 = vmatprep.subr.mxu0 0.0
      %1644 = vmatpush1.msra.mxu0 %v1615
      %1645 = vmatprep.subr.mxu0 0.0
      %1646 = vmatpush1.msra.mxu0 %v1614
      %1647 = vmatprep.subr.mxu0 0.0
      %1648 = vmatpush1.msra.mxu0 %v1613
      %1649 = vmatprep.subr.mxu0 0.0
      %1650 = vmatpush1.msra.mxu0 %v1612
      %1651 = vmatprep.subr.mxu0 0.0
      %1652 = vmatpush1.msra.mxu0 %v1611
      %1653 = vmatprep.subr.mxu0 0.0
      %1654 = vmatpush1.msra.mxu0 %v1610
      %1655 = vmatprep.subr.mxu0 0.0
      %1656 = vmatpush1.msra.mxu0 %v1609
      %1657 = vmatprep.subr.mxu0 0.0
      %1658 = vmatpush1.msra.mxu0 %v1608
      %1659 = vmatprep.subr.mxu0 0.0
      %1660 = vmatpush2.msra.mxu0 0.0
      %1661 = vmatprep.subr.mxu0 0.0
      %1662 = vmatpush2.msra.mxu0 0.0
      %1663 = vmatprep.subr.mxu0 0.0
      %1664 = vmatpush2.msra.mxu0 0.0
      %1665 = vmatprep.subr.mxu0 0.0
      %1666 = vmatpush2.msra.mxu0 0.0
      %1667 = vmatprep.subr.mxu0 0.0
      %1668 = vmatpush2.msra.mxu0 0.0
      %1669 = vmatprep.subr.mxu0 0.0
      %1670 = vmatpush2.msra.mxu0 0.0
      %1671 = vmatprep.subr.mxu0 0.0
      %1672 = vmatpush2.msra.mxu0 0.0
      %1673 = vmatprep.subr.mxu0 0.0
      %1674 = vmatpush2.msra.mxu0 0.0
      %1675 = vmatprep.subr.mxu0 0.0
      %1676 = vmatpush2.msra.mxu0 0.0
      %1677 = vmatprep.subr.mxu0 0.0
      %1678 = vmatpush2.msra.mxu0 0.0
      %1679 = vmatprep.subr.mxu0 0.0
      %1680 = vmatpush2.msra.mxu0 0.0
      %1681 = vmatprep.subr.mxu0 0.0
      %1682 = vmatpush2.msra.mxu0 0.0
      %1683 = vmatprep.subr.mxu0 0.0
      %1684 = vmatpush2.msra.mxu0 0.0
      %1685 = vmatprep.subr.mxu0 0.0
      %1686 = vmatpush2.msra.mxu0 0.0
      %1687 = vmatprep.subr.mxu0 0.0
      %1688 = vmatpush2.msra.mxu0 0.0
      %1689 = vmatprep.subr.mxu0 0.0
      %1690 = vmatpush2.msra.mxu0 0.0
      %1691 = vmatprep.mubr.f32.mxu0 0.0
      %1692 = vmatmul.mubr.f32.gmra.mxu0 %v1625
      %v1693 = vpop.f32.mrf.mxu0
      %v1694 = vadd.f32 %v1621, %v1693
      %v1695 = vpop.f32.mrf.mxu0
      %1696 = vdwg.mxu0
      %v1697 = vadd.f32 %v1522, %v1694
      %v1698 = vld [vmem:[%s11] sm:$0x1]
      %v1699 = vld [vmem:[%s12] sm:$0x1]
      %v1700 = vsel %vm448, %v1697, 0.0
      %1701 = vadd.xlane.f32.xlu0 %v1700
      %v1702 = vpop.xlane.xlu0 %1701
      %v1703 = vmul.f32 %v1702, %v1498
      %v1704 = vsub.f32 %v1697, %v1703
      %v1705 = vmul.f32 %v1704, %v1704
      %v1706 = vsel %vm448, %v1705, 0.0
      %1707 = vadd.xlane.f32.xlu0 %v1706
      %v1708 = vpop.xlane.xlu0 %1707
      %v1709 = vmul.f32 %v1708, %v1498
      %v1710 = vadd.f32 %v1709, 1e-05
      %v1711 = vrsqrt.pop %v1710
      %v1712 = vmul.f32 %v1704, %v1711
      %v1714 = vlaneseq
      %v1715 = vshrl.u32 %v1714, 7
      %v1716 = vsub.s32 0, %v1715
      %v1717 = vrot.slane %v1698, %v1716
      %v1719 = vmul.f32 %v1712, %v1717
      %v1721 = vlaneseq
      %v1722 = vshrl.u32 %v1721, 7
      %v1723 = vsub.s32 0, %v1722
      %v1724 = vrot.slane %v1699, %v1723
      %v1726 = vadd.f32 %v1719, %v1724
      %1727 = vst.msk [vmem:[%s435] sm:$0xff] %vm448, %v1726
      %p1728 = scmp.lt.s32.totalorder %s24, 1
      %s1729 = scalar_select %p1728, %s24, 1
      %s1730 = smul.addr %s1729, 8
      %s1731 = scalar_lea.vmem %s13, %s1730
      // Predicated region
      $region73: #{vatep_forward.8} parent=71 // pred_check
        %p1732 = pneg %p320
      $region74: #{vatep_forward.8} parent=71 // pred_check_branch
        %1734 = sbr.rel (%p1732) target = $region76
      $region75: #{vatep_forward.8} parent=71 // pred_region
        _
      $region76: #{vatep_forward.8} parent=71 // pred_fallthru
        _
    $region72: #{vatep_forward.8} parent=5 // pred_fallthru
      _
    %p1735 = scmp.le.s32.totalorder 2, %s19
    // Predicated region
    $region77: #{vatep_forward.8} parent=5 // pred_check
      %p1736 = pneg %p1735
    $region78: #{vatep_forward.8} parent=5 // pred_check_branch
      %1738 = sbr.rel (%p1736) target = $region80
    $region79: #{vatep_forward.8} parent=5 // pred_region
      %s1739 = ssub.s32 %s19, 2
      // Predicated region
      $region81: #{vatep_forward.8} parent=79 // pred_check
        %p1740 = pneg %p326
      $region82: #{vatep_forward.8} parent=79 // pred_check_branch
        %1742 = sbr.rel (%p1740) target = $region84
      $region83: #{vatep_forward.8} parent=79 // pred_region
        %p1743 = scmp.lt.s32.totalorder %s25, 1
        %s1744 = scalar_select %p1743, %s25, 1
        %s1745 = smul.addr %s1744, 8
        %s1746 = scalar_lea.vmem %s13, %s1745
      $region84: #{vatep_forward.8} parent=79 // pred_fallthru
        _
    $region80: #{vatep_forward.8} parent=5 // pred_fallthru
      _
  $region6: #{vatep_forward.8} parent=0 // loop_footer
    %s23 = sadd.s32 1, %s19
  $region7: #{vatep_forward.8} parent=0 // loop_footer_branch
    %18 = sbr.rel target = $region3
  $region8: #{vatep_forward.8} parent=0 // loop_exit
    _

</llo_original>
